<compile_context>
chip_gen: v7x
topology: tpu7x:2x2x1
jax: 0.10.0
libtpu: 0.0.40
codegen_flags: <defaults>
</compile_context>

<pallas_src>
import jax
import jax.numpy as jnp
import numpy as np
from jax import lax
from jax.experimental import pallas as pl
from jax.experimental.pallas import tpu as pltpu


# --------------------------- in-kernel building blocks --------------------------- #

def _maxpool2(h):
    """MaxPool1d(kernel=2, stride=2) along the length axis: (Bt, L, C) -> (Bt, L/2, C)."""
    b, l, c = h.shape
    return jnp.max(h.reshape(b, l // 2, 2, c), axis=2)


def _conv_bn_relu(h, w_ref, shift_ref):
    """Conv1d('same') + folded-BN + ReLU via K accumulated MXU matmuls.

    h:         (Bt, L, Cin) f32 activation
    w_ref:     (K, Cin, Cout) bf16 weights (BN scale folded in)
    shift_ref: (1, Cout)      f32 folded bias
    returns    (Bt, L, Cout)  f32

    Per-tap accumulation keeps exactly ONE shifted copy of h live (no im2col patch
    tensor, no lane-axis concat).  The 'same'-padding validity mask is a (1, L, 1)
    iota compare broadcast into the select (not a full (Bt, L, Cin) int tensor).
    """
    b, l, cin = h.shape
    k_taps, _, cout = w_ref.shape
    pad = (k_taps - 1) // 2
    pos = lax.broadcasted_iota(jnp.int32, (1, l, 1), 1)           # tiny, once per layer
    acc = jnp.zeros((b * l, cout), jnp.float32)
    for k in range(k_taps):
        d = k - pad
        if d == 0:
            tap = h
        else:
            rolled = pltpu.roll(h, shift=(-d) % l, axis=1)        # XLU rotate
            valid = (pos + d >= 0) & (pos + d < l)                # (1, L, 1)
            tap = jnp.where(valid, rolled, 0.0)                   # f32 VPU (v5e-safe)
        acc = acc + jnp.dot(tap.reshape(b * l, cin).astype(jnp.bfloat16),
                            w_ref[k], preferred_element_type=jnp.float32)
    y = jnp.maximum(acc + shift_ref[...], 0.0)
    return y.reshape(b, l, cout)


def _cnn1d_fused_kernel(xp_ref,
                        w1_ref, s1_ref, w2_ref, s2_ref,
                        w3_ref, s3_ref, w4_ref, s4_ref,
                        fw1_ref, fb1_ref, fw2_ref, fb2_ref, fw3_ref, fb3_ref,
                        o_ref):
    bt, l, kcin = xp_ref.shape
    # conv1 arrives pre-im2col'd (bf16): one (Bt*L, 14) x (14, 64) matmul.
    p = xp_ref[...].reshape(bt * l, kcin)
    h = jnp.maximum(jnp.dot(p, w1_ref[...], preferred_element_type=jnp.float32)
                    + s1_ref[...], 0.0).reshape(bt, l, -1)        # (Bt, L, 64)
    h = _maxpool2(h)                                              # (Bt, L/2, 64)
    h = _maxpool2(_conv_bn_relu(h, w2_ref, s2_ref))               # (Bt, L/4, 128)
    h = _maxpool2(_conv_bn_relu(h, w3_ref, s3_ref))               # (Bt, L/8, 256)
    h = _conv_bn_relu(h, w4_ref, s4_ref)                          # (Bt, L/8, 512)
    h = jnp.mean(h, axis=1)                                       # AdaptiveAvgPool1d(1) -> (Bt, 512)
    # fc head: Linear->ReLU->(Dropout=id)->Linear->ReLU->(Dropout=id)->Linear
    h = jnp.maximum(jnp.dot(h.astype(jnp.bfloat16), fw1_ref[...],
                            preferred_element_type=jnp.float32) + fb1_ref[...], 0.0)
    h = jnp.maximum(jnp.dot(h.astype(jnp.bfloat16), fw2_ref[...],
                            preferred_element_type=jnp.float32) + fb2_ref[...], 0.0)
    o_ref[...] = (jnp.dot(h.astype(jnp.bfloat16), fw3_ref[...],
                          preferred_element_type=jnp.float32) + fb3_ref[...]
                  ).astype(o_ref.dtype)                           # lane-dense (Bt, 128)


# --------------------------------- JAX wrapper ---------------------------------- #

def _im2col_conv1(x, k_taps):
    """(B, L, Cin) -> (B, L, K*Cin) bf16 patches; column order is k-major, c-minor."""
    B, L, Cin = x.shape
    pad = (k_taps - 1) // 2
    xp = jnp.pad(x, ((0, 0), (pad, pad), (0, 0)))
    cols = [xp[:, k:k + L, :] for k in range(k_taps)]
    return jnp.concatenate(cols, axis=-1).astype(jnp.bfloat16)


def _pick_batch_tile(B, cap):
    bt = max(1, min(B, cap))
    while B % bt != 0:        # largest divisor of B not exceeding the cap
        bt -= 1
    return bt


def _default_vmem_limit_bytes():
    # ~3/4 of physical VMEM: ~96 MB on v5e/v6e (128 MiB), ~48 MB on v7x (64 MiB).
    try:
        return int(pltpu.get_tpu_info().vmem_capacity_bytes) * 3 // 4
    except Exception:
        return 48 * 1024 * 1024


def cnn1d_forward(x, params, num_classes, *, batch_tile=None):
    """x: (B, L, 2) -- the same input the PyTorch module receives before permute."""
    B, L, Cin = x.shape
    assert L % 8 == 0, "three MaxPool1d(2) stages require L divisible by 8"

    w1, s1 = params["conv1"]
    w2, s2 = params["conv2"]
    w3, s3 = params["conv3"]
    w4, s4 = params["conv4"]
    fw1, fb1, fw2, fb2, fw3, fb3 = params["fc"]
    k1 = w1.shape[0] // Cin
    nc_pad = fw3.shape[1]                   # lane-dense padded logits width (mult. of 128)

    vmem_limit = _default_vmem_limit_bytes()
    # Bigger batch tile -> larger MXU M-dim on every layer; cap by VMEM generation.
    cap = 64 if vmem_limit >= 64 * 1024 * 1024 else 32
    bt = _pick_batch_tile(B, batch_tile if batch_tile is not None else cap)

    xp = _im2col_conv1(x, k1)               # (B, L, K1*Cin) bf16, built once in XLA

    def rep(arr):   # whole-array, grid-invariant block (weights stay VMEM-resident)
        return pl.BlockSpec(arr.shape, lambda i, n=arr.ndim: (0,) * n)

    out_padded = pl.pallas_call(
        _cnn1d_fused_kernel,
        out_shape=jax.ShapeDtypeStruct((B, nc_pad), jnp.float32),
        grid=(B // bt,),
        in_specs=[
            pl.BlockSpec((bt, L, k1 * Cin), lambda i: (i, 0, 0)),
            rep(w1), rep(s1), rep(w2), rep(s2),
            rep(w3), rep(s3), rep(w4), rep(s4),
            rep(fw1), rep(fb1), rep(fw2), rep(fb2), rep(fw3), rep(fb3),
        ],
        out_specs=pl.BlockSpec((bt, nc_pad), lambda i: (i, 0)),
        compiler_params=pltpu.CompilerParams(
            dimension_semantics=("parallel",),
            vmem_limit_bytes=vmem_limit),
    )(xp, w1, s1, w2, s2, w3, s3, w4, s4, fw1, fb1, fw2, fb2, fw3, fb3)
    return out_padded[:, :num_classes]


# ----------------------------- deterministic params ------------------------------ #

def init_params(key, num_classes=10):
    ks = jax.random.split(key, 7)
    eps = 1e-5
    # BatchNorm1d inference at init: gamma=1, beta=0, mean=0, var=1.
    bn_scale = 1.0 / float(np.sqrt(1.0 + eps))

    def conv_params(k, cin, cout, ksize, *, im2col=False):
        assert ksize % 2 == 1, "'same' padding formula assumes odd kernel size"
        kw, kb = jax.random.split(k)
        fan_in = cin * ksize
        w = jax.random.normal(kw, (ksize, cin, cout), jnp.float32) * (2.0 / fan_in) ** 0.5
        b = jax.random.normal(kb, (cout,), jnp.float32) * 0.01
        w_folded = w * bn_scale                              # BN scale folded into weights
        if im2col:
            w_folded = w_folded.reshape(ksize * cin, cout)   # row index = k*Cin + c
        shift = (bn_scale * b).reshape(1, cout)              # folded bias (kept f32)
        return w_folded.astype(jnp.bfloat16), shift

    def linear_params(k, din, dout, pad_to=None):
        kw, kb = jax.random.split(k)
        w = jax.random.normal(kw, (din, dout), jnp.float32) * (2.0 / din) ** 0.5
        b = jax.random.normal(kb, (dout,), jnp.float32) * 0.01
        if pad_to is not None and pad_to > dout:             # lane-dense padded logits
            w = jnp.pad(w, ((0, 0), (0, pad_to - dout)))
            b = jnp.pad(b, (0, pad_to - dout))
        return w.astype(jnp.bfloat16), b.reshape(1, -1)

    nc_pad = ((num_classes + 127) // 128) * 128
    fw1, fb1 = linear_params(ks[4], 512, 256)
    fw2, fb2 = linear_params(ks[5], 256, 128)
    fw3, fb3 = linear_params(ks[6], 128, num_classes, pad_to=nc_pad)
    return {
        "conv1": conv_params(ks[0], 2, 64, 7, im2col=True),
        "conv2": conv_params(ks[1], 64, 128, 5),
        "conv3": conv_params(ks[2], 128, 256, 3),
        "conv4": conv_params(ks[3], 256, 512, 3),
        "fc": (fw1, fb1, fw2, fb2, fw3, fb3),
    }


# ------------------------------ pure-JAX reference -------------------------------- #

def reference_forward(x, params, num_classes):
    """XLA reference with the same bf16-operand / f32-accumulate numerics."""
    def conv_block(h, w, shift, pool):
        k, cin, cout = w.shape
        pad = (k - 1) // 2
        hn = jnp.transpose(h, (0, 2, 1)).astype(jnp.bfloat16)    # (B, Cin, L)
        wk = jnp.transpose(w, (2, 1, 0))                         # (Cout, Cin, K)
        y = lax.conv_general_dilated(
            hn, wk, window_strides=(1,), padding=[(pad, pad)],
            dimension_numbers=("NCH", "OIH", "NCH"),
            preferred_element_type=jnp.float32)
        y = jnp.maximum(y + shift[0][None, :, None], 0.0)        # (B, Cout, L)
        if pool == "max2":
            Bc, C, Lc = y.shape
            y = jnp.max(y.reshape(Bc, C, Lc // 2, 2), axis=-1)
            return jnp.transpose(y, (0, 2, 1))                   # back to (B, L/2, C)
        return jnp.mean(y, axis=-1)                              # (B, C)

    cin = x.shape[2]
    w1, s1 = params["conv1"]
    k1 = w1.shape[0] // cin
    h = conv_block(x, w1.reshape(k1, cin, -1), s1, "max2")
    h = conv_block(h, *params["conv2"], "max2")
    h = conv_block(h, *params["conv3"], "max2")
    h = conv_block(h, *params["conv4"], "avg")
    fw1, fb1, fw2, fb2, fw3, fb3 = params["fc"]
    h = jnp.maximum(jnp.dot(h.astype(jnp.bfloat16), fw1,
                            preferred_element_type=jnp.float32) + fb1, 0.0)
    h = jnp.maximum(jnp.dot(h.astype(jnp.bfloat16), fw2,
                            preferred_element_type=jnp.float32) + fb2, 0.0)
    out = jnp.dot(h.astype(jnp.bfloat16), fw3,
                  preferred_element_type=jnp.float32) + fb3
    return out[:, :num_classes]


# --------------------------------------- main ------------------------------------- #

if __name__ == "__main__":
    key = jax.random.PRNGKey(0)
    kx, kp = jax.random.split(key)

    B, L, num_classes = 2, 64, 10                # small harness shapes; L divisible by 8
    x = jax.random.normal(kx, (B, L, 2), jnp.float32)
    params = init_params(kp, num_classes=num_classes)

    out = jax.block_until_ready(cnn1d_forward(x, params, num_classes))
    assert out.shape == (B, num_classes) and out.dtype == jnp.float32

    ref = jax.block_until_ready(reference_forward(x, params, num_classes))
    # bf16 MXU operands in both paths; f32 accumulation -> 1e-2 tolerance is ample.
    np.testing.assert_allclose(np.asarray(out), np.asarray(ref), rtol=1e-2, atol=1e-2)
    print("KERNEL_OK")
</pallas_src>

<mosaic_0001>
module attributes {stable_mosaic.version = 11 : i64} {
  func.func @_cnn1d_fused_kernel(%arg0: i32, %arg1: memref<2x64x14xbf16, #tpu.memory_space<vmem>>, %arg2: memref<14x64xbf16, #tpu.memory_space<vmem>>, %arg3: memref<1x64xf32, #tpu.memory_space<vmem>>, %arg4: memref<5x64x128xbf16, #tpu.memory_space<vmem>>, %arg5: memref<1x128xf32, #tpu.memory_space<vmem>>, %arg6: memref<3x128x256xbf16, #tpu.memory_space<vmem>>, %arg7: memref<1x256xf32, #tpu.memory_space<vmem>>, %arg8: memref<3x256x512xbf16, #tpu.memory_space<vmem>>, %arg9: memref<1x512xf32, #tpu.memory_space<vmem>>, %arg10: memref<512x256xbf16, #tpu.memory_space<vmem>>, %arg11: memref<1x256xf32, #tpu.memory_space<vmem>>, %arg12: memref<256x128xbf16, #tpu.memory_space<vmem>>, %arg13: memref<1x128xf32, #tpu.memory_space<vmem>>, %arg14: memref<128x128xbf16, #tpu.memory_space<vmem>>, %arg15: memref<1x128xf32, #tpu.memory_space<vmem>>, %arg16: memref<2x128xf32, #tpu.memory_space<vmem>>) attributes {dimension_semantics = [#tpu.dimension_semantics<parallel>], iteration_bounds = array<i64: 1>, scalar_prefetch = 0 : i64, scratch_operands = 0 : i64, tpu.core_type = #tpu.core_type<tc>, window_params = [{transform_indices = @transform_0, window_bounds = array<i64: 2, 64, 14>}, {pipeline_mode = #tpu.pipeline_mode<synchronous>, transform_indices = @transform_1, window_bounds = array<i64: 14, 64>}, {pipeline_mode = #tpu.pipeline_mode<synchronous>, transform_indices = @transform_2, window_bounds = array<i64: 1, 64>}, {pipeline_mode = #tpu.pipeline_mode<synchronous>, transform_indices = @transform_3, window_bounds = array<i64: 5, 64, 128>}, {pipeline_mode = #tpu.pipeline_mode<synchronous>, transform_indices = @transform_4, window_bounds = array<i64: 1, 128>}, {pipeline_mode = #tpu.pipeline_mode<synchronous>, transform_indices = @transform_5, window_bounds = array<i64: 3, 128, 256>}, {pipeline_mode = #tpu.pipeline_mode<synchronous>, transform_indices = @transform_6, window_bounds = array<i64: 1, 256>}, {pipeline_mode = #tpu.pipeline_mode<synchronous>, transform_indices = @transform_7, window_bounds = array<i64: 3, 256, 512>}, {pipeline_mode = #tpu.pipeline_mode<synchronous>, transform_indices = @transform_8, window_bounds = array<i64: 1, 512>}, {pipeline_mode = #tpu.pipeline_mode<synchronous>, transform_indices = @transform_9, window_bounds = array<i64: 512, 256>}, {pipeline_mode = #tpu.pipeline_mode<synchronous>, transform_indices = @transform_10, window_bounds = array<i64: 1, 256>}, {pipeline_mode = #tpu.pipeline_mode<synchronous>, transform_indices = @transform_11, window_bounds = array<i64: 256, 128>}, {pipeline_mode = #tpu.pipeline_mode<synchronous>, transform_indices = @transform_12, window_bounds = array<i64: 1, 128>}, {pipeline_mode = #tpu.pipeline_mode<synchronous>, transform_indices = @transform_13, window_bounds = array<i64: 128, 128>}, {pipeline_mode = #tpu.pipeline_mode<synchronous>, transform_indices = @transform_14, window_bounds = array<i64: 1, 128>}, {transform_indices = @transform_15, window_bounds = array<i64: 2, 128>}]} {
    %c0 = arith.constant 0 : index
    %c0_0 = arith.constant 0 : index
    %c0_1 = arith.constant 0 : index
    %0 = vector.load %arg1[%c0, %c0_0, %c0_1] : memref<2x64x14xbf16, #tpu.memory_space<vmem>>, vector<2x64x14xbf16>
    %1 = vector.shape_cast %0 : vector<2x64x14xbf16> to vector<128x14xbf16>
    %c0_2 = arith.constant 0 : index
    %c0_3 = arith.constant 0 : index
    %2 = vector.load %arg2[%c0_2, %c0_3] : memref<14x64xbf16, #tpu.memory_space<vmem>>, vector<14x64xbf16>
    %cst = arith.constant dense<0.000000e+00> : vector<128x64xf32>
    %3 = tpu.matmul %1, %2, %cst {dimension_numbers = #tpu.dot_dimension_numbers<[1], [0], [0], [1], [0, 0, 1, 1], [], []>} : vector<128x14xbf16>, vector<14x64xbf16>, vector<128x64xf32> -> vector<128x64xf32>
    %c0_4 = arith.constant 0 : index
    %c0_5 = arith.constant 0 : index
    %4 = vector.load %arg3[%c0_4, %c0_5] : memref<1x64xf32, #tpu.memory_space<vmem>>, vector<1x64xf32>
    %5 = vector.broadcast %4 : vector<1x64xf32> to vector<128x64xf32>
    %6 = arith.addf %3, %5 : vector<128x64xf32>
    %cst_6 = arith.constant 0.000000e+00 : f32
    %7 = vector.broadcast %cst_6 : f32 to vector<128x64xf32>
    %8 = arith.maximumf %6, %7 : vector<128x64xf32>
    %9 = vector.shape_cast %8 : vector<128x64xf32> to vector<2x64x64xf32>
    %10 = vector.shape_cast %9 : vector<2x64x64xf32> to vector<2x32x2x64xf32>
    %cst_7 = arith.constant dense<0xFF800000> : vector<2x32x64xf32>
    %11 = vector.multi_reduction <maximumf>, %10, %cst_7 [2] : vector<2x32x2x64xf32> to vector<2x32x64xf32>
    %12 = tpu.iota {dimensions = array<i32: 1>} : vector<1x32x1xi32>
    %cst_8 = arith.constant 0.000000e+00 : f32
    %13 = vector.broadcast %cst_8 : f32 to vector<64x128xf32>
    %c2_i32 = arith.constant 2 : i32
    %14 = tpu.dynamic_rotate %11 by %c2_i32 dim 1 : vector<2x32x64xf32>, i32 -> vector<2x32x64xf32>
    %c-2_i32 = arith.constant -2 : i32
    %15 = vector.broadcast %c-2_i32 : i32 to vector<1x32x1xi32>
    %16 = arith.addi %12, %15 : vector<1x32x1xi32>
    %c0_i32 = arith.constant 0 : i32
    %17 = vector.broadcast %c0_i32 : i32 to vector<1x32x1xi32>
    %18 = arith.cmpi sge, %16, %17 : vector<1x32x1xi32>
    %c-2_i32_9 = arith.constant -2 : i32
    %19 = vector.broadcast %c-2_i32_9 : i32 to vector<1x32x1xi32>
    %20 = arith.addi %12, %19 : vector<1x32x1xi32>
    %c32_i32 = arith.constant 32 : i32
    %21 = vector.broadcast %c32_i32 : i32 to vector<1x32x1xi32>
    %22 = arith.cmpi slt, %20, %21 : vector<1x32x1xi32>
    %23 = arith.andi %18, %22 : vector<1x32x1xi1>
    %cst_10 = arith.constant 0.000000e+00 : f32
    %24 = vector.shape_cast %23 : vector<1x32x1xi1> to vector<1x32x1xi1>
    %25 = vector.broadcast %24 : vector<1x32x1xi1> to vector<2x32x64xi1>
    %26 = vector.broadcast %cst_10 : f32 to vector<2x32x64xf32>
    %27 = arith.select %25, %14, %26 : vector<2x32x64xi1>, vector<2x32x64xf32>
    %28 = vector.shape_cast %27 : vector<2x32x64xf32> to vector<64x64xf32>
    %29 = arith.truncf %28 : vector<64x64xf32> to vector<64x64xbf16>
    %c0_11 = arith.constant 0 : index
    %c0_12 = arith.constant 0 : index
    %c0_13 = arith.constant 0 : index
    %30 = vector.load %arg4[%c0_11, %c0_12, %c0_13] : memref<5x64x128xbf16, #tpu.memory_space<vmem>>, vector<1x64x128xbf16>
    %31 = vector.shape_cast %30 : vector<1x64x128xbf16> to vector<64x128xbf16>
    %cst_14 = arith.constant dense<0.000000e+00> : vector<64x128xf32>
    %32 = tpu.matmul %29, %31, %cst_14 {dimension_numbers = #tpu.dot_dimension_numbers<[1], [0], [0], [1], [0, 0, 1, 1], [], []>} : vector<64x64xbf16>, vector<64x128xbf16>, vector<64x128xf32> -> vector<64x128xf32>
    %33 = arith.addf %13, %32 : vector<64x128xf32>
    %c1_i32 = arith.constant 1 : i32
    %34 = tpu.dynamic_rotate %11 by %c1_i32 dim 1 : vector<2x32x64xf32>, i32 -> vector<2x32x64xf32>
    %c-1_i32 = arith.constant -1 : i32
    %35 = vector.broadcast %c-1_i32 : i32 to vector<1x32x1xi32>
    %36 = arith.addi %12, %35 : vector<1x32x1xi32>
    %c0_i32_15 = arith.constant 0 : i32
    %37 = vector.broadcast %c0_i32_15 : i32 to vector<1x32x1xi32>
    %38 = arith.cmpi sge, %36, %37 : vector<1x32x1xi32>
    %c-1_i32_16 = arith.constant -1 : i32
    %39 = vector.broadcast %c-1_i32_16 : i32 to vector<1x32x1xi32>
    %40 = arith.addi %12, %39 : vector<1x32x1xi32>
    %c32_i32_17 = arith.constant 32 : i32
    %41 = vector.broadcast %c32_i32_17 : i32 to vector<1x32x1xi32>
    %42 = arith.cmpi slt, %40, %41 : vector<1x32x1xi32>
    %43 = arith.andi %38, %42 : vector<1x32x1xi1>
    %cst_18 = arith.constant 0.000000e+00 : f32
    %44 = vector.shape_cast %43 : vector<1x32x1xi1> to vector<1x32x1xi1>
    %45 = vector.broadcast %44 : vector<1x32x1xi1> to vector<2x32x64xi1>
    %46 = vector.broadcast %cst_18 : f32 to vector<2x32x64xf32>
    %47 = arith.select %45, %34, %46 : vector<2x32x64xi1>, vector<2x32x64xf32>
    %48 = vector.shape_cast %47 : vector<2x32x64xf32> to vector<64x64xf32>
    %49 = arith.truncf %48 : vector<64x64xf32> to vector<64x64xbf16>
    %c1 = arith.constant 1 : index
    %c0_19 = arith.constant 0 : index
    %c0_20 = arith.constant 0 : index
    %50 = vector.load %arg4[%c1, %c0_19, %c0_20] : memref<5x64x128xbf16, #tpu.memory_space<vmem>>, vector<1x64x128xbf16>
    %51 = vector.shape_cast %50 : vector<1x64x128xbf16> to vector<64x128xbf16>
    %cst_21 = arith.constant dense<0.000000e+00> : vector<64x128xf32>
    %52 = tpu.matmul %49, %51, %cst_21 {dimension_numbers = #tpu.dot_dimension_numbers<[1], [0], [0], [1], [0, 0, 1, 1], [], []>} : vector<64x64xbf16>, vector<64x128xbf16>, vector<64x128xf32> -> vector<64x128xf32>
    %53 = arith.addf %33, %52 : vector<64x128xf32>
    %54 = vector.shape_cast %11 : vector<2x32x64xf32> to vector<64x64xf32>
    %55 = arith.truncf %54 : vector<64x64xf32> to vector<64x64xbf16>
    %c2 = arith.constant 2 : index
    %c0_22 = arith.constant 0 : index
    %c0_23 = arith.constant 0 : index
    %56 = vector.load %arg4[%c2, %c0_22, %c0_23] : memref<5x64x128xbf16, #tpu.memory_space<vmem>>, vector<1x64x128xbf16>
    %57 = vector.shape_cast %56 : vector<1x64x128xbf16> to vector<64x128xbf16>
    %cst_24 = arith.constant dense<0.000000e+00> : vector<64x128xf32>
    %58 = tpu.matmul %55, %57, %cst_24 {dimension_numbers = #tpu.dot_dimension_numbers<[1], [0], [0], [1], [0, 0, 1, 1], [], []>} : vector<64x64xbf16>, vector<64x128xbf16>, vector<64x128xf32> -> vector<64x128xf32>
    %59 = arith.addf %53, %58 : vector<64x128xf32>
    %c31_i32 = arith.constant 31 : i32
    %60 = tpu.dynamic_rotate %11 by %c31_i32 dim 1 : vector<2x32x64xf32>, i32 -> vector<2x32x64xf32>
    %c1_i32_25 = arith.constant 1 : i32
    %61 = vector.broadcast %c1_i32_25 : i32 to vector<1x32x1xi32>
    %62 = arith.addi %12, %61 : vector<1x32x1xi32>
    %c0_i32_26 = arith.constant 0 : i32
    %63 = vector.broadcast %c0_i32_26 : i32 to vector<1x32x1xi32>
    %64 = arith.cmpi sge, %62, %63 : vector<1x32x1xi32>
    %c1_i32_27 = arith.constant 1 : i32
    %65 = vector.broadcast %c1_i32_27 : i32 to vector<1x32x1xi32>
    %66 = arith.addi %12, %65 : vector<1x32x1xi32>
    %c32_i32_28 = arith.constant 32 : i32
    %67 = vector.broadcast %c32_i32_28 : i32 to vector<1x32x1xi32>
    %68 = arith.cmpi slt, %66, %67 : vector<1x32x1xi32>
    %69 = arith.andi %64, %68 : vector<1x32x1xi1>
    %cst_29 = arith.constant 0.000000e+00 : f32
    %70 = vector.shape_cast %69 : vector<1x32x1xi1> to vector<1x32x1xi1>
    %71 = vector.broadcast %70 : vector<1x32x1xi1> to vector<2x32x64xi1>
    %72 = vector.broadcast %cst_29 : f32 to vector<2x32x64xf32>
    %73 = arith.select %71, %60, %72 : vector<2x32x64xi1>, vector<2x32x64xf32>
    %74 = vector.shape_cast %73 : vector<2x32x64xf32> to vector<64x64xf32>
    %75 = arith.truncf %74 : vector<64x64xf32> to vector<64x64xbf16>
    %c3 = arith.constant 3 : index
    %c0_30 = arith.constant 0 : index
    %c0_31 = arith.constant 0 : index
    %76 = vector.load %arg4[%c3, %c0_30, %c0_31] : memref<5x64x128xbf16, #tpu.memory_space<vmem>>, vector<1x64x128xbf16>
    %77 = vector.shape_cast %76 : vector<1x64x128xbf16> to vector<64x128xbf16>
    %cst_32 = arith.constant dense<0.000000e+00> : vector<64x128xf32>
    %78 = tpu.matmul %75, %77, %cst_32 {dimension_numbers = #tpu.dot_dimension_numbers<[1], [0], [0], [1], [0, 0, 1, 1], [], []>} : vector<64x64xbf16>, vector<64x128xbf16>, vector<64x128xf32> -> vector<64x128xf32>
    %79 = arith.addf %59, %78 : vector<64x128xf32>
    %c30_i32 = arith.constant 30 : i32
    %80 = tpu.dynamic_rotate %11 by %c30_i32 dim 1 : vector<2x32x64xf32>, i32 -> vector<2x32x64xf32>
    %c2_i32_33 = arith.constant 2 : i32
    %81 = vector.broadcast %c2_i32_33 : i32 to vector<1x32x1xi32>
    %82 = arith.addi %12, %81 : vector<1x32x1xi32>
    %c0_i32_34 = arith.constant 0 : i32
    %83 = vector.broadcast %c0_i32_34 : i32 to vector<1x32x1xi32>
    %84 = arith.cmpi sge, %82, %83 : vector<1x32x1xi32>
    %c2_i32_35 = arith.constant 2 : i32
    %85 = vector.broadcast %c2_i32_35 : i32 to vector<1x32x1xi32>
    %86 = arith.addi %12, %85 : vector<1x32x1xi32>
    %c32_i32_36 = arith.constant 32 : i32
    %87 = vector.broadcast %c32_i32_36 : i32 to vector<1x32x1xi32>
    %88 = arith.cmpi slt, %86, %87 : vector<1x32x1xi32>
    %89 = arith.andi %84, %88 : vector<1x32x1xi1>
    %cst_37 = arith.constant 0.000000e+00 : f32
    %90 = vector.shape_cast %89 : vector<1x32x1xi1> to vector<1x32x1xi1>
    %91 = vector.broadcast %90 : vector<1x32x1xi1> to vector<2x32x64xi1>
    %92 = vector.broadcast %cst_37 : f32 to vector<2x32x64xf32>
    %93 = arith.select %91, %80, %92 : vector<2x32x64xi1>, vector<2x32x64xf32>
    %94 = vector.shape_cast %93 : vector<2x32x64xf32> to vector<64x64xf32>
    %95 = arith.truncf %94 : vector<64x64xf32> to vector<64x64xbf16>
    %c4 = arith.constant 4 : index
    %c0_38 = arith.constant 0 : index
    %c0_39 = arith.constant 0 : index
    %96 = vector.load %arg4[%c4, %c0_38, %c0_39] : memref<5x64x128xbf16, #tpu.memory_space<vmem>>, vector<1x64x128xbf16>
    %97 = vector.shape_cast %96 : vector<1x64x128xbf16> to vector<64x128xbf16>
    %cst_40 = arith.constant dense<0.000000e+00> : vector<64x128xf32>
    %98 = tpu.matmul %95, %97, %cst_40 {dimension_numbers = #tpu.dot_dimension_numbers<[1], [0], [0], [1], [0, 0, 1, 1], [], []>} : vector<64x64xbf16>, vector<64x128xbf16>, vector<64x128xf32> -> vector<64x128xf32>
    %99 = arith.addf %79, %98 : vector<64x128xf32>
    %c0_41 = arith.constant 0 : index
    %c0_42 = arith.constant 0 : index
    %100 = vector.load %arg5[%c0_41, %c0_42] : memref<1x128xf32, #tpu.memory_space<vmem>>, vector<1x128xf32>
    %101 = vector.broadcast %100 : vector<1x128xf32> to vector<64x128xf32>
    %102 = arith.addf %99, %101 : vector<64x128xf32>
    %cst_43 = arith.constant 0.000000e+00 : f32
    %103 = vector.broadcast %cst_43 : f32 to vector<64x128xf32>
    %104 = arith.maximumf %102, %103 : vector<64x128xf32>
    %105 = vector.shape_cast %104 : vector<64x128xf32> to vector<2x32x128xf32>
    %106 = vector.shape_cast %105 : vector<2x32x128xf32> to vector<2x16x2x128xf32>
    %cst_44 = arith.constant dense<0xFF800000> : vector<2x16x128xf32>
    %107 = vector.multi_reduction <maximumf>, %106, %cst_44 [2] : vector<2x16x2x128xf32> to vector<2x16x128xf32>
    %108 = tpu.iota {dimensions = array<i32: 1>} : vector<1x16x1xi32>
    %cst_45 = arith.constant 0.000000e+00 : f32
    %109 = vector.broadcast %cst_45 : f32 to vector<32x256xf32>
    %c1_i32_46 = arith.constant 1 : i32
    %110 = tpu.dynamic_rotate %107 by %c1_i32_46 dim 1 : vector<2x16x128xf32>, i32 -> vector<2x16x128xf32>
    %c-1_i32_47 = arith.constant -1 : i32
    %111 = vector.broadcast %c-1_i32_47 : i32 to vector<1x16x1xi32>
    %112 = arith.addi %108, %111 : vector<1x16x1xi32>
    %c0_i32_48 = arith.constant 0 : i32
    %113 = vector.broadcast %c0_i32_48 : i32 to vector<1x16x1xi32>
    %114 = arith.cmpi sge, %112, %113 : vector<1x16x1xi32>
    %c-1_i32_49 = arith.constant -1 : i32
    %115 = vector.broadcast %c-1_i32_49 : i32 to vector<1x16x1xi32>
    %116 = arith.addi %108, %115 : vector<1x16x1xi32>
    %c16_i32 = arith.constant 16 : i32
    %117 = vector.broadcast %c16_i32 : i32 to vector<1x16x1xi32>
    %118 = arith.cmpi slt, %116, %117 : vector<1x16x1xi32>
    %119 = arith.andi %114, %118 : vector<1x16x1xi1>
    %cst_50 = arith.constant 0.000000e+00 : f32
    %120 = vector.shape_cast %119 : vector<1x16x1xi1> to vector<1x16x1xi1>
    %121 = vector.broadcast %120 : vector<1x16x1xi1> to vector<2x16x128xi1>
    %122 = vector.broadcast %cst_50 : f32 to vector<2x16x128xf32>
    %123 = arith.select %121, %110, %122 : vector<2x16x128xi1>, vector<2x16x128xf32>
    %124 = vector.shape_cast %123 : vector<2x16x128xf32> to vector<32x128xf32>
    %125 = arith.truncf %124 : vector<32x128xf32> to vector<32x128xbf16>
    %c0_51 = arith.constant 0 : index
    %c0_52 = arith.constant 0 : index
    %c0_53 = arith.constant 0 : index
    %126 = vector.load %arg6[%c0_51, %c0_52, %c0_53] : memref<3x128x256xbf16, #tpu.memory_space<vmem>>, vector<1x128x256xbf16>
    %127 = vector.shape_cast %126 : vector<1x128x256xbf16> to vector<128x256xbf16>
    %cst_54 = arith.constant dense<0.000000e+00> : vector<32x256xf32>
    %128 = tpu.matmul %125, %127, %cst_54 {dimension_numbers = #tpu.dot_dimension_numbers<[1], [0], [0], [1], [0, 0, 1, 1], [], []>} : vector<32x128xbf16>, vector<128x256xbf16>, vector<32x256xf32> -> vector<32x256xf32>
    %129 = arith.addf %109, %128 : vector<32x256xf32>
    %130 = vector.shape_cast %107 : vector<2x16x128xf32> to vector<32x128xf32>
    %131 = arith.truncf %130 : vector<32x128xf32> to vector<32x128xbf16>
    %c1_55 = arith.constant 1 : index
    %c0_56 = arith.constant 0 : index
    %c0_57 = arith.constant 0 : index
    %132 = vector.load %arg6[%c1_55, %c0_56, %c0_57] : memref<3x128x256xbf16, #tpu.memory_space<vmem>>, vector<1x128x256xbf16>
    %133 = vector.shape_cast %132 : vector<1x128x256xbf16> to vector<128x256xbf16>
    %cst_58 = arith.constant dense<0.000000e+00> : vector<32x256xf32>
    %134 = tpu.matmul %131, %133, %cst_58 {dimension_numbers = #tpu.dot_dimension_numbers<[1], [0], [0], [1], [0, 0, 1, 1], [], []>} : vector<32x128xbf16>, vector<128x256xbf16>, vector<32x256xf32> -> vector<32x256xf32>
    %135 = arith.addf %129, %134 : vector<32x256xf32>
    %c15_i32 = arith.constant 15 : i32
    %136 = tpu.dynamic_rotate %107 by %c15_i32 dim 1 : vector<2x16x128xf32>, i32 -> vector<2x16x128xf32>
    %c1_i32_59 = arith.constant 1 : i32
    %137 = vector.broadcast %c1_i32_59 : i32 to vector<1x16x1xi32>
    %138 = arith.addi %108, %137 : vector<1x16x1xi32>
    %c0_i32_60 = arith.constant 0 : i32
    %139 = vector.broadcast %c0_i32_60 : i32 to vector<1x16x1xi32>
    %140 = arith.cmpi sge, %138, %139 : vector<1x16x1xi32>
    %c1_i32_61 = arith.constant 1 : i32
    %141 = vector.broadcast %c1_i32_61 : i32 to vector<1x16x1xi32>
    %142 = arith.addi %108, %141 : vector<1x16x1xi32>
    %c16_i32_62 = arith.constant 16 : i32
    %143 = vector.broadcast %c16_i32_62 : i32 to vector<1x16x1xi32>
    %144 = arith.cmpi slt, %142, %143 : vector<1x16x1xi32>
    %145 = arith.andi %140, %144 : vector<1x16x1xi1>
    %cst_63 = arith.constant 0.000000e+00 : f32
    %146 = vector.shape_cast %145 : vector<1x16x1xi1> to vector<1x16x1xi1>
    %147 = vector.broadcast %146 : vector<1x16x1xi1> to vector<2x16x128xi1>
    %148 = vector.broadcast %cst_63 : f32 to vector<2x16x128xf32>
    %149 = arith.select %147, %136, %148 : vector<2x16x128xi1>, vector<2x16x128xf32>
    %150 = vector.shape_cast %149 : vector<2x16x128xf32> to vector<32x128xf32>
    %151 = arith.truncf %150 : vector<32x128xf32> to vector<32x128xbf16>
    %c2_64 = arith.constant 2 : index
    %c0_65 = arith.constant 0 : index
    %c0_66 = arith.constant 0 : index
    %152 = vector.load %arg6[%c2_64, %c0_65, %c0_66] : memref<3x128x256xbf16, #tpu.memory_space<vmem>>, vector<1x128x256xbf16>
    %153 = vector.shape_cast %152 : vector<1x128x256xbf16> to vector<128x256xbf16>
    %cst_67 = arith.constant dense<0.000000e+00> : vector<32x256xf32>
    %154 = tpu.matmul %151, %153, %cst_67 {dimension_numbers = #tpu.dot_dimension_numbers<[1], [0], [0], [1], [0, 0, 1, 1], [], []>} : vector<32x128xbf16>, vector<128x256xbf16>, vector<32x256xf32> -> vector<32x256xf32>
    %155 = arith.addf %135, %154 : vector<32x256xf32>
    %c0_68 = arith.constant 0 : index
    %c0_69 = arith.constant 0 : index
    %156 = vector.load %arg7[%c0_68, %c0_69] : memref<1x256xf32, #tpu.memory_space<vmem>>, vector<1x256xf32>
    %157 = vector.broadcast %156 : vector<1x256xf32> to vector<32x256xf32>
    %158 = arith.addf %155, %157 : vector<32x256xf32>
    %cst_70 = arith.constant 0.000000e+00 : f32
    %159 = vector.broadcast %cst_70 : f32 to vector<32x256xf32>
    %160 = arith.maximumf %158, %159 : vector<32x256xf32>
    %161 = vector.shape_cast %160 : vector<32x256xf32> to vector<2x16x256xf32>
    %162 = vector.shape_cast %161 : vector<2x16x256xf32> to vector<2x8x2x256xf32>
    %cst_71 = arith.constant dense<0xFF800000> : vector<2x8x256xf32>
    %163 = vector.multi_reduction <maximumf>, %162, %cst_71 [2] : vector<2x8x2x256xf32> to vector<2x8x256xf32>
    %164 = tpu.iota {dimensions = array<i32: 1>} : vector<1x8x1xi32>
    %cst_72 = arith.constant 0.000000e+00 : f32
    %165 = vector.broadcast %cst_72 : f32 to vector<16x512xf32>
    %c1_i32_73 = arith.constant 1 : i32
    %166 = tpu.dynamic_rotate %163 by %c1_i32_73 dim 1 : vector<2x8x256xf32>, i32 -> vector<2x8x256xf32>
    %c-1_i32_74 = arith.constant -1 : i32
    %167 = vector.broadcast %c-1_i32_74 : i32 to vector<1x8x1xi32>
    %168 = arith.addi %164, %167 : vector<1x8x1xi32>
    %c0_i32_75 = arith.constant 0 : i32
    %169 = vector.broadcast %c0_i32_75 : i32 to vector<1x8x1xi32>
    %170 = arith.cmpi sge, %168, %169 : vector<1x8x1xi32>
    %c-1_i32_76 = arith.constant -1 : i32
    %171 = vector.broadcast %c-1_i32_76 : i32 to vector<1x8x1xi32>
    %172 = arith.addi %164, %171 : vector<1x8x1xi32>
    %c8_i32 = arith.constant 8 : i32
    %173 = vector.broadcast %c8_i32 : i32 to vector<1x8x1xi32>
    %174 = arith.cmpi slt, %172, %173 : vector<1x8x1xi32>
    %175 = arith.andi %170, %174 : vector<1x8x1xi1>
    %cst_77 = arith.constant 0.000000e+00 : f32
    %176 = vector.shape_cast %175 : vector<1x8x1xi1> to vector<1x8x1xi1>
    %177 = vector.broadcast %176 : vector<1x8x1xi1> to vector<2x8x256xi1>
    %178 = vector.broadcast %cst_77 : f32 to vector<2x8x256xf32>
    %179 = arith.select %177, %166, %178 : vector<2x8x256xi1>, vector<2x8x256xf32>
    %180 = vector.shape_cast %179 : vector<2x8x256xf32> to vector<16x256xf32>
    %181 = arith.truncf %180 : vector<16x256xf32> to vector<16x256xbf16>
    %c0_78 = arith.constant 0 : index
    %c0_79 = arith.constant 0 : index
    %c0_80 = arith.constant 0 : index
    %182 = vector.load %arg8[%c0_78, %c0_79, %c0_80] : memref<3x256x512xbf16, #tpu.memory_space<vmem>>, vector<1x256x512xbf16>
    %183 = vector.shape_cast %182 : vector<1x256x512xbf16> to vector<256x512xbf16>
    %cst_81 = arith.constant dense<0.000000e+00> : vector<16x512xf32>
    %184 = tpu.matmul %181, %183, %cst_81 {dimension_numbers = #tpu.dot_dimension_numbers<[1], [0], [0], [1], [0, 0, 1, 1], [], []>} : vector<16x256xbf16>, vector<256x512xbf16>, vector<16x512xf32> -> vector<16x512xf32>
    %185 = arith.addf %165, %184 : vector<16x512xf32>
    %186 = vector.shape_cast %163 : vector<2x8x256xf32> to vector<16x256xf32>
    %187 = arith.truncf %186 : vector<16x256xf32> to vector<16x256xbf16>
    %c1_82 = arith.constant 1 : index
    %c0_83 = arith.constant 0 : index
    %c0_84 = arith.constant 0 : index
    %188 = vector.load %arg8[%c1_82, %c0_83, %c0_84] : memref<3x256x512xbf16, #tpu.memory_space<vmem>>, vector<1x256x512xbf16>
    %189 = vector.shape_cast %188 : vector<1x256x512xbf16> to vector<256x512xbf16>
    %cst_85 = arith.constant dense<0.000000e+00> : vector<16x512xf32>
    %190 = tpu.matmul %187, %189, %cst_85 {dimension_numbers = #tpu.dot_dimension_numbers<[1], [0], [0], [1], [0, 0, 1, 1], [], []>} : vector<16x256xbf16>, vector<256x512xbf16>, vector<16x512xf32> -> vector<16x512xf32>
    %191 = arith.addf %185, %190 : vector<16x512xf32>
    %c7_i32 = arith.constant 7 : i32
    %192 = tpu.dynamic_rotate %163 by %c7_i32 dim 1 : vector<2x8x256xf32>, i32 -> vector<2x8x256xf32>
    %c1_i32_86 = arith.constant 1 : i32
    %193 = vector.broadcast %c1_i32_86 : i32 to vector<1x8x1xi32>
    %194 = arith.addi %164, %193 : vector<1x8x1xi32>
    %c0_i32_87 = arith.constant 0 : i32
    %195 = vector.broadcast %c0_i32_87 : i32 to vector<1x8x1xi32>
    %196 = arith.cmpi sge, %194, %195 : vector<1x8x1xi32>
    %c1_i32_88 = arith.constant 1 : i32
    %197 = vector.broadcast %c1_i32_88 : i32 to vector<1x8x1xi32>
    %198 = arith.addi %164, %197 : vector<1x8x1xi32>
    %c8_i32_89 = arith.constant 8 : i32
    %199 = vector.broadcast %c8_i32_89 : i32 to vector<1x8x1xi32>
    %200 = arith.cmpi slt, %198, %199 : vector<1x8x1xi32>
    %201 = arith.andi %196, %200 : vector<1x8x1xi1>
    %cst_90 = arith.constant 0.000000e+00 : f32
    %202 = vector.shape_cast %201 : vector<1x8x1xi1> to vector<1x8x1xi1>
    %203 = vector.broadcast %202 : vector<1x8x1xi1> to vector<2x8x256xi1>
    %204 = vector.broadcast %cst_90 : f32 to vector<2x8x256xf32>
    %205 = arith.select %203, %192, %204 : vector<2x8x256xi1>, vector<2x8x256xf32>
    %206 = vector.shape_cast %205 : vector<2x8x256xf32> to vector<16x256xf32>
    %207 = arith.truncf %206 : vector<16x256xf32> to vector<16x256xbf16>
    %c2_91 = arith.constant 2 : index
    %c0_92 = arith.constant 0 : index
    %c0_93 = arith.constant 0 : index
    %208 = vector.load %arg8[%c2_91, %c0_92, %c0_93] : memref<3x256x512xbf16, #tpu.memory_space<vmem>>, vector<1x256x512xbf16>
    %209 = vector.shape_cast %208 : vector<1x256x512xbf16> to vector<256x512xbf16>
    %cst_94 = arith.constant dense<0.000000e+00> : vector<16x512xf32>
    %210 = tpu.matmul %207, %209, %cst_94 {dimension_numbers = #tpu.dot_dimension_numbers<[1], [0], [0], [1], [0, 0, 1, 1], [], []>} : vector<16x256xbf16>, vector<256x512xbf16>, vector<16x512xf32> -> vector<16x512xf32>
    %211 = arith.addf %191, %210 : vector<16x512xf32>
    %c0_95 = arith.constant 0 : index
    %c0_96 = arith.constant 0 : index
    %212 = vector.load %arg9[%c0_95, %c0_96] : memref<1x512xf32, #tpu.memory_space<vmem>>, vector<1x512xf32>
    %213 = vector.broadcast %212 : vector<1x512xf32> to vector<16x512xf32>
    %214 = arith.addf %211, %213 : vector<16x512xf32>
    %cst_97 = arith.constant 0.000000e+00 : f32
    %215 = vector.broadcast %cst_97 : f32 to vector<16x512xf32>
    %216 = arith.maximumf %214, %215 : vector<16x512xf32>
    %217 = vector.shape_cast %216 : vector<16x512xf32> to vector<2x8x512xf32>
    %cst_98 = arith.constant dense<0.000000e+00> : vector<2x512xf32>
    %218 = vector.multi_reduction <add>, %217, %cst_98 [1] : vector<2x8x512xf32> to vector<2x512xf32>
    %cst_99 = arith.constant 8.000000e+00 : f32
    %219 = vector.broadcast %cst_99 : f32 to vector<2x512xf32>
    %220 = arith.divf %218, %219 : vector<2x512xf32>
    %221 = arith.truncf %220 : vector<2x512xf32> to vector<2x512xbf16>
    %c0_100 = arith.constant 0 : index
    %c0_101 = arith.constant 0 : index
    %222 = vector.load %arg10[%c0_100, %c0_101] : memref<512x256xbf16, #tpu.memory_space<vmem>>, vector<512x256xbf16>
    %cst_102 = arith.constant dense<0.000000e+00> : vector<2x256xf32>
    %223 = tpu.matmul %221, %222, %cst_102 {dimension_numbers = #tpu.dot_dimension_numbers<[1], [0], [0], [1], [0, 0, 1, 1], [], []>} : vector<2x512xbf16>, vector<512x256xbf16>, vector<2x256xf32> -> vector<2x256xf32>
    %c0_103 = arith.constant 0 : index
    %c0_104 = arith.constant 0 : index
    %224 = vector.load %arg11[%c0_103, %c0_104] : memref<1x256xf32, #tpu.memory_space<vmem>>, vector<1x256xf32>
    %225 = vector.broadcast %224 : vector<1x256xf32> to vector<2x256xf32>
    %226 = arith.addf %223, %225 : vector<2x256xf32>
    %cst_105 = arith.constant 0.000000e+00 : f32
    %227 = vector.broadcast %cst_105 : f32 to vector<2x256xf32>
    %228 = arith.maximumf %226, %227 : vector<2x256xf32>
    %229 = arith.truncf %228 : vector<2x256xf32> to vector<2x256xbf16>
    %c0_106 = arith.constant 0 : index
    %c0_107 = arith.constant 0 : index
    %230 = vector.load %arg12[%c0_106, %c0_107] : memref<256x128xbf16, #tpu.memory_space<vmem>>, vector<256x128xbf16>
    %cst_108 = arith.constant dense<0.000000e+00> : vector<2x128xf32>
    %231 = tpu.matmul %229, %230, %cst_108 {dimension_numbers = #tpu.dot_dimension_numbers<[1], [0], [0], [1], [0, 0, 1, 1], [], []>} : vector<2x256xbf16>, vector<256x128xbf16>, vector<2x128xf32> -> vector<2x128xf32>
    %c0_109 = arith.constant 0 : index
    %c0_110 = arith.constant 0 : index
    %232 = vector.load %arg13[%c0_109, %c0_110] : memref<1x128xf32, #tpu.memory_space<vmem>>, vector<1x128xf32>
    %233 = vector.broadcast %232 : vector<1x128xf32> to vector<2x128xf32>
    %234 = arith.addf %231, %233 : vector<2x128xf32>
    %cst_111 = arith.constant 0.000000e+00 : f32
    %235 = vector.broadcast %cst_111 : f32 to vector<2x128xf32>
    %236 = arith.maximumf %234, %235 : vector<2x128xf32>
    %237 = arith.truncf %236 : vector<2x128xf32> to vector<2x128xbf16>
    %c0_112 = arith.constant 0 : index
    %c0_113 = arith.constant 0 : index
    %238 = vector.load %arg14[%c0_112, %c0_113] : memref<128x128xbf16, #tpu.memory_space<vmem>>, vector<128x128xbf16>
    %cst_114 = arith.constant dense<0.000000e+00> : vector<2x128xf32>
    %239 = tpu.matmul %237, %238, %cst_114 {dimension_numbers = #tpu.dot_dimension_numbers<[1], [0], [0], [1], [0, 0, 1, 1], [], []>} : vector<2x128xbf16>, vector<128x128xbf16>, vector<2x128xf32> -> vector<2x128xf32>
    %c0_115 = arith.constant 0 : index
    %c0_116 = arith.constant 0 : index
    %240 = vector.load %arg15[%c0_115, %c0_116] : memref<1x128xf32, #tpu.memory_space<vmem>>, vector<1x128xf32>
    %241 = vector.broadcast %240 : vector<1x128xf32> to vector<2x128xf32>
    %242 = arith.addf %239, %241 : vector<2x128xf32>
    %c0_117 = arith.constant 0 : index
    %c0_118 = arith.constant 0 : index
    %243 = vector.load %arg16[%c0_117, %c0_118] : memref<2x128xf32, #tpu.memory_space<vmem>>, vector<2x128xf32>
    tpu.vector_store %arg16[%c0_117, %c0_118], %242 {strides = array<i32>} : memref<2x128xf32, #tpu.memory_space<vmem>>, vector<2x128xf32>,
    return
  }
  func.func @transform_0(%arg0: i32) -> (i32, i32, i32) {
    %c0_i32 = arith.constant 0 : i32
    %c0_i32_0 = arith.constant 0 : i32
    %c0_i32_1 = arith.constant 0 : i32
    return %arg0, %c0_i32, %c0_i32_0 : i32, i32, i32
  }
  func.func @transform_1(%arg0: i32) -> (i32, i32) {
    %c0_i32 = arith.constant 0 : i32
    %c0_i32_0 = arith.constant 0 : i32
    %c0_i32_1 = arith.constant 0 : i32
    return %c0_i32, %c0_i32_0 : i32, i32
  }
  func.func @transform_2(%arg0: i32) -> (i32, i32) {
    %c0_i32 = arith.constant 0 : i32
    %c0_i32_0 = arith.constant 0 : i32
    %c0_i32_1 = arith.constant 0 : i32
    return %c0_i32, %c0_i32_0 : i32, i32
  }
  func.func @transform_3(%arg0: i32) -> (i32, i32, i32) {
    %c0_i32 = arith.constant 0 : i32
    %c0_i32_0 = arith.constant 0 : i32
    %c0_i32_1 = arith.constant 0 : i32
    %c0_i32_2 = arith.constant 0 : i32
    return %c0_i32, %c0_i32_0, %c0_i32_1 : i32, i32, i32
  }
  func.func @transform_4(%arg0: i32) -> (i32, i32) {
    %c0_i32 = arith.constant 0 : i32
    %c0_i32_0 = arith.constant 0 : i32
    %c0_i32_1 = arith.constant 0 : i32
    return %c0_i32, %c0_i32_0 : i32, i32
  }
  func.func @transform_5(%arg0: i32) -> (i32, i32, i32) {
    %c0_i32 = arith.constant 0 : i32
    %c0_i32_0 = arith.constant 0 : i32
    %c0_i32_1 = arith.constant 0 : i32
    %c0_i32_2 = arith.constant 0 : i32
    return %c0_i32, %c0_i32_0, %c0_i32_1 : i32, i32, i32
  }
  func.func @transform_6(%arg0: i32) -> (i32, i32) {
    %c0_i32 = arith.constant 0 : i32
    %c0_i32_0 = arith.constant 0 : i32
    %c0_i32_1 = arith.constant 0 : i32
    return %c0_i32, %c0_i32_0 : i32, i32
  }
  func.func @transform_7(%arg0: i32) -> (i32, i32, i32) {
    %c0_i32 = arith.constant 0 : i32
    %c0_i32_0 = arith.constant 0 : i32
    %c0_i32_1 = arith.constant 0 : i32
    %c0_i32_2 = arith.constant 0 : i32
    return %c0_i32, %c0_i32_0, %c0_i32_1 : i32, i32, i32
  }
  func.func @transform_8(%arg0: i32) -> (i32, i32) {
    %c0_i32 = arith.constant 0 : i32
    %c0_i32_0 = arith.constant 0 : i32
    %c0_i32_1 = arith.constant 0 : i32
    return %c0_i32, %c0_i32_0 : i32, i32
  }
  func.func @transform_9(%arg0: i32) -> (i32, i32) {
    %c0_i32 = arith.constant 0 : i32
    %c0_i32_0 = arith.constant 0 : i32
    %c0_i32_1 = arith.constant 0 : i32
    return %c0_i32, %c0_i32_0 : i32, i32
  }
  func.func @transform_10(%arg0: i32) -> (i32, i32) {
    %c0_i32 = arith.constant 0 : i32
    %c0_i32_0 = arith.constant 0 : i32
    %c0_i32_1 = arith.constant 0 : i32
    return %c0_i32, %c0_i32_0 : i32, i32
  }
  func.func @transform_11(%arg0: i32) -> (i32, i32) {
    %c0_i32 = arith.constant 0 : i32
    %c0_i32_0 = arith.constant 0 : i32
    %c0_i32_1 = arith.constant 0 : i32
    return %c0_i32, %c0_i32_0 : i32, i32
  }
  func.func @transform_12(%arg0: i32) -> (i32, i32) {
    %c0_i32 = arith.constant 0 : i32
    %c0_i32_0 = arith.constant 0 : i32
    %c0_i32_1 = arith.constant 0 : i32
    return %c0_i32, %c0_i32_0 : i32, i32
  }
  func.func @transform_13(%arg0: i32) -> (i32, i32) {
    %c0_i32 = arith.constant 0 : i32
    %c0_i32_0 = arith.constant 0 : i32
    %c0_i32_1 = arith.constant 0 : i32
    return %c0_i32, %c0_i32_0 : i32, i32
  }
  func.func @transform_14(%arg0: i32) -> (i32, i32) {
    %c0_i32 = arith.constant 0 : i32
    %c0_i32_0 = arith.constant 0 : i32
    %c0_i32_1 = arith.constant 0 : i32
    return %c0_i32, %c0_i32_0 : i32, i32
  }
  func.func @transform_15(%arg0: i32) -> (i32, i32) {
    %c0_i32 = arith.constant 0 : i32
    %c0_i32_0 = arith.constant 0 : i32
    return %arg0, %c0_i32 : i32, i32
  }
}

</mosaic_0001>

<llo_original>
// kernel: tpu_custom_call.1
$region0: #{tpu_custom_call.1}
  #allocation0 [shape = 'u32[]', space=smem, size = 0x4, offset = 0x4, fixed_abs, tag = 'smem constant byte address 0x4 - core index']
  #allocation1 [shape = 'u32[144,128]{1,0:T(1,128)}', space=vmem, size = 0x12000, scoped, tag = 'internal scratch']
  %s0 = inlined_call_operand.vmem [shape: bf16[2,64,14], index: 0, kind: input, shape index: {}]
  %s1 = inlined_call_operand.vmem [shape: bf16[14,64], index: 1, kind: input, shape index: {}]
  %s2 = inlined_call_operand.vmem [shape: f32[1,64], index: 2, kind: input, shape index: {}]
  %s3 = inlined_call_operand.hbm [shape: bf16[5,64,128], index: 3, kind: input, shape index: {}]
  %s4 = inlined_call_operand.vmem [shape: f32[1,128], index: 4, kind: input, shape index: {}]
  %s5 = inlined_call_operand.hbm [shape: bf16[3,128,256], index: 5, kind: input, shape index: {}]
  %s6 = inlined_call_operand.vmem [shape: f32[1,256], index: 6, kind: input, shape index: {}]
  %s7 = inlined_call_operand.hbm [shape: bf16[3,256,512], index: 7, kind: input, shape index: {}]
  %s8 = inlined_call_operand.vmem [shape: f32[1,512], index: 8, kind: input, shape index: {}]
  %s9 = inlined_call_operand.hbm [shape: bf16[512,256], index: 9, kind: input, shape index: {}]
  %s10 = inlined_call_operand.vmem [shape: f32[1,256], index: 10, kind: input, shape index: {}]
  %s11 = inlined_call_operand.hbm [shape: bf16[256,128], index: 11, kind: input, shape index: {}]
  %s12 = inlined_call_operand.vmem [shape: f32[1,128], index: 12, kind: input, shape index: {}]
  %s13 = inlined_call_operand.vmem [shape: bf16[128,128], index: 13, kind: input, shape index: {}]
  %s14 = inlined_call_operand.vmem [shape: f32[1,128], index: 14, kind: input, shape index: {}]
  %s15 = inlined_call_operand.hbm [shape: f32[2,128], index: 15, kind: output, shape index: {}]
  %s16 = sld [smem:[#allocation0]]
  $region90: #{tpu_custom_call.1} parent=0
    _
  %s18 = ssub.s32 1, %s16
  %s19 = scalar_select 0, %s18, %s16
  $region1: #{tpu_custom_call.1} parent=0
    #allocation2 [shape = 'u8[81920]{0}', space=vmem, size = 0x14000, scoped, tag = 'input window, operand 3, single buffered']
    #allocation3 [shape = 's32[1]{0}', space=sflag, size = 0x4, scoped, tag = 'scoped memory for tpu_custom_call.1']
    #allocation4 [shape = 's32[1]{0}', space=sflag, size = 0x4, scoped, tag = 'scoped memory for tpu_custom_call.1']
    #allocation5 [shape = 'u8[196608]{0}', space=vmem, size = 0x30000, scoped, tag = 'input window, operand 5, single buffered']
    #allocation6 [shape = 's32[1]{0}', space=sflag, size = 0x4, scoped, tag = 'scoped memory for tpu_custom_call.1']
    #allocation7 [shape = 'u8[786432]{0}', space=vmem, size = 0xc0000, scoped, tag = 'input window, operand 7, single buffered']
    #allocation8 [shape = 'u8[262144]{0}', space=vmem, size = 0x40000, scoped, tag = 'input window, operand 9, single buffered']
    #allocation9 [shape = 's32[1]{0}', space=sflag, size = 0x4, scoped, tag = 'scoped memory for tpu_custom_call.1']
    #allocation10 [shape = 'u8[65536]{0}', space=vmem, size = 0x10000, scoped, tag = 'input window, operand 11, single buffered']
    #allocation11 [shape = 'u8[1024]{0}', space=vmem, size = 0x400, scoped, tag = 'output window, operand 0, single buffered']
    %20 = vsyncpa [#allocation3], 0
    %21 = vsyncpa [#allocation6], 0
    %22 = vsyncpa [#allocation9], 0
    %23 = vsyncpa [#allocation4], 0
    // Predicated region
    $region2: #{tpu_custom_call.1} parent=1 // pred_check
      _
    $region3: #{tpu_custom_call.1} parent=1 // pred_check_branch
      %25 = sbr.rel (0) target = $region5
    $region4: #{tpu_custom_call.1} parent=1 // pred_region
      _
    $region5: #{tpu_custom_call.1} parent=1 // pred_fallthru
      _
    // Predicated region
    $region6: #{tpu_custom_call.1} parent=1 // pred_check
      _
    $region7: #{tpu_custom_call.1} parent=1 // pred_check_branch
      %27 = sbr.rel (0) target = $region9
    $region8: #{tpu_custom_call.1} parent=1 // pred_region
      _
    $region9: #{tpu_custom_call.1} parent=1 // pred_fallthru
      _
    // Predicated region
    $region10: #{tpu_custom_call.1} parent=1 // pred_check
      _
    $region11: #{tpu_custom_call.1} parent=1 // pred_check_branch
      %29 = sbr.rel (0) target = $region13
    $region12: #{tpu_custom_call.1} parent=1 // pred_region
      _
    $region13: #{tpu_custom_call.1} parent=1 // pred_fallthru
      _
    // Predicated region
    $region14: #{tpu_custom_call.1} parent=1 // pred_check
      _
    $region15: #{tpu_custom_call.1} parent=1 // pred_check_branch
      %31 = sbr.rel (0) target = $region17
    $region16: #{tpu_custom_call.1} parent=1 // pred_region
      %s33 = ssub.s32 2560, 2560
      %34 = vsyncadd [#allocation3], %s33
      %s35 = sshll.u32 [#allocation2], 4
      %s36 = int_to_ptr.vmem [resolvable:$true] %s35
      %41 = dma.hbm_to_vmem [thread:$0]  %s3, 2560, %s36, [#allocation3], 64, 64, 4
    $region17: #{tpu_custom_call.1} parent=1 // pred_fallthru
      _
    // Predicated region
    $region18: #{tpu_custom_call.1} parent=1 // pred_check
      _
    $region19: #{tpu_custom_call.1} parent=1 // pred_check_branch
      %43 = sbr.rel (0) target = $region21
    $region20: #{tpu_custom_call.1} parent=1 // pred_region
      _
    $region21: #{tpu_custom_call.1} parent=1 // pred_fallthru
      _
    // Predicated region
    $region22: #{tpu_custom_call.1} parent=1 // pred_check
      _
    $region23: #{tpu_custom_call.1} parent=1 // pred_check_branch
      %45 = sbr.rel (0) target = $region25
    $region24: #{tpu_custom_call.1} parent=1 // pred_region
      %s47 = ssub.s32 6144, 6144
      %48 = vsyncadd [#allocation6], %s47
      %s49 = sshll.u32 [#allocation5], 4
      %s50 = int_to_ptr.vmem [resolvable:$true] %s49
      %55 = dma.hbm_to_vmem [thread:$0]  %s5, 6144, %s50, [#allocation6], 128, 128, 8
    $region25: #{tpu_custom_call.1} parent=1 // pred_fallthru
      _
    // Predicated region
    $region26: #{tpu_custom_call.1} parent=1 // pred_check
      _
    $region27: #{tpu_custom_call.1} parent=1 // pred_check_branch
      %57 = sbr.rel (0) target = $region29
    $region28: #{tpu_custom_call.1} parent=1 // pred_region
      _
    $region29: #{tpu_custom_call.1} parent=1 // pred_fallthru
      _
    // Predicated region
    $region30: #{tpu_custom_call.1} parent=1 // pred_check
      _
    $region31: #{tpu_custom_call.1} parent=1 // pred_check_branch
      %59 = sbr.rel (0) target = $region33
    $region32: #{tpu_custom_call.1} parent=1 // pred_region
      %s61 = ssub.s32 24576, 24576
      %62 = vsyncadd [#allocation6], %s61
      %s63 = sshll.u32 [#allocation7], 4
      %s64 = int_to_ptr.vmem [resolvable:$true] %s63
      %69 = dma.hbm_to_vmem [thread:$0]  %s7, 24576, %s64, [#allocation6], 256, 256, 16
    $region33: #{tpu_custom_call.1} parent=1 // pred_fallthru
      _
    // Predicated region
    $region34: #{tpu_custom_call.1} parent=1 // pred_check
      _
    $region35: #{tpu_custom_call.1} parent=1 // pred_check_branch
      %71 = sbr.rel (0) target = $region37
    $region36: #{tpu_custom_call.1} parent=1 // pred_region
      _
    $region37: #{tpu_custom_call.1} parent=1 // pred_fallthru
      _
    // Predicated region
    $region38: #{tpu_custom_call.1} parent=1 // pred_check
      _
    $region39: #{tpu_custom_call.1} parent=1 // pred_check_branch
      %73 = sbr.rel (0) target = $region41
    $region40: #{tpu_custom_call.1} parent=1 // pred_region
      %s75 = ssub.s32 8192, 8192
      %76 = vsyncadd [#allocation9], %s75
      %s77 = sshll.u32 [#allocation8], 4
      %s78 = int_to_ptr.vmem [resolvable:$true] %s77
      %83 = dma.hbm_to_vmem [thread:$0]  %s9, 8192, %s78, [#allocation9], 128, 128, 8
    $region41: #{tpu_custom_call.1} parent=1 // pred_fallthru
      _
    // Predicated region
    $region42: #{tpu_custom_call.1} parent=1 // pred_check
      _
    $region43: #{tpu_custom_call.1} parent=1 // pred_check_branch
      %85 = sbr.rel (0) target = $region45
    $region44: #{tpu_custom_call.1} parent=1 // pred_region
      _
    $region45: #{tpu_custom_call.1} parent=1 // pred_fallthru
      _
    // Predicated region
    $region46: #{tpu_custom_call.1} parent=1 // pred_check
      _
    $region47: #{tpu_custom_call.1} parent=1 // pred_check_branch
      %87 = sbr.rel (0) target = $region49
    $region48: #{tpu_custom_call.1} parent=1 // pred_region
      %s89 = ssub.s32 2048, 2048
      %90 = vsyncadd [#allocation9], %s89
      %s91 = sshll.u32 [#allocation10], 4
      %s92 = int_to_ptr.vmem [resolvable:$true] %s91
      %97 = dma.hbm_to_vmem [thread:$0]  %s11, 2048, %s92, [#allocation9], 64, 64, 4
    $region49: #{tpu_custom_call.1} parent=1 // pred_fallthru
      _
    // Predicated region
    $region50: #{tpu_custom_call.1} parent=1 // pred_check
      _
    $region51: #{tpu_custom_call.1} parent=1 // pred_check_branch
      %99 = sbr.rel (0) target = $region53
    $region52: #{tpu_custom_call.1} parent=1 // pred_region
      _
    $region53: #{tpu_custom_call.1} parent=1 // pred_fallthru
      _
    // Predicated region
    $region54: #{tpu_custom_call.1} parent=1 // pred_check
      _
    $region55: #{tpu_custom_call.1} parent=1 // pred_check_branch
      %101 = sbr.rel (0) target = $region57
    $region56: #{tpu_custom_call.1} parent=1 // pred_region
      _
    $region57: #{tpu_custom_call.1} parent=1 // pred_fallthru
      _
    // Predicated region
    $region58: #{tpu_custom_call.1} parent=1 // pred_check
      _
    $region59: #{tpu_custom_call.1} parent=1 // pred_check_branch
      %103 = sbr.rel (0) target = $region61
    $region60: #{tpu_custom_call.1} parent=1 // pred_region
      _
    $region61: #{tpu_custom_call.1} parent=1 // pred_fallthru
      _
    // Predicated region
    $region62: #{tpu_custom_call.1} parent=1 // pred_check
      _
    $region63: #{tpu_custom_call.1} parent=1 // pred_check_branch
      %105 = sbr.rel (0) target = $region65
    $region64: #{tpu_custom_call.1} parent=1 // pred_region
      %106 = dma.done [#allocation3], 2560
    $region65: #{tpu_custom_call.1} parent=1 // pred_fallthru
      _
    // Predicated region
    $region66: #{tpu_custom_call.1} parent=1 // pred_check
      _
    $region67: #{tpu_custom_call.1} parent=1 // pred_check_branch
      %108 = sbr.rel (0) target = $region69
    $region68: #{tpu_custom_call.1} parent=1 // pred_region
      %109 = dma.done [#allocation6], 6144
    $region69: #{tpu_custom_call.1} parent=1 // pred_fallthru
      _
    // Predicated region
    $region70: #{tpu_custom_call.1} parent=1 // pred_check
      _
    $region71: #{tpu_custom_call.1} parent=1 // pred_check_branch
      %111 = sbr.rel (0) target = $region73
    $region72: #{tpu_custom_call.1} parent=1 // pred_region
      %112 = dma.done [#allocation6], 24576
    $region73: #{tpu_custom_call.1} parent=1 // pred_fallthru
      _
    // Predicated region
    $region74: #{tpu_custom_call.1} parent=1 // pred_check
      _
    $region75: #{tpu_custom_call.1} parent=1 // pred_check_branch
      %114 = sbr.rel (0) target = $region77
    $region76: #{tpu_custom_call.1} parent=1 // pred_region
      %115 = dma.done [#allocation9], 8192
    $region77: #{tpu_custom_call.1} parent=1 // pred_fallthru
      _
    // Predicated region
    $region78: #{tpu_custom_call.1} parent=1 // pred_check
      _
    $region79: #{tpu_custom_call.1} parent=1 // pred_check_branch
      %117 = sbr.rel (0) target = $region81
    $region80: #{tpu_custom_call.1} parent=1 // pred_region
      %118 = dma.done [#allocation9], 2048
    $region81: #{tpu_custom_call.1} parent=1 // pred_fallthru
      _
    %v120 = vld [vmem:[%s0] sm:$0xf]
    %v121 = vld [vmem:[%s0 + $0x4] sm:$0xf]
    %v122 = vld [vmem:[%s0 + $0x8] sm:$0xf]
    %v123 = vld [vmem:[%s0 + $0xc] sm:$0xf]
    %v124 = vld [vmem:[%s0 + $0x10] sm:$0xf]
    %v125 = vld [vmem:[%s0 + $0x14] sm:$0xf]
    %v126 = vld [vmem:[%s0 + $0x18] sm:$0xf]
    %v127 = vld [vmem:[%s0 + $0x1c] sm:$0xf]
    %v128 = vld [vmem:[%s0 + $0x20] sm:$0xf]
    %v129 = vld [vmem:[%s0 + $0x24] sm:$0xf]
    %v130 = vld [vmem:[%s0 + $0x28] sm:$0xf]
    %v131 = vld [vmem:[%s0 + $0x2c] sm:$0xf]
    %v132 = vld [vmem:[%s0 + $0x30] sm:$0xf]
    %v133 = vld [vmem:[%s0 + $0x34] sm:$0xf]
    %v134 = vld [vmem:[%s0 + $0x38] sm:$0xf]
    %v135 = vld [vmem:[%s0 + $0x3c] sm:$0xf]
    %v136 = vld [vmem:[%s1] sm:$0xf]
    %v137 = vld [vmem:[%s1 + $0x4] sm:$0x7]
    %v138 = vld [vmem:[%s2] sm:$0x1]
    %v140 = vlaneseq
    %v141 = vshrl.u32 %v140, 7
    %v142 = vsub.s32 0, %v141
    %v143 = vrot.slane %v138, %v142
    %v161 = vunpack.c.l.b16 %v120
    %v162 = vunpack.c.l.b16 %v121
    %v163 = vunpack.c.l.b16 %v122
    %v164 = vunpack.c.l.b16 %v123
    %v165 = vunpack.c.l.b16 %v124
    %v166 = vunpack.c.l.b16 %v125
    %v167 = vunpack.c.l.b16 %v126
    %v168 = vunpack.c.l.b16 %v127
    %v169 = vunpack.c.l.b16 %v128
    %v170 = vunpack.c.l.b16 %v129
    %v171 = vunpack.c.l.b16 %v130
    %v172 = vunpack.c.l.b16 %v131
    %v173 = vunpack.c.l.b16 %v132
    %v174 = vunpack.c.l.b16 %v133
    %v175 = vunpack.c.l.b16 %v134
    %v176 = vunpack.c.l.b16 %v135
    %v177 = vpack.c.b16 %v162, %v161
    %v178 = vpack.c.b16 %v164, %v163
    %v179 = vpack.c.b16 %v166, %v165
    %v180 = vpack.c.b16 %v168, %v167
    %v181 = vpack.c.b16 %v170, %v169
    %v182 = vpack.c.b16 %v172, %v171
    %v183 = vpack.c.b16 %v174, %v173
    %v184 = vpack.c.b16 %v176, %v175
    %v187 = vunpack.c.l.b16 %v136
    %v188 = vunpack.c.l.b16 %v137
    %v189 = vpack.c.b16 %v188, %v187
    %vm190 = vcmask 113664
    %v192 = vsel %vm190, %v177, 0
    %v195 = vsel %vm190, %v178, 0
    %v198 = vsel %vm190, %v179, 0
    %v201 = vsel %vm190, %v180, 0
    %v204 = vsel %vm190, %v181, 0
    %v207 = vsel %vm190, %v182, 0
    %v210 = vsel %vm190, %v183, 0
    %v213 = vsel %vm190, %v184, 0
    %vm215 = vcmask 1046528
    %v217 = vsel %vm215, %v189, 0
    %219 = vmatprep.subr.bf16.mxu0 0
    %220 = vmatpush1.bf16.msra.mxu0 %v217
    %221 = vmatprep.subr.bf16.mxu0 0
    %222 = vmatpush1.bf16.msra.mxu0 0
    %223 = vmatprep.subr.bf16.mxu0 0
    %224 = vmatpush1.bf16.msra.mxu0 0
    %225 = vmatprep.subr.bf16.mxu0 0
    %226 = vmatpush1.bf16.msra.mxu0 0
    %227 = vmatprep.subr.bf16.mxu0 0
    %228 = vmatpush1.bf16.msra.mxu0 0
    %229 = vmatprep.subr.bf16.mxu0 0
    %230 = vmatpush1.bf16.msra.mxu0 0
    %231 = vmatprep.subr.bf16.mxu0 0
    %232 = vmatpush1.bf16.msra.mxu0 0
    %233 = vmatprep.subr.bf16.mxu0 0
    %234 = vmatpush1.bf16.msra.mxu0 0
    %235 = vmatprep.subr.bf16.mxu0 0
    %236 = vmatpush1.bf16.msra.mxu0 0
    %237 = vmatprep.subr.bf16.mxu0 0
    %238 = vmatpush1.bf16.msra.mxu0 0
    %239 = vmatprep.subr.bf16.mxu0 0
    %240 = vmatpush1.bf16.msra.mxu0 0
    %241 = vmatprep.subr.bf16.mxu0 0
    %242 = vmatpush1.bf16.msra.mxu0 0
    %243 = vmatprep.subr.bf16.mxu0 0
    %244 = vmatpush1.bf16.msra.mxu0 0
    %245 = vmatprep.subr.bf16.mxu0 0
    %246 = vmatpush1.bf16.msra.mxu0 0
    %247 = vmatprep.subr.bf16.mxu0 0
    %248 = vmatpush1.bf16.msra.mxu0 0
    %249 = vmatprep.subr.bf16.mxu0 0
    %250 = vmatpush1.bf16.msra.mxu0 0
    %251 = vmatprep.mubr.bf16.mxu0 0
    %252 = vmatmul.mubr.bf16.gmra.mrb[0].mxu0 %v192
    %v253 = vpop.f32.mrb[0].mxu0
    %v254 = vadd.f32 %v143, %v253
    %v255 = vpop.f32.mrb[0].mxu0
    %v256 = vpop.f32.mrb[0].mxu0
    %v257 = vadd.f32 %v143, %v256
    %v258 = vpop.f32.mrb[0].mxu0
    %259 = vmatprep.mubr.bf16.mxu0 0
    %260 = vmatmul.mubr.bf16.gmra.mrb[0].mxu0 %v195
    %v261 = vpop.f32.mrb[0].mxu0
    %v262 = vadd.f32 %v143, %v261
    %v263 = vpop.f32.mrb[0].mxu0
    %v264 = vpop.f32.mrb[0].mxu0
    %v265 = vadd.f32 %v143, %v264
    %v266 = vpop.f32.mrb[0].mxu0
    %267 = vmatprep.mubr.bf16.mxu0 0
    %268 = vmatmul.mubr.bf16.gmra.mrb[0].mxu0 %v198
    %v269 = vpop.f32.mrb[0].mxu0
    %v270 = vadd.f32 %v143, %v269
    %v271 = vpop.f32.mrb[0].mxu0
    %v272 = vpop.f32.mrb[0].mxu0
    %v273 = vadd.f32 %v143, %v272
    %v274 = vpop.f32.mrb[0].mxu0
    %275 = vmatprep.mubr.bf16.mxu0 0
    %276 = vmatmul.mubr.bf16.gmra.mrb[0].mxu0 %v201
    %v277 = vpop.f32.mrb[0].mxu0
    %v278 = vadd.f32 %v143, %v277
    %v279 = vpop.f32.mrb[0].mxu0
    %v280 = vpop.f32.mrb[0].mxu0
    %v281 = vadd.f32 %v143, %v280
    %v282 = vpop.f32.mrb[0].mxu0
    %283 = vmatprep.mubr.bf16.mxu0 0
    %284 = vmatmul.mubr.bf16.gmra.mrb[0].mxu0 %v204
    %v285 = vpop.f32.mrb[0].mxu0
    %v286 = vadd.f32 %v143, %v285
    %v287 = vpop.f32.mrb[0].mxu0
    %v288 = vpop.f32.mrb[0].mxu0
    %v289 = vadd.f32 %v143, %v288
    %v290 = vpop.f32.mrb[0].mxu0
    %291 = vmatprep.mubr.bf16.mxu0 0
    %292 = vmatmul.mubr.bf16.gmra.mrb[0].mxu0 %v207
    %v293 = vpop.f32.mrb[0].mxu0
    %v294 = vadd.f32 %v143, %v293
    %v295 = vpop.f32.mrb[0].mxu0
    %v296 = vpop.f32.mrb[0].mxu0
    %v297 = vadd.f32 %v143, %v296
    %v298 = vpop.f32.mrb[0].mxu0
    %299 = vmatprep.mubr.bf16.mxu0 0
    %300 = vmatmul.mubr.bf16.gmra.mrb[0].mxu0 %v210
    %v301 = vpop.f32.mrb[0].mxu0
    %v302 = vadd.f32 %v143, %v301
    %v303 = vpop.f32.mrb[0].mxu0
    %v304 = vpop.f32.mrb[0].mxu0
    %v305 = vadd.f32 %v143, %v304
    %v306 = vpop.f32.mrb[0].mxu0
    %307 = vmatprep.mubr.bf16.mxu0 0
    %308 = vmatmul.mubr.bf16.gmra.mrb[0].mxu0 %v213
    %v309 = vpop.f32.mrb[0].mxu0
    %v310 = vadd.f32 %v143, %v309
    %v311 = vpop.f32.mrb[0].mxu0
    %v312 = vpop.f32.mrb[0].mxu0
    %v313 = vadd.f32 %v143, %v312
    %v314 = vpop.f32.mrb[0].mxu0
    %315 = vdwg.mxu0
    %v316 = vmax.f32 %v254, 0.0
    %v317 = vmax.f32 %v257, 0.0
    %v318 = vmax.f32 %v262, 0.0
    %v319 = vmax.f32 %v265, 0.0
    %v320 = vmax.f32 %v270, 0.0
    %v321 = vmax.f32 %v273, 0.0
    %v322 = vmax.f32 %v278, 0.0
    %v323 = vmax.f32 %v281, 0.0
    %v324 = vmax.f32 %v286, 0.0
    %v325 = vmax.f32 %v289, 0.0
    %v326 = vmax.f32 %v294, 0.0
    %v327 = vmax.f32 %v297, 0.0
    %v328 = vmax.f32 %v302, 0.0
    %v329 = vmax.f32 %v305, 0.0
    %v330 = vmax.f32 %v310, 0.0
    %v331 = vmax.f32 %v313, 0.0
    %v348 = vcombine.high %v316, %v316
    %v350 = vunpack.c.l.s4 1983009808
    %v351 = vunpack.c.0.s8 %v350
    %v352 = vlaneseq
    %v353 = vshrl.u32 %v352, 7
    %v354 = vsub.s32 %v351, %v353
    %v355 = vrot.slane %v316, %v354
    %v357 = vunpack.c.l.s4 1983009808
    %v358 = vunpack.c.0.s8 %v357
    %v359 = vlaneseq
    %v360 = vshrl.u32 %v359, 7
    %v361 = vsub.s32 %v358, %v360
    %v362 = vrot.slane %v348, %v361
    %v363 = vcombine.high %v355, %v355
    %v364 = vcombine.high %v362, %v362
    %v365 = vcombine.high %v317, %v317
    %v367 = vunpack.c.l.s4 1983009808
    %v368 = vunpack.c.0.s8 %v367
    %v369 = vlaneseq
    %v370 = vshrl.u32 %v369, 7
    %v371 = vsub.s32 %v368, %v370
    %v372 = vrot.slane %v317, %v371
    %v374 = vunpack.c.l.s4 1983009808
    %v375 = vunpack.c.0.s8 %v374
    %v376 = vlaneseq
    %v377 = vshrl.u32 %v376, 7
    %v378 = vsub.s32 %v375, %v377
    %v379 = vrot.slane %v365, %v378
    %v380 = vcombine.high %v372, %v372
    %v381 = vcombine.high %v379, %v379
    %v382 = vcombine.high %v318, %v318
    %v384 = vunpack.c.l.s4 1983009808
    %v385 = vunpack.c.0.s8 %v384
    %v386 = vlaneseq
    %v387 = vshrl.u32 %v386, 7
    %v388 = vsub.s32 %v385, %v387
    %v389 = vrot.slane %v318, %v388
    %v391 = vunpack.c.l.s4 1983009808
    %v392 = vunpack.c.0.s8 %v391
    %v393 = vlaneseq
    %v394 = vshrl.u32 %v393, 7
    %v395 = vsub.s32 %v392, %v394
    %v396 = vrot.slane %v382, %v395
    %v397 = vcombine.high %v389, %v389
    %v398 = vcombine.high %v396, %v396
    %v399 = vcombine.high %v319, %v319
    %v401 = vunpack.c.l.s4 1983009808
    %v402 = vunpack.c.0.s8 %v401
    %v403 = vlaneseq
    %v404 = vshrl.u32 %v403, 7
    %v405 = vsub.s32 %v402, %v404
    %v406 = vrot.slane %v319, %v405
    %v408 = vunpack.c.l.s4 1983009808
    %v409 = vunpack.c.0.s8 %v408
    %v410 = vlaneseq
    %v411 = vshrl.u32 %v410, 7
    %v412 = vsub.s32 %v409, %v411
    %v413 = vrot.slane %v399, %v412
    %v414 = vcombine.high %v406, %v406
    %v415 = vcombine.high %v413, %v413
    %v416 = vcombine.high %v320, %v320
    %v418 = vunpack.c.l.s4 1983009808
    %v419 = vunpack.c.0.s8 %v418
    %v420 = vlaneseq
    %v421 = vshrl.u32 %v420, 7
    %v422 = vsub.s32 %v419, %v421
    %v423 = vrot.slane %v320, %v422
    %v425 = vunpack.c.l.s4 1983009808
    %v426 = vunpack.c.0.s8 %v425
    %v427 = vlaneseq
    %v428 = vshrl.u32 %v427, 7
    %v429 = vsub.s32 %v426, %v428
    %v430 = vrot.slane %v416, %v429
    %v431 = vcombine.high %v423, %v423
    %v432 = vcombine.high %v430, %v430
    %v433 = vcombine.high %v321, %v321
    %v435 = vunpack.c.l.s4 1983009808
    %v436 = vunpack.c.0.s8 %v435
    %v437 = vlaneseq
    %v438 = vshrl.u32 %v437, 7
    %v439 = vsub.s32 %v436, %v438
    %v440 = vrot.slane %v321, %v439
    %v442 = vunpack.c.l.s4 1983009808
    %v443 = vunpack.c.0.s8 %v442
    %v444 = vlaneseq
    %v445 = vshrl.u32 %v444, 7
    %v446 = vsub.s32 %v443, %v445
    %v447 = vrot.slane %v433, %v446
    %v448 = vcombine.high %v440, %v440
    %v449 = vcombine.high %v447, %v447
    %v450 = vcombine.high %v322, %v322
    %v452 = vunpack.c.l.s4 1983009808
    %v453 = vunpack.c.0.s8 %v452
    %v454 = vlaneseq
    %v455 = vshrl.u32 %v454, 7
    %v456 = vsub.s32 %v453, %v455
    %v457 = vrot.slane %v322, %v456
    %v459 = vunpack.c.l.s4 1983009808
    %v460 = vunpack.c.0.s8 %v459
    %v461 = vlaneseq
    %v462 = vshrl.u32 %v461, 7
    %v463 = vsub.s32 %v460, %v462
    %v464 = vrot.slane %v450, %v463
    %v465 = vcombine.high %v457, %v457
    %v466 = vcombine.high %v464, %v464
    %v467 = vcombine.high %v323, %v323
    %v469 = vunpack.c.l.s4 1983009808
    %v470 = vunpack.c.0.s8 %v469
    %v471 = vlaneseq
    %v472 = vshrl.u32 %v471, 7
    %v473 = vsub.s32 %v470, %v472
    %v474 = vrot.slane %v323, %v473
    %v476 = vunpack.c.l.s4 1983009808
    %v477 = vunpack.c.0.s8 %v476
    %v478 = vlaneseq
    %v479 = vshrl.u32 %v478, 7
    %v480 = vsub.s32 %v477, %v479
    %v481 = vrot.slane %v467, %v480
    %v482 = vcombine.high %v474, %v474
    %v483 = vcombine.high %v481, %v481
    %v484 = vcombine.high %v324, %v324
    %v486 = vunpack.c.l.s4 1983009808
    %v487 = vunpack.c.0.s8 %v486
    %v488 = vlaneseq
    %v489 = vshrl.u32 %v488, 7
    %v490 = vsub.s32 %v487, %v489
    %v491 = vrot.slane %v324, %v490
    %v493 = vunpack.c.l.s4 1983009808
    %v494 = vunpack.c.0.s8 %v493
    %v495 = vlaneseq
    %v496 = vshrl.u32 %v495, 7
    %v497 = vsub.s32 %v494, %v496
    %v498 = vrot.slane %v484, %v497
    %v499 = vcombine.high %v491, %v491
    %v500 = vcombine.high %v498, %v498
    %v501 = vcombine.high %v325, %v325
    %v503 = vunpack.c.l.s4 1983009808
    %v504 = vunpack.c.0.s8 %v503
    %v505 = vlaneseq
    %v506 = vshrl.u32 %v505, 7
    %v507 = vsub.s32 %v504, %v506
    %v508 = vrot.slane %v325, %v507
    %v510 = vunpack.c.l.s4 1983009808
    %v511 = vunpack.c.0.s8 %v510
    %v512 = vlaneseq
    %v513 = vshrl.u32 %v512, 7
    %v514 = vsub.s32 %v511, %v513
    %v515 = vrot.slane %v501, %v514
    %v516 = vcombine.high %v508, %v508
    %v517 = vcombine.high %v515, %v515
    %v518 = vcombine.high %v326, %v326
    %v520 = vunpack.c.l.s4 1983009808
    %v521 = vunpack.c.0.s8 %v520
    %v522 = vlaneseq
    %v523 = vshrl.u32 %v522, 7
    %v524 = vsub.s32 %v521, %v523
    %v525 = vrot.slane %v326, %v524
    %v527 = vunpack.c.l.s4 1983009808
    %v528 = vunpack.c.0.s8 %v527
    %v529 = vlaneseq
    %v530 = vshrl.u32 %v529, 7
    %v531 = vsub.s32 %v528, %v530
    %v532 = vrot.slane %v518, %v531
    %v533 = vcombine.high %v525, %v525
    %v534 = vcombine.high %v532, %v532
    %v535 = vcombine.high %v327, %v327
    %v537 = vunpack.c.l.s4 1983009808
    %v538 = vunpack.c.0.s8 %v537
    %v539 = vlaneseq
    %v540 = vshrl.u32 %v539, 7
    %v541 = vsub.s32 %v538, %v540
    %v542 = vrot.slane %v327, %v541
    %v544 = vunpack.c.l.s4 1983009808
    %v545 = vunpack.c.0.s8 %v544
    %v546 = vlaneseq
    %v547 = vshrl.u32 %v546, 7
    %v548 = vsub.s32 %v545, %v547
    %v549 = vrot.slane %v535, %v548
    %v550 = vcombine.high %v542, %v542
    %v551 = vcombine.high %v549, %v549
    %v552 = vcombine.high %v328, %v328
    %v554 = vunpack.c.l.s4 1983009808
    %v555 = vunpack.c.0.s8 %v554
    %v556 = vlaneseq
    %v557 = vshrl.u32 %v556, 7
    %v558 = vsub.s32 %v555, %v557
    %v559 = vrot.slane %v328, %v558
    %v561 = vunpack.c.l.s4 1983009808
    %v562 = vunpack.c.0.s8 %v561
    %v563 = vlaneseq
    %v564 = vshrl.u32 %v563, 7
    %v565 = vsub.s32 %v562, %v564
    %v566 = vrot.slane %v552, %v565
    %v567 = vcombine.high %v559, %v559
    %v568 = vcombine.high %v566, %v566
    %v569 = vcombine.high %v329, %v329
    %v571 = vunpack.c.l.s4 1983009808
    %v572 = vunpack.c.0.s8 %v571
    %v573 = vlaneseq
    %v574 = vshrl.u32 %v573, 7
    %v575 = vsub.s32 %v572, %v574
    %v576 = vrot.slane %v329, %v575
    %v578 = vunpack.c.l.s4 1983009808
    %v579 = vunpack.c.0.s8 %v578
    %v580 = vlaneseq
    %v581 = vshrl.u32 %v580, 7
    %v582 = vsub.s32 %v579, %v581
    %v583 = vrot.slane %v569, %v582
    %v584 = vcombine.high %v576, %v576
    %v585 = vcombine.high %v583, %v583
    %v586 = vcombine.high %v330, %v330
    %v588 = vunpack.c.l.s4 1983009808
    %v589 = vunpack.c.0.s8 %v588
    %v590 = vlaneseq
    %v591 = vshrl.u32 %v590, 7
    %v592 = vsub.s32 %v589, %v591
    %v593 = vrot.slane %v330, %v592
    %v595 = vunpack.c.l.s4 1983009808
    %v596 = vunpack.c.0.s8 %v595
    %v597 = vlaneseq
    %v598 = vshrl.u32 %v597, 7
    %v599 = vsub.s32 %v596, %v598
    %v600 = vrot.slane %v586, %v599
    %v601 = vcombine.high %v593, %v593
    %v602 = vcombine.high %v600, %v600
    %v603 = vcombine.high %v331, %v331
    %v605 = vunpack.c.l.s4 1983009808
    %v606 = vunpack.c.0.s8 %v605
    %v607 = vlaneseq
    %v608 = vshrl.u32 %v607, 7
    %v609 = vsub.s32 %v606, %v608
    %v610 = vrot.slane %v331, %v609
    %v612 = vunpack.c.l.s4 1983009808
    %v613 = vunpack.c.0.s8 %v612
    %v614 = vlaneseq
    %v615 = vshrl.u32 %v614, 7
    %v616 = vsub.s32 %v613, %v615
    %v617 = vrot.slane %v603, %v616
    %v618 = vcombine.high %v610, %v610
    %v619 = vcombine.high %v617, %v617
    %vm684 = vcmask 517120
    %v685 = vsel %vm684, %v355, -inf
    %v686 = vrot.slane %v685, 4
    %v687 = vmax.f32 %v685, %v686
    %v688 = vrot.slane %v687, 2
    %v689 = vmax.f32 %v687, %v688
    %v690 = vrot.slane %v689, 1
    %v691 = vmax.f32 %v689, %v690
    %v692 = vsel %vm684, %v363, -inf
    %v693 = vrot.slane %v692, 4
    %v694 = vmax.f32 %v692, %v693
    %v695 = vrot.slane %v694, 2
    %v696 = vmax.f32 %v694, %v695
    %v697 = vrot.slane %v696, 1
    %v698 = vmax.f32 %v696, %v697
    %v699 = vsel %vm684, %v362, -inf
    %v700 = vrot.slane %v699, 4
    %v701 = vmax.f32 %v699, %v700
    %v702 = vrot.slane %v701, 2
    %v703 = vmax.f32 %v701, %v702
    %v704 = vrot.slane %v703, 1
    %v705 = vmax.f32 %v703, %v704
    %v706 = vsel %vm684, %v364, -inf
    %v707 = vrot.slane %v706, 4
    %v708 = vmax.f32 %v706, %v707
    %v709 = vrot.slane %v708, 2
    %v710 = vmax.f32 %v708, %v709
    %v711 = vrot.slane %v710, 1
    %v712 = vmax.f32 %v710, %v711
    %v713 = vsel %vm684, %v372, -inf
    %v714 = vrot.slane %v713, 4
    %v715 = vmax.f32 %v713, %v714
    %v716 = vrot.slane %v715, 2
    %v717 = vmax.f32 %v715, %v716
    %v718 = vrot.slane %v717, 1
    %v719 = vmax.f32 %v717, %v718
    %v720 = vsel %vm684, %v380, -inf
    %v721 = vrot.slane %v720, 4
    %v722 = vmax.f32 %v720, %v721
    %v723 = vrot.slane %v722, 2
    %v724 = vmax.f32 %v722, %v723
    %v725 = vrot.slane %v724, 1
    %v726 = vmax.f32 %v724, %v725
    %v727 = vsel %vm684, %v379, -inf
    %v728 = vrot.slane %v727, 4
    %v729 = vmax.f32 %v727, %v728
    %v730 = vrot.slane %v729, 2
    %v731 = vmax.f32 %v729, %v730
    %v732 = vrot.slane %v731, 1
    %v733 = vmax.f32 %v731, %v732
    %v734 = vsel %vm684, %v381, -inf
    %v735 = vrot.slane %v734, 4
    %v736 = vmax.f32 %v734, %v735
    %v737 = vrot.slane %v736, 2
    %v738 = vmax.f32 %v736, %v737
    %v739 = vrot.slane %v738, 1
    %v740 = vmax.f32 %v738, %v739
    %v741 = vsel %vm684, %v389, -inf
    %v742 = vrot.slane %v741, 4
    %v743 = vmax.f32 %v741, %v742
    %v744 = vrot.slane %v743, 2
    %v745 = vmax.f32 %v743, %v744
    %v746 = vrot.slane %v745, 1
    %v747 = vmax.f32 %v745, %v746
    %v748 = vsel %vm684, %v397, -inf
    %v749 = vrot.slane %v748, 4
    %v750 = vmax.f32 %v748, %v749
    %v751 = vrot.slane %v750, 2
    %v752 = vmax.f32 %v750, %v751
    %v753 = vrot.slane %v752, 1
    %v754 = vmax.f32 %v752, %v753
    %v755 = vsel %vm684, %v396, -inf
    %v756 = vrot.slane %v755, 4
    %v757 = vmax.f32 %v755, %v756
    %v758 = vrot.slane %v757, 2
    %v759 = vmax.f32 %v757, %v758
    %v760 = vrot.slane %v759, 1
    %v761 = vmax.f32 %v759, %v760
    %v762 = vsel %vm684, %v398, -inf
    %v763 = vrot.slane %v762, 4
    %v764 = vmax.f32 %v762, %v763
    %v765 = vrot.slane %v764, 2
    %v766 = vmax.f32 %v764, %v765
    %v767 = vrot.slane %v766, 1
    %v768 = vmax.f32 %v766, %v767
    %v769 = vsel %vm684, %v406, -inf
    %v770 = vrot.slane %v769, 4
    %v771 = vmax.f32 %v769, %v770
    %v772 = vrot.slane %v771, 2
    %v773 = vmax.f32 %v771, %v772
    %v774 = vrot.slane %v773, 1
    %v775 = vmax.f32 %v773, %v774
    %v776 = vsel %vm684, %v414, -inf
    %v777 = vrot.slane %v776, 4
    %v778 = vmax.f32 %v776, %v777
    %v779 = vrot.slane %v778, 2
    %v780 = vmax.f32 %v778, %v779
    %v781 = vrot.slane %v780, 1
    %v782 = vmax.f32 %v780, %v781
    %v783 = vsel %vm684, %v413, -inf
    %v784 = vrot.slane %v783, 4
    %v785 = vmax.f32 %v783, %v784
    %v786 = vrot.slane %v785, 2
    %v787 = vmax.f32 %v785, %v786
    %v788 = vrot.slane %v787, 1
    %v789 = vmax.f32 %v787, %v788
    %v790 = vsel %vm684, %v415, -inf
    %v791 = vrot.slane %v790, 4
    %v792 = vmax.f32 %v790, %v791
    %v793 = vrot.slane %v792, 2
    %v794 = vmax.f32 %v792, %v793
    %v795 = vrot.slane %v794, 1
    %v796 = vmax.f32 %v794, %v795
    %v797 = vsel %vm684, %v423, -inf
    %v798 = vrot.slane %v797, 4
    %v799 = vmax.f32 %v797, %v798
    %v800 = vrot.slane %v799, 2
    %v801 = vmax.f32 %v799, %v800
    %v802 = vrot.slane %v801, 1
    %v803 = vmax.f32 %v801, %v802
    %v804 = vsel %vm684, %v431, -inf
    %v805 = vrot.slane %v804, 4
    %v806 = vmax.f32 %v804, %v805
    %v807 = vrot.slane %v806, 2
    %v808 = vmax.f32 %v806, %v807
    %v809 = vrot.slane %v808, 1
    %v810 = vmax.f32 %v808, %v809
    %v811 = vsel %vm684, %v430, -inf
    %v812 = vrot.slane %v811, 4
    %v813 = vmax.f32 %v811, %v812
    %v814 = vrot.slane %v813, 2
    %v815 = vmax.f32 %v813, %v814
    %v816 = vrot.slane %v815, 1
    %v817 = vmax.f32 %v815, %v816
    %v818 = vsel %vm684, %v432, -inf
    %v819 = vrot.slane %v818, 4
    %v820 = vmax.f32 %v818, %v819
    %v821 = vrot.slane %v820, 2
    %v822 = vmax.f32 %v820, %v821
    %v823 = vrot.slane %v822, 1
    %v824 = vmax.f32 %v822, %v823
    %v825 = vsel %vm684, %v440, -inf
    %v826 = vrot.slane %v825, 4
    %v827 = vmax.f32 %v825, %v826
    %v828 = vrot.slane %v827, 2
    %v829 = vmax.f32 %v827, %v828
    %v830 = vrot.slane %v829, 1
    %v831 = vmax.f32 %v829, %v830
    %v832 = vsel %vm684, %v448, -inf
    %v833 = vrot.slane %v832, 4
    %v834 = vmax.f32 %v832, %v833
    %v835 = vrot.slane %v834, 2
    %v836 = vmax.f32 %v834, %v835
    %v837 = vrot.slane %v836, 1
    %v838 = vmax.f32 %v836, %v837
    %v839 = vsel %vm684, %v447, -inf
    %v840 = vrot.slane %v839, 4
    %v841 = vmax.f32 %v839, %v840
    %v842 = vrot.slane %v841, 2
    %v843 = vmax.f32 %v841, %v842
    %v844 = vrot.slane %v843, 1
    %v845 = vmax.f32 %v843, %v844
    %v846 = vsel %vm684, %v449, -inf
    %v847 = vrot.slane %v846, 4
    %v848 = vmax.f32 %v846, %v847
    %v849 = vrot.slane %v848, 2
    %v850 = vmax.f32 %v848, %v849
    %v851 = vrot.slane %v850, 1
    %v852 = vmax.f32 %v850, %v851
    %v853 = vsel %vm684, %v457, -inf
    %v854 = vrot.slane %v853, 4
    %v855 = vmax.f32 %v853, %v854
    %v856 = vrot.slane %v855, 2
    %v857 = vmax.f32 %v855, %v856
    %v858 = vrot.slane %v857, 1
    %v859 = vmax.f32 %v857, %v858
    %v860 = vsel %vm684, %v465, -inf
    %v861 = vrot.slane %v860, 4
    %v862 = vmax.f32 %v860, %v861
    %v863 = vrot.slane %v862, 2
    %v864 = vmax.f32 %v862, %v863
    %v865 = vrot.slane %v864, 1
    %v866 = vmax.f32 %v864, %v865
    %v867 = vsel %vm684, %v464, -inf
    %v868 = vrot.slane %v867, 4
    %v869 = vmax.f32 %v867, %v868
    %v870 = vrot.slane %v869, 2
    %v871 = vmax.f32 %v869, %v870
    %v872 = vrot.slane %v871, 1
    %v873 = vmax.f32 %v871, %v872
    %v874 = vsel %vm684, %v466, -inf
    %v875 = vrot.slane %v874, 4
    %v876 = vmax.f32 %v874, %v875
    %v877 = vrot.slane %v876, 2
    %v878 = vmax.f32 %v876, %v877
    %v879 = vrot.slane %v878, 1
    %v880 = vmax.f32 %v878, %v879
    %v881 = vsel %vm684, %v474, -inf
    %v882 = vrot.slane %v881, 4
    %v883 = vmax.f32 %v881, %v882
    %v884 = vrot.slane %v883, 2
    %v885 = vmax.f32 %v883, %v884
    %v886 = vrot.slane %v885, 1
    %v887 = vmax.f32 %v885, %v886
    %v888 = vsel %vm684, %v482, -inf
    %v889 = vrot.slane %v888, 4
    %v890 = vmax.f32 %v888, %v889
    %v891 = vrot.slane %v890, 2
    %v892 = vmax.f32 %v890, %v891
    %v893 = vrot.slane %v892, 1
    %v894 = vmax.f32 %v892, %v893
    %v895 = vsel %vm684, %v481, -inf
    %v896 = vrot.slane %v895, 4
    %v897 = vmax.f32 %v895, %v896
    %v898 = vrot.slane %v897, 2
    %v899 = vmax.f32 %v897, %v898
    %v900 = vrot.slane %v899, 1
    %v901 = vmax.f32 %v899, %v900
    %v902 = vsel %vm684, %v483, -inf
    %v903 = vrot.slane %v902, 4
    %v904 = vmax.f32 %v902, %v903
    %v905 = vrot.slane %v904, 2
    %v906 = vmax.f32 %v904, %v905
    %v907 = vrot.slane %v906, 1
    %v908 = vmax.f32 %v906, %v907
    %v909 = vsel %vm684, %v491, -inf
    %v910 = vrot.slane %v909, 4
    %v911 = vmax.f32 %v909, %v910
    %v912 = vrot.slane %v911, 2
    %v913 = vmax.f32 %v911, %v912
    %v914 = vrot.slane %v913, 1
    %v915 = vmax.f32 %v913, %v914
    %v916 = vsel %vm684, %v499, -inf
    %v917 = vrot.slane %v916, 4
    %v918 = vmax.f32 %v916, %v917
    %v919 = vrot.slane %v918, 2
    %v920 = vmax.f32 %v918, %v919
    %v921 = vrot.slane %v920, 1
    %v922 = vmax.f32 %v920, %v921
    %v923 = vsel %vm684, %v498, -inf
    %v924 = vrot.slane %v923, 4
    %v925 = vmax.f32 %v923, %v924
    %v926 = vrot.slane %v925, 2
    %v927 = vmax.f32 %v925, %v926
    %v928 = vrot.slane %v927, 1
    %v929 = vmax.f32 %v927, %v928
    %v930 = vsel %vm684, %v500, -inf
    %v931 = vrot.slane %v930, 4
    %v932 = vmax.f32 %v930, %v931
    %v933 = vrot.slane %v932, 2
    %v934 = vmax.f32 %v932, %v933
    %v935 = vrot.slane %v934, 1
    %v936 = vmax.f32 %v934, %v935
    %v937 = vsel %vm684, %v508, -inf
    %v938 = vrot.slane %v937, 4
    %v939 = vmax.f32 %v937, %v938
    %v940 = vrot.slane %v939, 2
    %v941 = vmax.f32 %v939, %v940
    %v942 = vrot.slane %v941, 1
    %v943 = vmax.f32 %v941, %v942
    %v944 = vsel %vm684, %v516, -inf
    %v945 = vrot.slane %v944, 4
    %v946 = vmax.f32 %v944, %v945
    %v947 = vrot.slane %v946, 2
    %v948 = vmax.f32 %v946, %v947
    %v949 = vrot.slane %v948, 1
    %v950 = vmax.f32 %v948, %v949
    %v951 = vsel %vm684, %v515, -inf
    %v952 = vrot.slane %v951, 4
    %v953 = vmax.f32 %v951, %v952
    %v954 = vrot.slane %v953, 2
    %v955 = vmax.f32 %v953, %v954
    %v956 = vrot.slane %v955, 1
    %v957 = vmax.f32 %v955, %v956
    %v958 = vsel %vm684, %v517, -inf
    %v959 = vrot.slane %v958, 4
    %v960 = vmax.f32 %v958, %v959
    %v961 = vrot.slane %v960, 2
    %v962 = vmax.f32 %v960, %v961
    %v963 = vrot.slane %v962, 1
    %v964 = vmax.f32 %v962, %v963
    %v965 = vsel %vm684, %v525, -inf
    %v966 = vrot.slane %v965, 4
    %v967 = vmax.f32 %v965, %v966
    %v968 = vrot.slane %v967, 2
    %v969 = vmax.f32 %v967, %v968
    %v970 = vrot.slane %v969, 1
    %v971 = vmax.f32 %v969, %v970
    %v972 = vsel %vm684, %v533, -inf
    %v973 = vrot.slane %v972, 4
    %v974 = vmax.f32 %v972, %v973
    %v975 = vrot.slane %v974, 2
    %v976 = vmax.f32 %v974, %v975
    %v977 = vrot.slane %v976, 1
    %v978 = vmax.f32 %v976, %v977
    %v979 = vsel %vm684, %v532, -inf
    %v980 = vrot.slane %v979, 4
    %v981 = vmax.f32 %v979, %v980
    %v982 = vrot.slane %v981, 2
    %v983 = vmax.f32 %v981, %v982
    %v984 = vrot.slane %v983, 1
    %v985 = vmax.f32 %v983, %v984
    %v986 = vsel %vm684, %v534, -inf
    %v987 = vrot.slane %v986, 4
    %v988 = vmax.f32 %v986, %v987
    %v989 = vrot.slane %v988, 2
    %v990 = vmax.f32 %v988, %v989
    %v991 = vrot.slane %v990, 1
    %v992 = vmax.f32 %v990, %v991
    %v993 = vsel %vm684, %v542, -inf
    %v994 = vrot.slane %v993, 4
    %v995 = vmax.f32 %v993, %v994
    %v996 = vrot.slane %v995, 2
    %v997 = vmax.f32 %v995, %v996
    %v998 = vrot.slane %v997, 1
    %v999 = vmax.f32 %v997, %v998
    %v1000 = vsel %vm684, %v550, -inf
    %v1001 = vrot.slane %v1000, 4
    %v1002 = vmax.f32 %v1000, %v1001
    %v1003 = vrot.slane %v1002, 2
    %v1004 = vmax.f32 %v1002, %v1003
    %v1005 = vrot.slane %v1004, 1
    %v1006 = vmax.f32 %v1004, %v1005
    %v1007 = vsel %vm684, %v549, -inf
    %v1008 = vrot.slane %v1007, 4
    %v1009 = vmax.f32 %v1007, %v1008
    %v1010 = vrot.slane %v1009, 2
    %v1011 = vmax.f32 %v1009, %v1010
    %v1012 = vrot.slane %v1011, 1
    %v1013 = vmax.f32 %v1011, %v1012
    %v1014 = vsel %vm684, %v551, -inf
    %v1015 = vrot.slane %v1014, 4
    %v1016 = vmax.f32 %v1014, %v1015
    %v1017 = vrot.slane %v1016, 2
    %v1018 = vmax.f32 %v1016, %v1017
    %v1019 = vrot.slane %v1018, 1
    %v1020 = vmax.f32 %v1018, %v1019
    %v1021 = vsel %vm684, %v559, -inf
    %v1022 = vrot.slane %v1021, 4
    %v1023 = vmax.f32 %v1021, %v1022
    %v1024 = vrot.slane %v1023, 2
    %v1025 = vmax.f32 %v1023, %v1024
    %v1026 = vrot.slane %v1025, 1
    %v1027 = vmax.f32 %v1025, %v1026
    %v1028 = vsel %vm684, %v567, -inf
    %v1029 = vrot.slane %v1028, 4
    %v1030 = vmax.f32 %v1028, %v1029
    %v1031 = vrot.slane %v1030, 2
    %v1032 = vmax.f32 %v1030, %v1031
    %v1033 = vrot.slane %v1032, 1
    %v1034 = vmax.f32 %v1032, %v1033
    %v1035 = vsel %vm684, %v566, -inf
    %v1036 = vrot.slane %v1035, 4
    %v1037 = vmax.f32 %v1035, %v1036
    %v1038 = vrot.slane %v1037, 2
    %v1039 = vmax.f32 %v1037, %v1038
    %v1040 = vrot.slane %v1039, 1
    %v1041 = vmax.f32 %v1039, %v1040
    %v1042 = vsel %vm684, %v568, -inf
    %v1043 = vrot.slane %v1042, 4
    %v1044 = vmax.f32 %v1042, %v1043
    %v1045 = vrot.slane %v1044, 2
    %v1046 = vmax.f32 %v1044, %v1045
    %v1047 = vrot.slane %v1046, 1
    %v1048 = vmax.f32 %v1046, %v1047
    %v1049 = vsel %vm684, %v576, -inf
    %v1050 = vrot.slane %v1049, 4
    %v1051 = vmax.f32 %v1049, %v1050
    %v1052 = vrot.slane %v1051, 2
    %v1053 = vmax.f32 %v1051, %v1052
    %v1054 = vrot.slane %v1053, 1
    %v1055 = vmax.f32 %v1053, %v1054
    %v1056 = vsel %vm684, %v584, -inf
    %v1057 = vrot.slane %v1056, 4
    %v1058 = vmax.f32 %v1056, %v1057
    %v1059 = vrot.slane %v1058, 2
    %v1060 = vmax.f32 %v1058, %v1059
    %v1061 = vrot.slane %v1060, 1
    %v1062 = vmax.f32 %v1060, %v1061
    %v1063 = vsel %vm684, %v583, -inf
    %v1064 = vrot.slane %v1063, 4
    %v1065 = vmax.f32 %v1063, %v1064
    %v1066 = vrot.slane %v1065, 2
    %v1067 = vmax.f32 %v1065, %v1066
    %v1068 = vrot.slane %v1067, 1
    %v1069 = vmax.f32 %v1067, %v1068
    %v1070 = vsel %vm684, %v585, -inf
    %v1071 = vrot.slane %v1070, 4
    %v1072 = vmax.f32 %v1070, %v1071
    %v1073 = vrot.slane %v1072, 2
    %v1074 = vmax.f32 %v1072, %v1073
    %v1075 = vrot.slane %v1074, 1
    %v1076 = vmax.f32 %v1074, %v1075
    %v1077 = vsel %vm684, %v593, -inf
    %v1078 = vrot.slane %v1077, 4
    %v1079 = vmax.f32 %v1077, %v1078
    %v1080 = vrot.slane %v1079, 2
    %v1081 = vmax.f32 %v1079, %v1080
    %v1082 = vrot.slane %v1081, 1
    %v1083 = vmax.f32 %v1081, %v1082
    %v1084 = vsel %vm684, %v601, -inf
    %v1085 = vrot.slane %v1084, 4
    %v1086 = vmax.f32 %v1084, %v1085
    %v1087 = vrot.slane %v1086, 2
    %v1088 = vmax.f32 %v1086, %v1087
    %v1089 = vrot.slane %v1088, 1
    %v1090 = vmax.f32 %v1088, %v1089
    %v1091 = vsel %vm684, %v600, -inf
    %v1092 = vrot.slane %v1091, 4
    %v1093 = vmax.f32 %v1091, %v1092
    %v1094 = vrot.slane %v1093, 2
    %v1095 = vmax.f32 %v1093, %v1094
    %v1096 = vrot.slane %v1095, 1
    %v1097 = vmax.f32 %v1095, %v1096
    %v1098 = vsel %vm684, %v602, -inf
    %v1099 = vrot.slane %v1098, 4
    %v1100 = vmax.f32 %v1098, %v1099
    %v1101 = vrot.slane %v1100, 2
    %v1102 = vmax.f32 %v1100, %v1101
    %v1103 = vrot.slane %v1102, 1
    %v1104 = vmax.f32 %v1102, %v1103
    %v1105 = vsel %vm684, %v610, -inf
    %v1106 = vrot.slane %v1105, 4
    %v1107 = vmax.f32 %v1105, %v1106
    %v1108 = vrot.slane %v1107, 2
    %v1109 = vmax.f32 %v1107, %v1108
    %v1110 = vrot.slane %v1109, 1
    %v1111 = vmax.f32 %v1109, %v1110
    %v1112 = vsel %vm684, %v618, -inf
    %v1113 = vrot.slane %v1112, 4
    %v1114 = vmax.f32 %v1112, %v1113
    %v1115 = vrot.slane %v1114, 2
    %v1116 = vmax.f32 %v1114, %v1115
    %v1117 = vrot.slane %v1116, 1
    %v1118 = vmax.f32 %v1116, %v1117
    %v1119 = vsel %vm684, %v617, -inf
    %v1120 = vrot.slane %v1119, 4
    %v1121 = vmax.f32 %v1119, %v1120
    %v1122 = vrot.slane %v1121, 2
    %v1123 = vmax.f32 %v1121, %v1122
    %v1124 = vrot.slane %v1123, 1
    %v1125 = vmax.f32 %v1123, %v1124
    %v1126 = vsel %vm684, %v619, -inf
    %v1127 = vrot.slane %v1126, 4
    %v1128 = vmax.f32 %v1126, %v1127
    %v1129 = vrot.slane %v1128, 2
    %v1130 = vmax.f32 %v1128, %v1129
    %v1131 = vrot.slane %v1130, 1
    %v1132 = vmax.f32 %v1130, %v1131
    %v1133 = vlaneseq
    %v1134 = vshrl.u32 %v1133, 7
    %v1135 = vadd.s32 %v1134, 8
    %v1136 = vadd.s32 %v1134, 16
    %v1137 = vadd.s32 %v1134, 24
    %vm1202 = vcmask 1041409
    %v1203 = vsel %vm1202, %v698, %v691
    %vm1204 = vcmask 1042434
    %v1205 = vsel %vm1204, %v705, %v1203
    %vm1206 = vcmask 1043459
    %v1207 = vsel %vm1206, %v712, %v1205
    %vm1208 = vcmask 1044484
    %v1209 = vsel %vm1208, %v719, %v1207
    %vm1210 = vcmask 1045509
    %v1211 = vsel %vm1210, %v726, %v1209
    %vm1212 = vcmask 1046534
    %v1213 = vsel %vm1212, %v733, %v1211
    %vm1214 = vcmask 1047559
    %v1215 = vsel %vm1214, %v740, %v1213
    %v1216 = vsel %vm1202, %v754, %v747
    %v1217 = vsel %vm1204, %v761, %v1216
    %v1218 = vsel %vm1206, %v768, %v1217
    %v1219 = vsel %vm1208, %v775, %v1218
    %v1220 = vsel %vm1210, %v782, %v1219
    %v1221 = vsel %vm1212, %v789, %v1220
    %v1222 = vsel %vm1214, %v796, %v1221
    %v1223 = vsel %vm1202, %v810, %v803
    %v1224 = vsel %vm1204, %v817, %v1223
    %v1225 = vsel %vm1206, %v824, %v1224
    %v1226 = vsel %vm1208, %v831, %v1225
    %v1227 = vsel %vm1210, %v838, %v1226
    %v1228 = vsel %vm1212, %v845, %v1227
    %v1229 = vsel %vm1214, %v852, %v1228
    %v1230 = vsel %vm1202, %v866, %v859
    %v1231 = vsel %vm1204, %v873, %v1230
    %v1232 = vsel %vm1206, %v880, %v1231
    %v1233 = vsel %vm1208, %v887, %v1232
    %v1234 = vsel %vm1210, %v894, %v1233
    %v1235 = vsel %vm1212, %v901, %v1234
    %v1236 = vsel %vm1214, %v908, %v1235
    %v1237 = vsel %vm1202, %v922, %v915
    %v1238 = vsel %vm1204, %v929, %v1237
    %v1239 = vsel %vm1206, %v936, %v1238
    %v1240 = vsel %vm1208, %v943, %v1239
    %v1241 = vsel %vm1210, %v950, %v1240
    %v1242 = vsel %vm1212, %v957, %v1241
    %v1243 = vsel %vm1214, %v964, %v1242
    %v1244 = vsel %vm1202, %v978, %v971
    %v1245 = vsel %vm1204, %v985, %v1244
    %v1246 = vsel %vm1206, %v992, %v1245
    %v1247 = vsel %vm1208, %v999, %v1246
    %v1248 = vsel %vm1210, %v1006, %v1247
    %v1249 = vsel %vm1212, %v1013, %v1248
    %v1250 = vsel %vm1214, %v1020, %v1249
    %v1251 = vsel %vm1202, %v1034, %v1027
    %v1252 = vsel %vm1204, %v1041, %v1251
    %v1253 = vsel %vm1206, %v1048, %v1252
    %v1254 = vsel %vm1208, %v1055, %v1253
    %v1255 = vsel %vm1210, %v1062, %v1254
    %v1256 = vsel %vm1212, %v1069, %v1255
    %v1257 = vsel %vm1214, %v1076, %v1256
    %v1258 = vsel %vm1202, %v1090, %v1083
    %v1259 = vsel %vm1204, %v1097, %v1258
    %v1260 = vsel %vm1206, %v1104, %v1259
    %v1261 = vsel %vm1208, %v1111, %v1260
    %v1262 = vsel %vm1210, %v1118, %v1261
    %v1263 = vsel %vm1212, %v1125, %v1262
    %v1264 = vsel %vm1214, %v1132, %v1263
    %v1273 = vrot.slane %v1215, 6
    %v1274 = vrot.slane %v1243, 6
    %v1275 = vrot.slane %v1222, 6
    %v1276 = vrot.slane %v1250, 6
    %v1277 = vrot.slane %v1229, 6
    %v1278 = vrot.slane %v1257, 6
    %v1279 = vrot.slane %v1236, 6
    %v1280 = vrot.slane %v1264, 6
    %vm1281 = vcmp.lt.s32.totalorder %v1134, 2
    %v1282 = vsel %vm1281, %v1277, %v1279
    %v1283 = vsel %vm1281, %v1278, %v1280
    %v1284 = vsel %vm1281, %v1275, %v1277
    %v1285 = vsel %vm1281, %v1276, %v1278
    %v1286 = vsel %vm1281, %v1273, %v1275
    %v1287 = vsel %vm1281, %v1274, %v1276
    %v1288 = vsel %vm1281, %v1279, %v1273
    %v1289 = vsel %vm1281, %v1280, %v1274
    %v1290 = vadd.s32 %v1134, 4294967294
    %v1291 = vadd.s32 %v1135, 4294967294
    %v1292 = vadd.s32 %v1136, 4294967294
    %v1293 = vadd.s32 %v1137, 4294967294
    %vm1294 = vcmp.ge.s32.totalorder %v1290, 0
    %vm1295 = vcmp.ge.s32.totalorder %v1291, 0
    %vm1296 = vcmp.ge.s32.totalorder %v1292, 0
    %vm1297 = vcmp.ge.s32.totalorder %v1293, 0
    %vm1298 = vcmp.lt.s32.totalorder %v1290, 32
    %vm1299 = vcmp.lt.s32.totalorder %v1291, 32
    %vm1300 = vcmp.lt.s32.totalorder %v1292, 32
    %vm1301 = vcmp.lt.s32.totalorder %v1293, 32
    %vm1302 = vmand %vm1294, %vm1298
    %vm1303 = vmand %vm1295, %vm1299
    %vm1304 = vmand %vm1296, %vm1300
    %vm1305 = vmand %vm1297, %vm1301
    %v1306 = vsel %vm1302, 1, 0
    %v1307 = vsel %vm1303, 1, 0
    %v1308 = vsel %vm1304, 1, 0
    %v1309 = vsel %vm1305, 1, 0
    %vm1310 = vcmp.eq.s32.totalorder %v1306, 1
    %vm1311 = vcmp.eq.s32.totalorder %v1307, 1
    %vm1312 = vcmp.eq.s32.totalorder %v1308, 1
    %vm1313 = vcmp.eq.s32.totalorder %v1309, 1
    %v1314 = vsel %vm1310, %v1288, 0.0
    %v1315 = vsel %vm1311, %v1286, 0.0
    %v1316 = vsel %vm1312, %v1284, 0.0
    %v1317 = vsel %vm1313, %v1282, 0.0
    %v1318 = vsel %vm1310, %v1289, 0.0
    %v1319 = vsel %vm1311, %v1287, 0.0
    %v1320 = vsel %vm1312, %v1285, 0.0
    %v1321 = vsel %vm1313, %v1283, 0.0
    %v1322 = vpack.c.bf16 %v1315, %v1314
    %v1323 = vpack.c.bf16 %v1317, %v1316
    %v1324 = vpack.c.bf16 %v1319, %v1318
    %v1325 = vpack.c.bf16 %v1321, %v1320
    %v1326 = vld [vmem:[#allocation2] sm:$0xf]
    %v1327 = vld [vmem:[#allocation2 + $0x4] sm:$0xf]
    %v1328 = vld [vmem:[#allocation2 + $0x8] sm:$0xf]
    %v1329 = vld [vmem:[#allocation2 + $0xc] sm:$0xf]
    %v1330 = vld [vmem:[#allocation2 + $0x10] sm:$0xf]
    %v1331 = vld [vmem:[#allocation2 + $0x14] sm:$0xf]
    %v1332 = vld [vmem:[#allocation2 + $0x18] sm:$0xf]
    %v1333 = vld [vmem:[#allocation2 + $0x1c] sm:$0xf]
    %v1334 = vrot.slane %v1215, 7
    %v1335 = vrot.slane %v1243, 7
    %v1336 = vrot.slane %v1222, 7
    %v1337 = vrot.slane %v1250, 7
    %v1338 = vrot.slane %v1229, 7
    %v1339 = vrot.slane %v1257, 7
    %v1340 = vrot.slane %v1236, 7
    %v1341 = vrot.slane %v1264, 7
    %vm1342 = vcmp.lt.s32.totalorder %v1134, 1
    %v1343 = vsel %vm1342, %v1338, %v1340
    %v1344 = vsel %vm1342, %v1339, %v1341
    %v1345 = vsel %vm1342, %v1336, %v1338
    %v1346 = vsel %vm1342, %v1337, %v1339
    %v1347 = vsel %vm1342, %v1334, %v1336
    %v1348 = vsel %vm1342, %v1335, %v1337
    %v1349 = vsel %vm1342, %v1340, %v1334
    %v1350 = vsel %vm1342, %v1341, %v1335
    %v1351 = vadd.s32 %v1134, 4294967295
    %v1352 = vadd.s32 %v1135, 4294967295
    %v1353 = vadd.s32 %v1136, 4294967295
    %v1354 = vadd.s32 %v1137, 4294967295
    %vm1355 = vcmp.ge.s32.totalorder %v1351, 0
    %vm1356 = vcmp.ge.s32.totalorder %v1352, 0
    %vm1357 = vcmp.ge.s32.totalorder %v1353, 0
    %vm1358 = vcmp.ge.s32.totalorder %v1354, 0
    %vm1359 = vcmp.lt.s32.totalorder %v1351, 32
    %vm1360 = vcmp.lt.s32.totalorder %v1352, 32
    %vm1361 = vcmp.lt.s32.totalorder %v1353, 32
    %vm1362 = vcmp.lt.s32.totalorder %v1354, 32
    %vm1363 = vmand %vm1355, %vm1359
    %vm1364 = vmand %vm1356, %vm1360
    %vm1365 = vmand %vm1357, %vm1361
    %vm1366 = vmand %vm1358, %vm1362
    %v1367 = vsel %vm1363, 1, 0
    %v1368 = vsel %vm1364, 1, 0
    %v1369 = vsel %vm1365, 1, 0
    %v1370 = vsel %vm1366, 1, 0
    %vm1371 = vcmp.eq.s32.totalorder %v1367, 1
    %vm1372 = vcmp.eq.s32.totalorder %v1368, 1
    %vm1373 = vcmp.eq.s32.totalorder %v1369, 1
    %vm1374 = vcmp.eq.s32.totalorder %v1370, 1
    %v1375 = vsel %vm1371, %v1349, 0.0
    %v1376 = vsel %vm1372, %v1347, 0.0
    %v1377 = vsel %vm1373, %v1345, 0.0
    %v1378 = vsel %vm1374, %v1343, 0.0
    %v1379 = vsel %vm1371, %v1350, 0.0
    %v1380 = vsel %vm1372, %v1348, 0.0
    %v1381 = vsel %vm1373, %v1346, 0.0
    %v1382 = vsel %vm1374, %v1344, 0.0
    %v1383 = vpack.c.bf16 %v1376, %v1375
    %v1384 = vpack.c.bf16 %v1378, %v1377
    %v1385 = vpack.c.bf16 %v1380, %v1379
    %v1386 = vpack.c.bf16 %v1382, %v1381
    %s1387 = scalar_lea.vmem [#allocation2], 32
    %v1388 = vld [vmem:[%s1387] sm:$0xf]
    %v1389 = vld [vmem:[%s1387 + $0x4] sm:$0xf]
    %v1390 = vld [vmem:[%s1387 + $0x8] sm:$0xf]
    %v1391 = vld [vmem:[%s1387 + $0xc] sm:$0xf]
    %v1392 = vld [vmem:[%s1387 + $0x10] sm:$0xf]
    %v1393 = vld [vmem:[%s1387 + $0x14] sm:$0xf]
    %v1394 = vld [vmem:[%s1387 + $0x18] sm:$0xf]
    %v1395 = vld [vmem:[%s1387 + $0x1c] sm:$0xf]
    %v1404 = vunpack.c.l.b16 %v1388
    %v1405 = vunpack.c.l.b16 %v1389
    %v1406 = vunpack.c.l.b16 %v1390
    %v1407 = vunpack.c.l.b16 %v1391
    %v1408 = vunpack.c.l.b16 %v1392
    %v1409 = vunpack.c.l.b16 %v1393
    %v1410 = vunpack.c.l.b16 %v1394
    %v1411 = vunpack.c.l.b16 %v1395
    %v1412 = vpack.c.b16 %v1405, %v1404
    %v1413 = vpack.c.b16 %v1407, %v1406
    %v1414 = vpack.c.b16 %v1409, %v1408
    %v1415 = vpack.c.b16 %v1411, %v1410
    %vm1420 = vcmask 523264
    %v1422 = vsel %vm1420, %v1383, 0
    %v1425 = vsel %vm1420, %v1384, 0
    %v1428 = vsel %vm1420, %v1385, 0
    %v1431 = vsel %vm1420, %v1386, 0
    %1433 = vmatprep.subr.bf16.mxu0 0
    %1434 = vmatpush1.bf16.msra.mxu0 %v1412
    %1435 = vmatprep.subr.bf16.mxu0 0
    %1436 = vmatpush1.bf16.msra.mxu0 %v1413
    %1437 = vmatprep.subr.bf16.mxu0 0
    %1438 = vmatpush1.bf16.msra.mxu0 %v1414
    %1439 = vmatprep.subr.bf16.mxu0 0
    %1440 = vmatpush1.bf16.msra.mxu0 %v1415
    %1441 = vmatprep.subr.bf16.mxu0 0
    %1442 = vmatpush1.bf16.msra.mxu0 0
    %1443 = vmatprep.subr.bf16.mxu0 0
    %1444 = vmatpush1.bf16.msra.mxu0 0
    %1445 = vmatprep.subr.bf16.mxu0 0
    %1446 = vmatpush1.bf16.msra.mxu0 0
    %1447 = vmatprep.subr.bf16.mxu0 0
    %1448 = vmatpush1.bf16.msra.mxu0 0
    %1449 = vmatprep.subr.bf16.mxu0 0
    %1450 = vmatpush1.bf16.msra.mxu0 0
    %1451 = vmatprep.subr.bf16.mxu0 0
    %1452 = vmatpush1.bf16.msra.mxu0 0
    %1453 = vmatprep.subr.bf16.mxu0 0
    %1454 = vmatpush1.bf16.msra.mxu0 0
    %1455 = vmatprep.subr.bf16.mxu0 0
    %1456 = vmatpush1.bf16.msra.mxu0 0
    %1457 = vmatprep.subr.bf16.mxu0 0
    %1458 = vmatpush1.bf16.msra.mxu0 0
    %1459 = vmatprep.subr.bf16.mxu0 0
    %1460 = vmatpush1.bf16.msra.mxu0 0
    %1461 = vmatprep.subr.bf16.mxu0 0
    %1462 = vmatpush1.bf16.msra.mxu0 0
    %1463 = vmatprep.subr.bf16.mxu0 0
    %1464 = vmatpush1.bf16.msra.mxu0 0
    %1465 = vmatprep.mubr.bf16.mxu0 0
    %1466 = vmatmul.mubr.bf16.gmra.mrb[0].mxu0 %v1422
    %v1467 = vpop.f32.mrb[0].mxu0
    %v1468 = vadd.f32 0.0, %v1467
    %v1469 = vpop.f32.mrb[0].mxu0
    %v1470 = vpop.f32.mrb[0].mxu0
    %v1471 = vadd.f32 0.0, %v1470
    %v1472 = vpop.f32.mrb[0].mxu0
    %1473 = vmatprep.mubr.bf16.mxu0 0
    %1474 = vmatmul.mubr.bf16.gmra.mrb[0].mxu0 %v1425
    %v1475 = vpop.f32.mrb[0].mxu0
    %v1476 = vadd.f32 0.0, %v1475
    %v1477 = vpop.f32.mrb[0].mxu0
    %v1478 = vpop.f32.mrb[0].mxu0
    %v1479 = vadd.f32 0.0, %v1478
    %v1480 = vpop.f32.mrb[0].mxu0
    %1481 = vmatprep.mubr.bf16.mxu0 0
    %1482 = vmatmul.mubr.bf16.gmra.mrb[0].mxu0 %v1428
    %v1483 = vpop.f32.mrb[0].mxu0
    %v1484 = vadd.f32 0.0, %v1483
    %v1485 = vpop.f32.mrb[0].mxu0
    %v1486 = vpop.f32.mrb[0].mxu0
    %v1487 = vadd.f32 0.0, %v1486
    %v1488 = vpop.f32.mrb[0].mxu0
    %1489 = vmatprep.mubr.bf16.mxu0 0
    %1490 = vmatmul.mubr.bf16.gmra.mrb[0].mxu0 %v1431
    %v1491 = vpop.f32.mrb[0].mxu0
    %v1492 = vadd.f32 0.0, %v1491
    %v1493 = vpop.f32.mrb[0].mxu0
    %v1494 = vpop.f32.mrb[0].mxu0
    %v1495 = vadd.f32 0.0, %v1494
    %v1496 = vpop.f32.mrb[0].mxu0
    %1497 = vdwg.mxu0
    %v1506 = vunpack.c.l.b16 %v1326
    %v1507 = vunpack.c.l.b16 %v1327
    %v1508 = vunpack.c.l.b16 %v1328
    %v1509 = vunpack.c.l.b16 %v1329
    %v1510 = vunpack.c.l.b16 %v1330
    %v1511 = vunpack.c.l.b16 %v1331
    %v1512 = vunpack.c.l.b16 %v1332
    %v1513 = vunpack.c.l.b16 %v1333
    %v1514 = vpack.c.b16 %v1507, %v1506
    %v1515 = vpack.c.b16 %v1509, %v1508
    %v1516 = vpack.c.b16 %v1511, %v1510
    %v1517 = vpack.c.b16 %v1513, %v1512
    %v1523 = vsel %vm1420, %v1322, 0
    %v1526 = vsel %vm1420, %v1323, 0
    %v1529 = vsel %vm1420, %v1324, 0
    %v1532 = vsel %vm1420, %v1325, 0
    %1534 = vmatprep.subr.bf16.mxu0 0
    %1535 = vmatpush1.bf16.msra.mxu0 %v1514
    %1536 = vmatprep.subr.bf16.mxu0 0
    %1537 = vmatpush1.bf16.msra.mxu0 %v1515
    %1538 = vmatprep.subr.bf16.mxu0 0
    %1539 = vmatpush1.bf16.msra.mxu0 %v1516
    %1540 = vmatprep.subr.bf16.mxu0 0
    %1541 = vmatpush1.bf16.msra.mxu0 %v1517
    %1542 = vmatprep.subr.bf16.mxu0 0
    %1543 = vmatpush1.bf16.msra.mxu0 0
    %1544 = vmatprep.subr.bf16.mxu0 0
    %1545 = vmatpush1.bf16.msra.mxu0 0
    %1546 = vmatprep.subr.bf16.mxu0 0
    %1547 = vmatpush1.bf16.msra.mxu0 0
    %1548 = vmatprep.subr.bf16.mxu0 0
    %1549 = vmatpush1.bf16.msra.mxu0 0
    %1550 = vmatprep.subr.bf16.mxu0 0
    %1551 = vmatpush1.bf16.msra.mxu0 0
    %1552 = vmatprep.subr.bf16.mxu0 0
    %1553 = vmatpush1.bf16.msra.mxu0 0
    %1554 = vmatprep.subr.bf16.mxu0 0
    %1555 = vmatpush1.bf16.msra.mxu0 0
    %1556 = vmatprep.subr.bf16.mxu0 0
    %1557 = vmatpush1.bf16.msra.mxu0 0
    %1558 = vmatprep.subr.bf16.mxu0 0
    %1559 = vmatpush1.bf16.msra.mxu0 0
    %1560 = vmatprep.subr.bf16.mxu0 0
    %1561 = vmatpush1.bf16.msra.mxu0 0
    %1562 = vmatprep.subr.bf16.mxu0 0
    %1563 = vmatpush1.bf16.msra.mxu0 0
    %1564 = vmatprep.subr.bf16.mxu0 0
    %1565 = vmatpush1.bf16.msra.mxu0 0
    %1566 = vmatprep.mubr.bf16.mxu0 0
    %1567 = vmatmul.mubr.bf16.gmra.mrb[0].mxu0 %v1523
    %v1568 = vpop.f32.mrb[0].mxu0
    %v1569 = vadd.f32 %v1468, %v1568
    %v1570 = vpop.f32.mrb[0].mxu0
    %v1571 = vpop.f32.mrb[0].mxu0
    %v1572 = vadd.f32 %v1471, %v1571
    %v1573 = vpop.f32.mrb[0].mxu0
    %1574 = vmatprep.mubr.bf16.mxu0 0
    %1575 = vmatmul.mubr.bf16.gmra.mrb[0].mxu0 %v1526
    %v1576 = vpop.f32.mrb[0].mxu0
    %v1577 = vadd.f32 %v1476, %v1576
    %v1578 = vpop.f32.mrb[0].mxu0
    %v1579 = vpop.f32.mrb[0].mxu0
    %v1580 = vadd.f32 %v1479, %v1579
    %v1581 = vpop.f32.mrb[0].mxu0
    %1582 = vmatprep.mubr.bf16.mxu0 0
    %1583 = vmatmul.mubr.bf16.gmra.mrb[0].mxu0 %v1529
    %v1584 = vpop.f32.mrb[0].mxu0
    %v1585 = vadd.f32 %v1484, %v1584
    %v1586 = vpop.f32.mrb[0].mxu0
    %v1587 = vpop.f32.mrb[0].mxu0
    %v1588 = vadd.f32 %v1487, %v1587
    %v1589 = vpop.f32.mrb[0].mxu0
    %1590 = vmatprep.mubr.bf16.mxu0 0
    %1591 = vmatmul.mubr.bf16.gmra.mrb[0].mxu0 %v1532
    %v1592 = vpop.f32.mrb[0].mxu0
    %v1593 = vadd.f32 %v1492, %v1592
    %v1594 = vpop.f32.mrb[0].mxu0
    %v1595 = vpop.f32.mrb[0].mxu0
    %v1596 = vadd.f32 %v1495, %v1595
    %v1597 = vpop.f32.mrb[0].mxu0
    %1598 = vdwg.mxu0
    %v1599 = vpack.c.bf16 %v691, %v691
    %v1600 = vpack.c.bf16 %v698, %v698
    %v1601 = vpack.c.bf16 %v705, %v705
    %v1602 = vpack.c.bf16 %v712, %v712
    %v1603 = vpack.c.bf16 %v719, %v719
    %v1604 = vpack.c.bf16 %v726, %v726
    %v1605 = vpack.c.bf16 %v733, %v733
    %v1606 = vpack.c.bf16 %v740, %v740
    %v1607 = vpack.c.bf16 %v747, %v747
    %v1608 = vpack.c.bf16 %v754, %v754
    %v1609 = vpack.c.bf16 %v761, %v761
    %v1610 = vpack.c.bf16 %v768, %v768
    %v1611 = vpack.c.bf16 %v775, %v775
    %v1612 = vpack.c.bf16 %v782, %v782
    %v1613 = vpack.c.bf16 %v789, %v789
    %v1614 = vpack.c.bf16 %v796, %v796
    %v1615 = vpack.c.bf16 %v803, %v803
    %v1616 = vpack.c.bf16 %v810, %v810
    %v1617 = vpack.c.bf16 %v817, %v817
    %v1618 = vpack.c.bf16 %v824, %v824
    %v1619 = vpack.c.bf16 %v831, %v831
    %v1620 = vpack.c.bf16 %v838, %v838
    %v1621 = vpack.c.bf16 %v845, %v845
    %v1622 = vpack.c.bf16 %v852, %v852
    %v1623 = vpack.c.bf16 %v859, %v859
    %v1624 = vpack.c.bf16 %v866, %v866
    %v1625 = vpack.c.bf16 %v873, %v873
    %v1626 = vpack.c.bf16 %v880, %v880
    %v1627 = vpack.c.bf16 %v887, %v887
    %v1628 = vpack.c.bf16 %v894, %v894
    %v1629 = vpack.c.bf16 %v901, %v901
    %v1630 = vpack.c.bf16 %v908, %v908
    %v1631 = vpack.c.bf16 %v915, %v915
    %v1632 = vpack.c.bf16 %v922, %v922
    %v1633 = vpack.c.bf16 %v929, %v929
    %v1634 = vpack.c.bf16 %v936, %v936
    %v1635 = vpack.c.bf16 %v943, %v943
    %v1636 = vpack.c.bf16 %v950, %v950
    %v1637 = vpack.c.bf16 %v957, %v957
    %v1638 = vpack.c.bf16 %v964, %v964
    %v1639 = vpack.c.bf16 %v971, %v971
    %v1640 = vpack.c.bf16 %v978, %v978
    %v1641 = vpack.c.bf16 %v985, %v985
    %v1642 = vpack.c.bf16 %v992, %v992
    %v1643 = vpack.c.bf16 %v999, %v999
    %v1644 = vpack.c.bf16 %v1006, %v1006
    %v1645 = vpack.c.bf16 %v1013, %v1013
    %v1646 = vpack.c.bf16 %v1020, %v1020
    %v1647 = vpack.c.bf16 %v1027, %v1027
    %v1648 = vpack.c.bf16 %v1034, %v1034
    %v1649 = vpack.c.bf16 %v1041, %v1041
    %v1650 = vpack.c.bf16 %v1048, %v1048
    %v1651 = vpack.c.bf16 %v1055, %v1055
    %v1652 = vpack.c.bf16 %v1062, %v1062
    %v1653 = vpack.c.bf16 %v1069, %v1069
    %v1654 = vpack.c.bf16 %v1076, %v1076
    %v1655 = vpack.c.bf16 %v1083, %v1083
    %v1656 = vpack.c.bf16 %v1090, %v1090
    %v1657 = vpack.c.bf16 %v1097, %v1097
    %v1658 = vpack.c.bf16 %v1104, %v1104
    %v1659 = vpack.c.bf16 %v1111, %v1111
    %v1660 = vpack.c.bf16 %v1118, %v1118
    %v1661 = vpack.c.bf16 %v1125, %v1125
    %v1662 = vpack.c.bf16 %v1132, %v1132
    %s1663 = scalar_lea.vmem [#allocation2], 64
    %v1664 = vld [vmem:[%s1663] sm:$0xf]
    %v1665 = vld [vmem:[%s1663 + $0x4] sm:$0xf]
    %v1666 = vld [vmem:[%s1663 + $0x8] sm:$0xf]
    %v1667 = vld [vmem:[%s1663 + $0xc] sm:$0xf]
    %v1668 = vld [vmem:[%s1663 + $0x10] sm:$0xf]
    %v1669 = vld [vmem:[%s1663 + $0x14] sm:$0xf]
    %v1670 = vld [vmem:[%s1663 + $0x18] sm:$0xf]
    %v1671 = vld [vmem:[%s1663 + $0x1c] sm:$0xf]
    %v1736 = vunpack.c.l.b16 %v1599
    %v1737 = vunpack.c.l.b16 %v1600
    %v1738 = vunpack.c.l.b16 %v1601
    %v1739 = vunpack.c.l.b16 %v1602
    %v1740 = vunpack.c.l.b16 %v1603
    %v1741 = vunpack.c.l.b16 %v1604
    %v1742 = vunpack.c.l.b16 %v1605
    %v1743 = vunpack.c.l.b16 %v1606
    %v1744 = vunpack.c.l.b16 %v1607
    %v1745 = vunpack.c.l.b16 %v1608
    %v1746 = vunpack.c.l.b16 %v1609
    %v1747 = vunpack.c.l.b16 %v1610
    %v1748 = vunpack.c.l.b16 %v1611
    %v1749 = vunpack.c.l.b16 %v1612
    %v1750 = vunpack.c.l.b16 %v1613
    %v1751 = vunpack.c.l.b16 %v1614
    %v1752 = vunpack.c.l.b16 %v1615
    %v1753 = vunpack.c.l.b16 %v1616
    %v1754 = vunpack.c.l.b16 %v1617
    %v1755 = vunpack.c.l.b16 %v1618
    %v1756 = vunpack.c.l.b16 %v1619
    %v1757 = vunpack.c.l.b16 %v1620
    %v1758 = vunpack.c.l.b16 %v1621
    %v1759 = vunpack.c.l.b16 %v1622
    %v1760 = vunpack.c.l.b16 %v1623
    %v1761 = vunpack.c.l.b16 %v1624
    %v1762 = vunpack.c.l.b16 %v1625
    %v1763 = vunpack.c.l.b16 %v1626
    %v1764 = vunpack.c.l.b16 %v1627
    %v1765 = vunpack.c.l.b16 %v1628
    %v1766 = vunpack.c.l.b16 %v1629
    %v1767 = vunpack.c.l.b16 %v1630
    %v1768 = vunpack.c.l.b16 %v1631
    %v1769 = vunpack.c.l.b16 %v1632
    %v1770 = vunpack.c.l.b16 %v1633
    %v1771 = vunpack.c.l.b16 %v1634
    %v1772 = vunpack.c.l.b16 %v1635
    %v1773 = vunpack.c.l.b16 %v1636
    %v1774 = vunpack.c.l.b16 %v1637
    %v1775 = vunpack.c.l.b16 %v1638
    %v1776 = vunpack.c.l.b16 %v1639
    %v1777 = vunpack.c.l.b16 %v1640
    %v1778 = vunpack.c.l.b16 %v1641
    %v1779 = vunpack.c.l.b16 %v1642
    %v1780 = vunpack.c.l.b16 %v1643
    %v1781 = vunpack.c.l.b16 %v1644
    %v1782 = vunpack.c.l.b16 %v1645
    %v1783 = vunpack.c.l.b16 %v1646
    %v1784 = vunpack.c.l.b16 %v1647
    %v1785 = vunpack.c.l.b16 %v1648
    %v1786 = vunpack.c.l.b16 %v1649
    %v1787 = vunpack.c.l.b16 %v1650
    %v1788 = vunpack.c.l.b16 %v1651
    %v1789 = vunpack.c.l.b16 %v1652
    %v1790 = vunpack.c.l.b16 %v1653
    %v1791 = vunpack.c.l.b16 %v1654
    %v1792 = vunpack.c.l.b16 %v1655
    %v1793 = vunpack.c.l.b16 %v1656
    %v1794 = vunpack.c.l.b16 %v1657
    %v1795 = vunpack.c.l.b16 %v1658
    %v1796 = vunpack.c.l.b16 %v1659
    %v1797 = vunpack.c.l.b16 %v1660
    %v1798 = vunpack.c.l.b16 %v1661
    %v1799 = vunpack.c.l.b16 %v1662
    %v1800 = vsel %vm1202, %v1737, %v1736
    %v1801 = vsel %vm1204, %v1738, %v1800
    %v1802 = vsel %vm1206, %v1739, %v1801
    %v1803 = vsel %vm1208, %v1740, %v1802
    %v1804 = vsel %vm1210, %v1741, %v1803
    %v1805 = vsel %vm1212, %v1742, %v1804
    %v1806 = vsel %vm1214, %v1743, %v1805
    %v1807 = vsel %vm1202, %v1745, %v1744
    %v1808 = vsel %vm1204, %v1746, %v1807
    %v1809 = vsel %vm1206, %v1747, %v1808
    %v1810 = vsel %vm1208, %v1748, %v1809
    %v1811 = vsel %vm1210, %v1749, %v1810
    %v1812 = vsel %vm1212, %v1750, %v1811
    %v1813 = vsel %vm1214, %v1751, %v1812
    %v1814 = vsel %vm1202, %v1753, %v1752
    %v1815 = vsel %vm1204, %v1754, %v1814
    %v1816 = vsel %vm1206, %v1755, %v1815
    %v1817 = vsel %vm1208, %v1756, %v1816
    %v1818 = vsel %vm1210, %v1757, %v1817
    %v1819 = vsel %vm1212, %v1758, %v1818
    %v1820 = vsel %vm1214, %v1759, %v1819
    %v1821 = vsel %vm1202, %v1761, %v1760
    %v1822 = vsel %vm1204, %v1762, %v1821
    %v1823 = vsel %vm1206, %v1763, %v1822
    %v1824 = vsel %vm1208, %v1764, %v1823
    %v1825 = vsel %vm1210, %v1765, %v1824
    %v1826 = vsel %vm1212, %v1766, %v1825
    %v1827 = vsel %vm1214, %v1767, %v1826
    %v1828 = vsel %vm1202, %v1769, %v1768
    %v1829 = vsel %vm1204, %v1770, %v1828
    %v1830 = vsel %vm1206, %v1771, %v1829
    %v1831 = vsel %vm1208, %v1772, %v1830
    %v1832 = vsel %vm1210, %v1773, %v1831
    %v1833 = vsel %vm1212, %v1774, %v1832
    %v1834 = vsel %vm1214, %v1775, %v1833
    %v1835 = vsel %vm1202, %v1777, %v1776
    %v1836 = vsel %vm1204, %v1778, %v1835
    %v1837 = vsel %vm1206, %v1779, %v1836
    %v1838 = vsel %vm1208, %v1780, %v1837
    %v1839 = vsel %vm1210, %v1781, %v1838
    %v1840 = vsel %vm1212, %v1782, %v1839
    %v1841 = vsel %vm1214, %v1783, %v1840
    %v1842 = vsel %vm1202, %v1785, %v1784
    %v1843 = vsel %vm1204, %v1786, %v1842
    %v1844 = vsel %vm1206, %v1787, %v1843
    %v1845 = vsel %vm1208, %v1788, %v1844
    %v1846 = vsel %vm1210, %v1789, %v1845
    %v1847 = vsel %vm1212, %v1790, %v1846
    %v1848 = vsel %vm1214, %v1791, %v1847
    %v1849 = vsel %vm1202, %v1793, %v1792
    %v1850 = vsel %vm1204, %v1794, %v1849
    %v1851 = vsel %vm1206, %v1795, %v1850
    %v1852 = vsel %vm1208, %v1796, %v1851
    %v1853 = vsel %vm1210, %v1797, %v1852
    %v1854 = vsel %vm1212, %v1798, %v1853
    %v1855 = vsel %vm1214, %v1799, %v1854
    %v1856 = vpack.c.b16 %v1813, %v1806
    %v1857 = vpack.c.b16 %v1827, %v1820
    %v1858 = vpack.c.b16 %v1841, %v1834
    %v1859 = vpack.c.b16 %v1855, %v1848
    %v1868 = vunpack.c.l.b16 %v1664
    %v1869 = vunpack.c.l.b16 %v1665
    %v1870 = vunpack.c.l.b16 %v1666
    %v1871 = vunpack.c.l.b16 %v1667
    %v1872 = vunpack.c.l.b16 %v1668
    %v1873 = vunpack.c.l.b16 %v1669
    %v1874 = vunpack.c.l.b16 %v1670
    %v1875 = vunpack.c.l.b16 %v1671
    %v1876 = vpack.c.b16 %v1869, %v1868
    %v1877 = vpack.c.b16 %v1871, %v1870
    %v1878 = vpack.c.b16 %v1873, %v1872
    %v1879 = vpack.c.b16 %v1875, %v1874
    %v1885 = vsel %vm1420, %v1856, 0
    %v1888 = vsel %vm1420, %v1857, 0
    %v1891 = vsel %vm1420, %v1858, 0
    %v1894 = vsel %vm1420, %v1859, 0
    %1896 = vmatprep.subr.bf16.mxu0 0
    %1897 = vmatpush1.bf16.msra.mxu0 %v1876
    %1898 = vmatprep.subr.bf16.mxu0 0
    %1899 = vmatpush1.bf16.msra.mxu0 %v1877
    %1900 = vmatprep.subr.bf16.mxu0 0
    %1901 = vmatpush1.bf16.msra.mxu0 %v1878
    %1902 = vmatprep.subr.bf16.mxu0 0
    %1903 = vmatpush1.bf16.msra.mxu0 %v1879
    %1904 = vmatprep.subr.bf16.mxu0 0
    %1905 = vmatpush1.bf16.msra.mxu0 0
    %1906 = vmatprep.subr.bf16.mxu0 0
    %1907 = vmatpush1.bf16.msra.mxu0 0
    %1908 = vmatprep.subr.bf16.mxu0 0
    %1909 = vmatpush1.bf16.msra.mxu0 0
    %1910 = vmatprep.subr.bf16.mxu0 0
    %1911 = vmatpush1.bf16.msra.mxu0 0
    %1912 = vmatprep.subr.bf16.mxu0 0
    %1913 = vmatpush1.bf16.msra.mxu0 0
    %1914 = vmatprep.subr.bf16.mxu0 0
    %1915 = vmatpush1.bf16.msra.mxu0 0
    %1916 = vmatprep.subr.bf16.mxu0 0
    %1917 = vmatpush1.bf16.msra.mxu0 0
    %1918 = vmatprep.subr.bf16.mxu0 0
    %1919 = vmatpush1.bf16.msra.mxu0 0
    %1920 = vmatprep.subr.bf16.mxu0 0
    %1921 = vmatpush1.bf16.msra.mxu0 0
    %1922 = vmatprep.subr.bf16.mxu0 0
    %1923 = vmatpush1.bf16.msra.mxu0 0
    %1924 = vmatprep.subr.bf16.mxu0 0
    %1925 = vmatpush1.bf16.msra.mxu0 0
    %1926 = vmatprep.subr.bf16.mxu0 0
    %1927 = vmatpush1.bf16.msra.mxu0 0
    %1928 = vmatprep.mubr.bf16.mxu0 0
    %1929 = vmatmul.mubr.bf16.gmra.mrb[0].mxu0 %v1885
    %v1930 = vpop.f32.mrb[0].mxu0
    %v1931 = vadd.f32 0.0, %v1930
    %v1932 = vpop.f32.mrb[0].mxu0
    %v1933 = vpop.f32.mrb[0].mxu0
    %v1934 = vadd.f32 0.0, %v1933
    %v1935 = vpop.f32.mrb[0].mxu0
    %1936 = vmatprep.mubr.bf16.mxu0 0
    %1937 = vmatmul.mubr.bf16.gmra.mrb[0].mxu0 %v1888
    %v1938 = vpop.f32.mrb[0].mxu0
    %v1939 = vadd.f32 0.0, %v1938
    %v1940 = vpop.f32.mrb[0].mxu0
    %v1941 = vpop.f32.mrb[0].mxu0
    %v1942 = vadd.f32 0.0, %v1941
    %v1943 = vpop.f32.mrb[0].mxu0
    %1944 = vmatprep.mubr.bf16.mxu0 0
    %1945 = vmatmul.mubr.bf16.gmra.mrb[0].mxu0 %v1891
    %v1946 = vpop.f32.mrb[0].mxu0
    %v1947 = vadd.f32 0.0, %v1946
    %v1948 = vpop.f32.mrb[0].mxu0
    %v1949 = vpop.f32.mrb[0].mxu0
    %v1950 = vadd.f32 0.0, %v1949
    %v1951 = vpop.f32.mrb[0].mxu0
    %1952 = vmatprep.mubr.bf16.mxu0 0
    %1953 = vmatmul.mubr.bf16.gmra.mrb[0].mxu0 %v1894
    %v1954 = vpop.f32.mrb[0].mxu0
    %v1955 = vadd.f32 0.0, %v1954
    %v1956 = vpop.f32.mrb[0].mxu0
    %v1957 = vpop.f32.mrb[0].mxu0
    %v1958 = vadd.f32 0.0, %v1957
    %v1959 = vpop.f32.mrb[0].mxu0
    %1960 = vdwg.mxu0
    %v1961 = vadd.f32 %v1569, %v1931
    %v1962 = vadd.f32 %v1572, %v1934
    %v1963 = vadd.f32 %v1577, %v1939
    %v1964 = vadd.f32 %v1580, %v1942
    %v1965 = vadd.f32 %v1585, %v1947
    %v1966 = vadd.f32 %v1588, %v1950
    %v1967 = vadd.f32 %v1593, %v1955
    %v1968 = vadd.f32 %v1596, %v1958
    %v1969 = vrot.slane %v1215, 1
    %v1970 = vrot.slane %v1243, 1
    %v1971 = vrot.slane %v1222, 1
    %v1972 = vrot.slane %v1250, 1
    %v1973 = vrot.slane %v1229, 1
    %v1974 = vrot.slane %v1257, 1
    %v1975 = vrot.slane %v1236, 1
    %v1976 = vrot.slane %v1264, 1
    %vm1977 = vcmp.lt.s32.totalorder %v1134, 7
    %v1978 = vsel %vm1977, %v1973, %v1975
    %v1979 = vsel %vm1977, %v1974, %v1976
    %v1980 = vsel %vm1977, %v1971, %v1973
    %v1981 = vsel %vm1977, %v1972, %v1974
    %v1982 = vsel %vm1977, %v1969, %v1971
    %v1983 = vsel %vm1977, %v1970, %v1972
    %v1984 = vsel %vm1977, %v1975, %v1969
    %v1985 = vsel %vm1977, %v1976, %v1970
    %v1986 = vadd.s32 %v1134, 1
    %v1987 = vadd.s32 %v1135, 1
    %v1988 = vadd.s32 %v1136, 1
    %v1989 = vadd.s32 %v1137, 1
    %vm1990 = vcmp.ge.s32.totalorder %v1986, 0
    %vm1991 = vcmp.ge.s32.totalorder %v1987, 0
    %vm1992 = vcmp.ge.s32.totalorder %v1988, 0
    %vm1993 = vcmp.ge.s32.totalorder %v1989, 0
    %vm1994 = vcmp.lt.s32.totalorder %v1986, 32
    %vm1995 = vcmp.lt.s32.totalorder %v1987, 32
    %vm1996 = vcmp.lt.s32.totalorder %v1988, 32
    %vm1997 = vcmp.lt.s32.totalorder %v1989, 32
    %vm1998 = vmand %vm1990, %vm1994
    %vm1999 = vmand %vm1991, %vm1995
    %vm2000 = vmand %vm1992, %vm1996
    %vm2001 = vmand %vm1993, %vm1997
    %v2002 = vsel %vm1998, 1, 0
    %v2003 = vsel %vm1999, 1, 0
    %v2004 = vsel %vm2000, 1, 0
    %v2005 = vsel %vm2001, 1, 0
    %vm2006 = vcmp.eq.s32.totalorder %v2002, 1
    %vm2007 = vcmp.eq.s32.totalorder %v2003, 1
    %vm2008 = vcmp.eq.s32.totalorder %v2004, 1
    %vm2009 = vcmp.eq.s32.totalorder %v2005, 1
    %v2010 = vsel %vm2006, %v1982, 0.0
    %v2011 = vsel %vm2007, %v1980, 0.0
    %v2012 = vsel %vm2008, %v1978, 0.0
    %v2013 = vsel %vm2009, %v1984, 0.0
    %v2014 = vsel %vm2006, %v1983, 0.0
    %v2015 = vsel %vm2007, %v1981, 0.0
    %v2016 = vsel %vm2008, %v1979, 0.0
    %v2017 = vsel %vm2009, %v1985, 0.0
    %v2018 = vpack.c.bf16 %v2011, %v2010
    %v2019 = vpack.c.bf16 %v2013, %v2012
    %v2020 = vpack.c.bf16 %v2015, %v2014
    %v2021 = vpack.c.bf16 %v2017, %v2016
    %s2022 = scalar_lea.vmem [#allocation2], 96
    %v2023 = vld [vmem:[%s2022] sm:$0xf]
    %v2024 = vld [vmem:[%s2022 + $0x4] sm:$0xf]
    %v2025 = vld [vmem:[%s2022 + $0x8] sm:$0xf]
    %v2026 = vld [vmem:[%s2022 + $0xc] sm:$0xf]
    %v2027 = vld [vmem:[%s2022 + $0x10] sm:$0xf]
    %v2028 = vld [vmem:[%s2022 + $0x14] sm:$0xf]
    %v2029 = vld [vmem:[%s2022 + $0x18] sm:$0xf]
    %v2030 = vld [vmem:[%s2022 + $0x1c] sm:$0xf]
    %v2039 = vunpack.c.l.b16 %v2023
    %v2040 = vunpack.c.l.b16 %v2024
    %v2041 = vunpack.c.l.b16 %v2025
    %v2042 = vunpack.c.l.b16 %v2026
    %v2043 = vunpack.c.l.b16 %v2027
    %v2044 = vunpack.c.l.b16 %v2028
    %v2045 = vunpack.c.l.b16 %v2029
    %v2046 = vunpack.c.l.b16 %v2030
    %v2047 = vpack.c.b16 %v2040, %v2039
    %v2048 = vpack.c.b16 %v2042, %v2041
    %v2049 = vpack.c.b16 %v2044, %v2043
    %v2050 = vpack.c.b16 %v2046, %v2045
    %v2056 = vsel %vm1420, %v2018, 0
    %v2059 = vsel %vm1420, %v2019, 0
    %v2062 = vsel %vm1420, %v2020, 0
    %v2065 = vsel %vm1420, %v2021, 0
    %2067 = vmatprep.subr.bf16.mxu0 0
    %2068 = vmatpush1.bf16.msra.mxu0 %v2047
    %2069 = vmatprep.subr.bf16.mxu0 0
    %2070 = vmatpush1.bf16.msra.mxu0 %v2048
    %2071 = vmatprep.subr.bf16.mxu0 0
    %2072 = vmatpush1.bf16.msra.mxu0 %v2049
    %2073 = vmatprep.subr.bf16.mxu0 0
    %2074 = vmatpush1.bf16.msra.mxu0 %v2050
    %2075 = vmatprep.subr.bf16.mxu0 0
    %2076 = vmatpush1.bf16.msra.mxu0 0
    %2077 = vmatprep.subr.bf16.mxu0 0
    %2078 = vmatpush1.bf16.msra.mxu0 0
    %2079 = vmatprep.subr.bf16.mxu0 0
    %2080 = vmatpush1.bf16.msra.mxu0 0
    %2081 = vmatprep.subr.bf16.mxu0 0
    %2082 = vmatpush1.bf16.msra.mxu0 0
    %2083 = vmatprep.subr.bf16.mxu0 0
    %2084 = vmatpush1.bf16.msra.mxu0 0
    %2085 = vmatprep.subr.bf16.mxu0 0
    %2086 = vmatpush1.bf16.msra.mxu0 0
    %2087 = vmatprep.subr.bf16.mxu0 0
    %2088 = vmatpush1.bf16.msra.mxu0 0
    %2089 = vmatprep.subr.bf16.mxu0 0
    %2090 = vmatpush1.bf16.msra.mxu0 0
    %2091 = vmatprep.subr.bf16.mxu0 0
    %2092 = vmatpush1.bf16.msra.mxu0 0
    %2093 = vmatprep.subr.bf16.mxu0 0
    %2094 = vmatpush1.bf16.msra.mxu0 0
    %2095 = vmatprep.subr.bf16.mxu0 0
    %2096 = vmatpush1.bf16.msra.mxu0 0
    %2097 = vmatprep.subr.bf16.mxu0 0
    %2098 = vmatpush1.bf16.msra.mxu0 0
    %2099 = vmatprep.mubr.bf16.mxu0 0
    %2100 = vmatmul.mubr.bf16.gmra.mrb[0].mxu0 %v2056
    %v2101 = vpop.f32.mrb[0].mxu0
    %v2102 = vadd.f32 0.0, %v2101
    %v2103 = vpop.f32.mrb[0].mxu0
    %v2104 = vpop.f32.mrb[0].mxu0
    %v2105 = vadd.f32 0.0, %v2104
    %v2106 = vpop.f32.mrb[0].mxu0
    %2107 = vmatprep.mubr.bf16.mxu0 0
    %2108 = vmatmul.mubr.bf16.gmra.mrb[0].mxu0 %v2059
    %v2109 = vpop.f32.mrb[0].mxu0
    %v2110 = vadd.f32 0.0, %v2109
    %v2111 = vpop.f32.mrb[0].mxu0
    %v2112 = vpop.f32.mrb[0].mxu0
    %v2113 = vadd.f32 0.0, %v2112
    %v2114 = vpop.f32.mrb[0].mxu0
    %2115 = vmatprep.mubr.bf16.mxu0 0
    %2116 = vmatmul.mubr.bf16.gmra.mrb[0].mxu0 %v2062
    %v2117 = vpop.f32.mrb[0].mxu0
    %v2118 = vadd.f32 0.0, %v2117
    %v2119 = vpop.f32.mrb[0].mxu0
    %v2120 = vpop.f32.mrb[0].mxu0
    %v2121 = vadd.f32 0.0, %v2120
    %v2122 = vpop.f32.mrb[0].mxu0
    %2123 = vmatprep.mubr.bf16.mxu0 0
    %2124 = vmatmul.mubr.bf16.gmra.mrb[0].mxu0 %v2065
    %v2125 = vpop.f32.mrb[0].mxu0
    %v2126 = vadd.f32 0.0, %v2125
    %v2127 = vpop.f32.mrb[0].mxu0
    %v2128 = vpop.f32.mrb[0].mxu0
    %v2129 = vadd.f32 0.0, %v2128
    %v2130 = vpop.f32.mrb[0].mxu0
    %2131 = vdwg.mxu0
    %v2132 = vadd.f32 %v1961, %v2102
    %v2133 = vadd.f32 %v1962, %v2105
    %v2134 = vadd.f32 %v1963, %v2110
    %v2135 = vadd.f32 %v1964, %v2113
    %v2136 = vadd.f32 %v1965, %v2118
    %v2137 = vadd.f32 %v1966, %v2121
    %v2138 = vadd.f32 %v1967, %v2126
    %v2139 = vadd.f32 %v1968, %v2129
    %v2140 = vrot.slane %v1215, 2
    %v2141 = vrot.slane %v1243, 2
    %v2142 = vrot.slane %v1222, 2
    %v2143 = vrot.slane %v1250, 2
    %v2144 = vrot.slane %v1229, 2
    %v2145 = vrot.slane %v1257, 2
    %v2146 = vrot.slane %v1236, 2
    %v2147 = vrot.slane %v1264, 2
    %vm2148 = vcmp.lt.s32.totalorder %v1134, 6
    %v2149 = vsel %vm2148, %v2144, %v2146
    %v2150 = vsel %vm2148, %v2145, %v2147
    %v2151 = vsel %vm2148, %v2142, %v2144
    %v2152 = vsel %vm2148, %v2143, %v2145
    %v2153 = vsel %vm2148, %v2140, %v2142
    %v2154 = vsel %vm2148, %v2141, %v2143
    %v2155 = vsel %vm2148, %v2146, %v2140
    %v2156 = vsel %vm2148, %v2147, %v2141
    %v2157 = vadd.s32 %v1134, 2
    %v2158 = vadd.s32 %v1135, 2
    %v2159 = vadd.s32 %v1136, 2
    %v2160 = vadd.s32 %v1137, 2
    %vm2161 = vcmp.ge.s32.totalorder %v2157, 0
    %vm2162 = vcmp.ge.s32.totalorder %v2158, 0
    %vm2163 = vcmp.ge.s32.totalorder %v2159, 0
    %vm2164 = vcmp.ge.s32.totalorder %v2160, 0
    %vm2165 = vcmp.lt.s32.totalorder %v2157, 32
    %vm2166 = vcmp.lt.s32.totalorder %v2158, 32
    %vm2167 = vcmp.lt.s32.totalorder %v2159, 32
    %vm2168 = vcmp.lt.s32.totalorder %v2160, 32
    %vm2169 = vmand %vm2161, %vm2165
    %vm2170 = vmand %vm2162, %vm2166
    %vm2171 = vmand %vm2163, %vm2167
    %vm2172 = vmand %vm2164, %vm2168
    %v2173 = vsel %vm2169, 1, 0
    %v2174 = vsel %vm2170, 1, 0
    %v2175 = vsel %vm2171, 1, 0
    %v2176 = vsel %vm2172, 1, 0
    %vm2177 = vcmp.eq.s32.totalorder %v2173, 1
    %vm2178 = vcmp.eq.s32.totalorder %v2174, 1
    %vm2179 = vcmp.eq.s32.totalorder %v2175, 1
    %vm2180 = vcmp.eq.s32.totalorder %v2176, 1
    %v2181 = vsel %vm2177, %v2153, 0.0
    %v2182 = vsel %vm2178, %v2151, 0.0
    %v2183 = vsel %vm2179, %v2149, 0.0
    %v2184 = vsel %vm2180, %v2155, 0.0
    %v2185 = vsel %vm2177, %v2154, 0.0
    %v2186 = vsel %vm2178, %v2152, 0.0
    %v2187 = vsel %vm2179, %v2150, 0.0
    %v2188 = vsel %vm2180, %v2156, 0.0
    %v2189 = vpack.c.bf16 %v2182, %v2181
    %v2190 = vpack.c.bf16 %v2184, %v2183
    %v2191 = vpack.c.bf16 %v2186, %v2185
    %v2192 = vpack.c.bf16 %v2188, %v2187
    %s2193 = scalar_lea.vmem [#allocation2], 128
    %v2194 = vld [vmem:[%s2193] sm:$0xf]
    %v2195 = vld [vmem:[%s2193 + $0x4] sm:$0xf]
    %v2196 = vld [vmem:[%s2193 + $0x8] sm:$0xf]
    %v2197 = vld [vmem:[%s2193 + $0xc] sm:$0xf]
    %v2198 = vld [vmem:[%s2193 + $0x10] sm:$0xf]
    %v2199 = vld [vmem:[%s2193 + $0x14] sm:$0xf]
    %v2200 = vld [vmem:[%s2193 + $0x18] sm:$0xf]
    %v2201 = vld [vmem:[%s2193 + $0x1c] sm:$0xf]
    %v2210 = vunpack.c.l.b16 %v2194
    %v2211 = vunpack.c.l.b16 %v2195
    %v2212 = vunpack.c.l.b16 %v2196
    %v2213 = vunpack.c.l.b16 %v2197
    %v2214 = vunpack.c.l.b16 %v2198
    %v2215 = vunpack.c.l.b16 %v2199
    %v2216 = vunpack.c.l.b16 %v2200
    %v2217 = vunpack.c.l.b16 %v2201
    %v2218 = vpack.c.b16 %v2211, %v2210
    %v2219 = vpack.c.b16 %v2213, %v2212
    %v2220 = vpack.c.b16 %v2215, %v2214
    %v2221 = vpack.c.b16 %v2217, %v2216
    %v2227 = vsel %vm1420, %v2189, 0
    %v2230 = vsel %vm1420, %v2190, 0
    %v2233 = vsel %vm1420, %v2191, 0
    %v2236 = vsel %vm1420, %v2192, 0
    %2238 = vmatprep.subr.bf16.mxu0 0
    %2239 = vmatpush1.bf16.msra.mxu0 %v2218
    %2240 = vmatprep.subr.bf16.mxu0 0
    %2241 = vmatpush1.bf16.msra.mxu0 %v2219
    %2242 = vmatprep.subr.bf16.mxu0 0
    %2243 = vmatpush1.bf16.msra.mxu0 %v2220
    %2244 = vmatprep.subr.bf16.mxu0 0
    %2245 = vmatpush1.bf16.msra.mxu0 %v2221
    %2246 = vmatprep.subr.bf16.mxu0 0
    %2247 = vmatpush1.bf16.msra.mxu0 0
    %2248 = vmatprep.subr.bf16.mxu0 0
    %2249 = vmatpush1.bf16.msra.mxu0 0
    %2250 = vmatprep.subr.bf16.mxu0 0
    %2251 = vmatpush1.bf16.msra.mxu0 0
    %2252 = vmatprep.subr.bf16.mxu0 0
    %2253 = vmatpush1.bf16.msra.mxu0 0
    %2254 = vmatprep.subr.bf16.mxu0 0
    %2255 = vmatpush1.bf16.msra.mxu0 0
    %2256 = vmatprep.subr.bf16.mxu0 0
    %2257 = vmatpush1.bf16.msra.mxu0 0
    %2258 = vmatprep.subr.bf16.mxu0 0
    %2259 = vmatpush1.bf16.msra.mxu0 0
    %2260 = vmatprep.subr.bf16.mxu0 0
    %2261 = vmatpush1.bf16.msra.mxu0 0
    %2262 = vmatprep.subr.bf16.mxu0 0
    %2263 = vmatpush1.bf16.msra.mxu0 0
    %2264 = vmatprep.subr.bf16.mxu0 0
    %2265 = vmatpush1.bf16.msra.mxu0 0
    %2266 = vmatprep.subr.bf16.mxu0 0
    %2267 = vmatpush1.bf16.msra.mxu0 0
    %2268 = vmatprep.subr.bf16.mxu0 0
    %2269 = vmatpush1.bf16.msra.mxu0 0
    %2270 = vmatprep.mubr.bf16.mxu0 0
    %2271 = vmatmul.mubr.bf16.gmra.mrb[0].mxu0 %v2227
    %v2272 = vpop.f32.mrb[0].mxu0
    %v2273 = vadd.f32 0.0, %v2272
    %v2274 = vpop.f32.mrb[0].mxu0
    %v2275 = vpop.f32.mrb[0].mxu0
    %v2276 = vadd.f32 0.0, %v2275
    %v2277 = vpop.f32.mrb[0].mxu0
    %2278 = vmatprep.mubr.bf16.mxu0 0
    %2279 = vmatmul.mubr.bf16.gmra.mrb[0].mxu0 %v2230
    %v2280 = vpop.f32.mrb[0].mxu0
    %v2281 = vadd.f32 0.0, %v2280
    %v2282 = vpop.f32.mrb[0].mxu0
    %v2283 = vpop.f32.mrb[0].mxu0
    %v2284 = vadd.f32 0.0, %v2283
    %v2285 = vpop.f32.mrb[0].mxu0
    %2286 = vmatprep.mubr.bf16.mxu0 0
    %2287 = vmatmul.mubr.bf16.gmra.mrb[0].mxu0 %v2233
    %v2288 = vpop.f32.mrb[0].mxu0
    %v2289 = vadd.f32 0.0, %v2288
    %v2290 = vpop.f32.mrb[0].mxu0
    %v2291 = vpop.f32.mrb[0].mxu0
    %v2292 = vadd.f32 0.0, %v2291
    %v2293 = vpop.f32.mrb[0].mxu0
    %2294 = vmatprep.mubr.bf16.mxu0 0
    %2295 = vmatmul.mubr.bf16.gmra.mrb[0].mxu0 %v2236
    %v2296 = vpop.f32.mrb[0].mxu0
    %v2297 = vadd.f32 0.0, %v2296
    %v2298 = vpop.f32.mrb[0].mxu0
    %v2299 = vpop.f32.mrb[0].mxu0
    %v2300 = vadd.f32 0.0, %v2299
    %v2301 = vpop.f32.mrb[0].mxu0
    %2302 = vdwg.mxu0
    %v2303 = vadd.f32 %v2132, %v2273
    %v2304 = vadd.f32 %v2133, %v2276
    %v2305 = vadd.f32 %v2134, %v2281
    %v2306 = vadd.f32 %v2135, %v2284
    %v2307 = vadd.f32 %v2136, %v2289
    %v2308 = vadd.f32 %v2137, %v2292
    %v2309 = vadd.f32 %v2138, %v2297
    %v2310 = vadd.f32 %v2139, %v2300
    %v2311 = vld [vmem:[%s4] sm:$0x1]
    %v2313 = vlaneseq
    %v2314 = vshrl.u32 %v2313, 7
    %v2315 = vsub.s32 0, %v2314
    %v2316 = vrot.slane %v2311, %v2315
    %v2318 = vadd.f32 %v2303, %v2316
    %v2319 = vadd.f32 %v2304, %v2316
    %v2320 = vadd.f32 %v2305, %v2316
    %v2321 = vadd.f32 %v2306, %v2316
    %v2322 = vadd.f32 %v2307, %v2316
    %v2323 = vadd.f32 %v2308, %v2316
    %v2324 = vadd.f32 %v2309, %v2316
    %v2325 = vadd.f32 %v2310, %v2316
    %v2326 = vmax.f32 %v2318, 0.0
    %v2327 = vmax.f32 %v2319, 0.0
    %v2328 = vmax.f32 %v2320, 0.0
    %v2329 = vmax.f32 %v2321, 0.0
    %v2330 = vmax.f32 %v2322, 0.0
    %v2331 = vmax.f32 %v2323, 0.0
    %v2332 = vmax.f32 %v2324, 0.0
    %v2333 = vmax.f32 %v2325, 0.0
    %v2342 = vcombine.high %v2326, %v2326
    %v2344 = vunpack.c.l.s4 1983009808
    %v2345 = vunpack.c.0.s8 %v2344
    %v2346 = vlaneseq
    %v2347 = vshrl.u32 %v2346, 7
    %v2348 = vsub.s32 %v2345, %v2347
    %v2349 = vrot.slane %v2326, %v2348
    %v2351 = vunpack.c.l.s4 1983009808
    %v2352 = vunpack.c.0.s8 %v2351
    %v2353 = vlaneseq
    %v2354 = vshrl.u32 %v2353, 7
    %v2355 = vsub.s32 %v2352, %v2354
    %v2356 = vrot.slane %v2342, %v2355
    %v2357 = vcombine.high %v2349, %v2349
    %v2358 = vcombine.high %v2356, %v2356
    %v2359 = vcombine.high %v2327, %v2327
    %v2361 = vunpack.c.l.s4 1983009808
    %v2362 = vunpack.c.0.s8 %v2361
    %v2363 = vlaneseq
    %v2364 = vshrl.u32 %v2363, 7
    %v2365 = vsub.s32 %v2362, %v2364
    %v2366 = vrot.slane %v2327, %v2365
    %v2368 = vunpack.c.l.s4 1983009808
    %v2369 = vunpack.c.0.s8 %v2368
    %v2370 = vlaneseq
    %v2371 = vshrl.u32 %v2370, 7
    %v2372 = vsub.s32 %v2369, %v2371
    %v2373 = vrot.slane %v2359, %v2372
    %v2374 = vcombine.high %v2366, %v2366
    %v2375 = vcombine.high %v2373, %v2373
    %v2376 = vcombine.high %v2328, %v2328
    %v2378 = vunpack.c.l.s4 1983009808
    %v2379 = vunpack.c.0.s8 %v2378
    %v2380 = vlaneseq
    %v2381 = vshrl.u32 %v2380, 7
    %v2382 = vsub.s32 %v2379, %v2381
    %v2383 = vrot.slane %v2328, %v2382
    %v2385 = vunpack.c.l.s4 1983009808
    %v2386 = vunpack.c.0.s8 %v2385
    %v2387 = vlaneseq
    %v2388 = vshrl.u32 %v2387, 7
    %v2389 = vsub.s32 %v2386, %v2388
    %v2390 = vrot.slane %v2376, %v2389
    %v2391 = vcombine.high %v2383, %v2383
    %v2392 = vcombine.high %v2390, %v2390
    %v2393 = vcombine.high %v2329, %v2329
    %v2395 = vunpack.c.l.s4 1983009808
    %v2396 = vunpack.c.0.s8 %v2395
    %v2397 = vlaneseq
    %v2398 = vshrl.u32 %v2397, 7
    %v2399 = vsub.s32 %v2396, %v2398
    %v2400 = vrot.slane %v2329, %v2399
    %v2402 = vunpack.c.l.s4 1983009808
    %v2403 = vunpack.c.0.s8 %v2402
    %v2404 = vlaneseq
    %v2405 = vshrl.u32 %v2404, 7
    %v2406 = vsub.s32 %v2403, %v2405
    %v2407 = vrot.slane %v2393, %v2406
    %v2408 = vcombine.high %v2400, %v2400
    %v2409 = vcombine.high %v2407, %v2407
    %v2410 = vcombine.high %v2330, %v2330
    %v2412 = vunpack.c.l.s4 1983009808
    %v2413 = vunpack.c.0.s8 %v2412
    %v2414 = vlaneseq
    %v2415 = vshrl.u32 %v2414, 7
    %v2416 = vsub.s32 %v2413, %v2415
    %v2417 = vrot.slane %v2330, %v2416
    %v2419 = vunpack.c.l.s4 1983009808
    %v2420 = vunpack.c.0.s8 %v2419
    %v2421 = vlaneseq
    %v2422 = vshrl.u32 %v2421, 7
    %v2423 = vsub.s32 %v2420, %v2422
    %v2424 = vrot.slane %v2410, %v2423
    %v2425 = vcombine.high %v2417, %v2417
    %v2426 = vcombine.high %v2424, %v2424
    %v2427 = vcombine.high %v2331, %v2331
    %v2429 = vunpack.c.l.s4 1983009808
    %v2430 = vunpack.c.0.s8 %v2429
    %v2431 = vlaneseq
    %v2432 = vshrl.u32 %v2431, 7
    %v2433 = vsub.s32 %v2430, %v2432
    %v2434 = vrot.slane %v2331, %v2433
    %v2436 = vunpack.c.l.s4 1983009808
    %v2437 = vunpack.c.0.s8 %v2436
    %v2438 = vlaneseq
    %v2439 = vshrl.u32 %v2438, 7
    %v2440 = vsub.s32 %v2437, %v2439
    %v2441 = vrot.slane %v2427, %v2440
    %v2442 = vcombine.high %v2434, %v2434
    %v2443 = vcombine.high %v2441, %v2441
    %v2444 = vcombine.high %v2332, %v2332
    %v2446 = vunpack.c.l.s4 1983009808
    %v2447 = vunpack.c.0.s8 %v2446
    %v2448 = vlaneseq
    %v2449 = vshrl.u32 %v2448, 7
    %v2450 = vsub.s32 %v2447, %v2449
    %v2451 = vrot.slane %v2332, %v2450
    %v2453 = vunpack.c.l.s4 1983009808
    %v2454 = vunpack.c.0.s8 %v2453
    %v2455 = vlaneseq
    %v2456 = vshrl.u32 %v2455, 7
    %v2457 = vsub.s32 %v2454, %v2456
    %v2458 = vrot.slane %v2444, %v2457
    %v2459 = vcombine.high %v2451, %v2451
    %v2460 = vcombine.high %v2458, %v2458
    %v2461 = vcombine.high %v2333, %v2333
    %v2463 = vunpack.c.l.s4 1983009808
    %v2464 = vunpack.c.0.s8 %v2463
    %v2465 = vlaneseq
    %v2466 = vshrl.u32 %v2465, 7
    %v2467 = vsub.s32 %v2464, %v2466
    %v2468 = vrot.slane %v2333, %v2467
    %v2470 = vunpack.c.l.s4 1983009808
    %v2471 = vunpack.c.0.s8 %v2470
    %v2472 = vlaneseq
    %v2473 = vshrl.u32 %v2472, 7
    %v2474 = vsub.s32 %v2471, %v2473
    %v2475 = vrot.slane %v2461, %v2474
    %v2476 = vcombine.high %v2468, %v2468
    %v2477 = vcombine.high %v2475, %v2475
    %vm2510 = vcmask 1041408
    %v2511 = vsel %vm2510, %v2349, -inf
    %v2512 = vrot.slane %v2511, 4
    %v2513 = vmax.f32 %v2511, %v2512
    %v2514 = vrot.slane %v2513, 2
    %v2515 = vmax.f32 %v2513, %v2514
    %v2516 = vrot.slane %v2515, 1
    %v2517 = vmax.f32 %v2515, %v2516
    %v2518 = vsel %vm2510, %v2357, -inf
    %v2519 = vrot.slane %v2518, 4
    %v2520 = vmax.f32 %v2518, %v2519
    %v2521 = vrot.slane %v2520, 2
    %v2522 = vmax.f32 %v2520, %v2521
    %v2523 = vrot.slane %v2522, 1
    %v2524 = vmax.f32 %v2522, %v2523
    %v2525 = vsel %vm2510, %v2356, -inf
    %v2526 = vrot.slane %v2525, 4
    %v2527 = vmax.f32 %v2525, %v2526
    %v2528 = vrot.slane %v2527, 2
    %v2529 = vmax.f32 %v2527, %v2528
    %v2530 = vrot.slane %v2529, 1
    %v2531 = vmax.f32 %v2529, %v2530
    %v2532 = vsel %vm2510, %v2358, -inf
    %v2533 = vrot.slane %v2532, 4
    %v2534 = vmax.f32 %v2532, %v2533
    %v2535 = vrot.slane %v2534, 2
    %v2536 = vmax.f32 %v2534, %v2535
    %v2537 = vrot.slane %v2536, 1
    %v2538 = vmax.f32 %v2536, %v2537
    %v2539 = vsel %vm2510, %v2366, -inf
    %v2540 = vrot.slane %v2539, 4
    %v2541 = vmax.f32 %v2539, %v2540
    %v2542 = vrot.slane %v2541, 2
    %v2543 = vmax.f32 %v2541, %v2542
    %v2544 = vrot.slane %v2543, 1
    %v2545 = vmax.f32 %v2543, %v2544
    %v2546 = vsel %vm2510, %v2374, -inf
    %v2547 = vrot.slane %v2546, 4
    %v2548 = vmax.f32 %v2546, %v2547
    %v2549 = vrot.slane %v2548, 2
    %v2550 = vmax.f32 %v2548, %v2549
    %v2551 = vrot.slane %v2550, 1
    %v2552 = vmax.f32 %v2550, %v2551
    %v2553 = vsel %vm2510, %v2373, -inf
    %v2554 = vrot.slane %v2553, 4
    %v2555 = vmax.f32 %v2553, %v2554
    %v2556 = vrot.slane %v2555, 2
    %v2557 = vmax.f32 %v2555, %v2556
    %v2558 = vrot.slane %v2557, 1
    %v2559 = vmax.f32 %v2557, %v2558
    %v2560 = vsel %vm2510, %v2375, -inf
    %v2561 = vrot.slane %v2560, 4
    %v2562 = vmax.f32 %v2560, %v2561
    %v2563 = vrot.slane %v2562, 2
    %v2564 = vmax.f32 %v2562, %v2563
    %v2565 = vrot.slane %v2564, 1
    %v2566 = vmax.f32 %v2564, %v2565
    %v2567 = vsel %vm2510, %v2383, -inf
    %v2568 = vrot.slane %v2567, 4
    %v2569 = vmax.f32 %v2567, %v2568
    %v2570 = vrot.slane %v2569, 2
    %v2571 = vmax.f32 %v2569, %v2570
    %v2572 = vrot.slane %v2571, 1
    %v2573 = vmax.f32 %v2571, %v2572
    %v2574 = vsel %vm2510, %v2391, -inf
    %v2575 = vrot.slane %v2574, 4
    %v2576 = vmax.f32 %v2574, %v2575
    %v2577 = vrot.slane %v2576, 2
    %v2578 = vmax.f32 %v2576, %v2577
    %v2579 = vrot.slane %v2578, 1
    %v2580 = vmax.f32 %v2578, %v2579
    %v2581 = vsel %vm2510, %v2390, -inf
    %v2582 = vrot.slane %v2581, 4
    %v2583 = vmax.f32 %v2581, %v2582
    %v2584 = vrot.slane %v2583, 2
    %v2585 = vmax.f32 %v2583, %v2584
    %v2586 = vrot.slane %v2585, 1
    %v2587 = vmax.f32 %v2585, %v2586
    %v2588 = vsel %vm2510, %v2392, -inf
    %v2589 = vrot.slane %v2588, 4
    %v2590 = vmax.f32 %v2588, %v2589
    %v2591 = vrot.slane %v2590, 2
    %v2592 = vmax.f32 %v2590, %v2591
    %v2593 = vrot.slane %v2592, 1
    %v2594 = vmax.f32 %v2592, %v2593
    %v2595 = vsel %vm2510, %v2400, -inf
    %v2596 = vrot.slane %v2595, 4
    %v2597 = vmax.f32 %v2595, %v2596
    %v2598 = vrot.slane %v2597, 2
    %v2599 = vmax.f32 %v2597, %v2598
    %v2600 = vrot.slane %v2599, 1
    %v2601 = vmax.f32 %v2599, %v2600
    %v2602 = vsel %vm2510, %v2408, -inf
    %v2603 = vrot.slane %v2602, 4
    %v2604 = vmax.f32 %v2602, %v2603
    %v2605 = vrot.slane %v2604, 2
    %v2606 = vmax.f32 %v2604, %v2605
    %v2607 = vrot.slane %v2606, 1
    %v2608 = vmax.f32 %v2606, %v2607
    %v2609 = vsel %vm2510, %v2407, -inf
    %v2610 = vrot.slane %v2609, 4
    %v2611 = vmax.f32 %v2609, %v2610
    %v2612 = vrot.slane %v2611, 2
    %v2613 = vmax.f32 %v2611, %v2612
    %v2614 = vrot.slane %v2613, 1
    %v2615 = vmax.f32 %v2613, %v2614
    %v2616 = vsel %vm2510, %v2409, -inf
    %v2617 = vrot.slane %v2616, 4
    %v2618 = vmax.f32 %v2616, %v2617
    %v2619 = vrot.slane %v2618, 2
    %v2620 = vmax.f32 %v2618, %v2619
    %v2621 = vrot.slane %v2620, 1
    %v2622 = vmax.f32 %v2620, %v2621
    %v2623 = vsel %vm2510, %v2417, -inf
    %v2624 = vrot.slane %v2623, 4
    %v2625 = vmax.f32 %v2623, %v2624
    %v2626 = vrot.slane %v2625, 2
    %v2627 = vmax.f32 %v2625, %v2626
    %v2628 = vrot.slane %v2627, 1
    %v2629 = vmax.f32 %v2627, %v2628
    %v2630 = vsel %vm2510, %v2425, -inf
    %v2631 = vrot.slane %v2630, 4
    %v2632 = vmax.f32 %v2630, %v2631
    %v2633 = vrot.slane %v2632, 2
    %v2634 = vmax.f32 %v2632, %v2633
    %v2635 = vrot.slane %v2634, 1
    %v2636 = vmax.f32 %v2634, %v2635
    %v2637 = vsel %vm2510, %v2424, -inf
    %v2638 = vrot.slane %v2637, 4
    %v2639 = vmax.f32 %v2637, %v2638
    %v2640 = vrot.slane %v2639, 2
    %v2641 = vmax.f32 %v2639, %v2640
    %v2642 = vrot.slane %v2641, 1
    %v2643 = vmax.f32 %v2641, %v2642
    %v2644 = vsel %vm2510, %v2426, -inf
    %v2645 = vrot.slane %v2644, 4
    %v2646 = vmax.f32 %v2644, %v2645
    %v2647 = vrot.slane %v2646, 2
    %v2648 = vmax.f32 %v2646, %v2647
    %v2649 = vrot.slane %v2648, 1
    %v2650 = vmax.f32 %v2648, %v2649
    %v2651 = vsel %vm2510, %v2434, -inf
    %v2652 = vrot.slane %v2651, 4
    %v2653 = vmax.f32 %v2651, %v2652
    %v2654 = vrot.slane %v2653, 2
    %v2655 = vmax.f32 %v2653, %v2654
    %v2656 = vrot.slane %v2655, 1
    %v2657 = vmax.f32 %v2655, %v2656
    %v2658 = vsel %vm2510, %v2442, -inf
    %v2659 = vrot.slane %v2658, 4
    %v2660 = vmax.f32 %v2658, %v2659
    %v2661 = vrot.slane %v2660, 2
    %v2662 = vmax.f32 %v2660, %v2661
    %v2663 = vrot.slane %v2662, 1
    %v2664 = vmax.f32 %v2662, %v2663
    %v2665 = vsel %vm2510, %v2441, -inf
    %v2666 = vrot.slane %v2665, 4
    %v2667 = vmax.f32 %v2665, %v2666
    %v2668 = vrot.slane %v2667, 2
    %v2669 = vmax.f32 %v2667, %v2668
    %v2670 = vrot.slane %v2669, 1
    %v2671 = vmax.f32 %v2669, %v2670
    %v2672 = vsel %vm2510, %v2443, -inf
    %v2673 = vrot.slane %v2672, 4
    %v2674 = vmax.f32 %v2672, %v2673
    %v2675 = vrot.slane %v2674, 2
    %v2676 = vmax.f32 %v2674, %v2675
    %v2677 = vrot.slane %v2676, 1
    %v2678 = vmax.f32 %v2676, %v2677
    %v2679 = vsel %vm2510, %v2451, -inf
    %v2680 = vrot.slane %v2679, 4
    %v2681 = vmax.f32 %v2679, %v2680
    %v2682 = vrot.slane %v2681, 2
    %v2683 = vmax.f32 %v2681, %v2682
    %v2684 = vrot.slane %v2683, 1
    %v2685 = vmax.f32 %v2683, %v2684
    %v2686 = vsel %vm2510, %v2459, -inf
    %v2687 = vrot.slane %v2686, 4
    %v2688 = vmax.f32 %v2686, %v2687
    %v2689 = vrot.slane %v2688, 2
    %v2690 = vmax.f32 %v2688, %v2689
    %v2691 = vrot.slane %v2690, 1
    %v2692 = vmax.f32 %v2690, %v2691
    %v2693 = vsel %vm2510, %v2458, -inf
    %v2694 = vrot.slane %v2693, 4
    %v2695 = vmax.f32 %v2693, %v2694
    %v2696 = vrot.slane %v2695, 2
    %v2697 = vmax.f32 %v2695, %v2696
    %v2698 = vrot.slane %v2697, 1
    %v2699 = vmax.f32 %v2697, %v2698
    %v2700 = vsel %vm2510, %v2460, -inf
    %v2701 = vrot.slane %v2700, 4
    %v2702 = vmax.f32 %v2700, %v2701
    %v2703 = vrot.slane %v2702, 2
    %v2704 = vmax.f32 %v2702, %v2703
    %v2705 = vrot.slane %v2704, 1
    %v2706 = vmax.f32 %v2704, %v2705
    %v2707 = vsel %vm2510, %v2468, -inf
    %v2708 = vrot.slane %v2707, 4
    %v2709 = vmax.f32 %v2707, %v2708
    %v2710 = vrot.slane %v2709, 2
    %v2711 = vmax.f32 %v2709, %v2710
    %v2712 = vrot.slane %v2711, 1
    %v2713 = vmax.f32 %v2711, %v2712
    %v2714 = vsel %vm2510, %v2476, -inf
    %v2715 = vrot.slane %v2714, 4
    %v2716 = vmax.f32 %v2714, %v2715
    %v2717 = vrot.slane %v2716, 2
    %v2718 = vmax.f32 %v2716, %v2717
    %v2719 = vrot.slane %v2718, 1
    %v2720 = vmax.f32 %v2718, %v2719
    %v2721 = vsel %vm2510, %v2475, -inf
    %v2722 = vrot.slane %v2721, 4
    %v2723 = vmax.f32 %v2721, %v2722
    %v2724 = vrot.slane %v2723, 2
    %v2725 = vmax.f32 %v2723, %v2724
    %v2726 = vrot.slane %v2725, 1
    %v2727 = vmax.f32 %v2725, %v2726
    %v2728 = vsel %vm2510, %v2477, -inf
    %v2729 = vrot.slane %v2728, 4
    %v2730 = vmax.f32 %v2728, %v2729
    %v2731 = vrot.slane %v2730, 2
    %v2732 = vmax.f32 %v2730, %v2731
    %v2733 = vrot.slane %v2732, 1
    %v2734 = vmax.f32 %v2732, %v2733
    %v2767 = vsel %vm1202, %v2524, %v2517
    %v2768 = vsel %vm1204, %v2531, %v2767
    %v2769 = vsel %vm1206, %v2538, %v2768
    %v2770 = vsel %vm1208, %v2545, %v2769
    %v2771 = vsel %vm1210, %v2552, %v2770
    %v2772 = vsel %vm1212, %v2559, %v2771
    %v2773 = vsel %vm1214, %v2566, %v2772
    %v2774 = vsel %vm1202, %v2580, %v2573
    %v2775 = vsel %vm1204, %v2587, %v2774
    %v2776 = vsel %vm1206, %v2594, %v2775
    %v2777 = vsel %vm1208, %v2601, %v2776
    %v2778 = vsel %vm1210, %v2608, %v2777
    %v2779 = vsel %vm1212, %v2615, %v2778
    %v2780 = vsel %vm1214, %v2622, %v2779
    %v2781 = vsel %vm1202, %v2636, %v2629
    %v2782 = vsel %vm1204, %v2643, %v2781
    %v2783 = vsel %vm1206, %v2650, %v2782
    %v2784 = vsel %vm1208, %v2657, %v2783
    %v2785 = vsel %vm1210, %v2664, %v2784
    %v2786 = vsel %vm1212, %v2671, %v2785
    %v2787 = vsel %vm1214, %v2678, %v2786
    %v2788 = vsel %vm1202, %v2692, %v2685
    %v2789 = vsel %vm1204, %v2699, %v2788
    %v2790 = vsel %vm1206, %v2706, %v2789
    %v2791 = vsel %vm1208, %v2713, %v2790
    %v2792 = vsel %vm1210, %v2720, %v2791
    %v2793 = vsel %vm1212, %v2727, %v2792
    %v2794 = vsel %vm1214, %v2734, %v2793
    %v2799 = vrot.slane %v2773, 7
    %v2800 = vrot.slane %v2787, 7
    %v2801 = vrot.slane %v2780, 7
    %v2802 = vrot.slane %v2794, 7
    %v2803 = vsel %vm1342, %v2799, %v2801
    %v2804 = vsel %vm1342, %v2800, %v2802
    %v2805 = vsel %vm1342, %v2801, %v2799
    %v2806 = vsel %vm1342, %v2802, %v2800
    %vm2807 = vcmp.lt.s32.totalorder %v1351, 16
    %vm2808 = vcmp.lt.s32.totalorder %v1352, 16
    %vm2809 = vmand %vm1355, %vm2807
    %vm2810 = vmand %vm1356, %vm2808
    %v2811 = vsel %vm2809, 1, 0
    %v2812 = vsel %vm2810, 1, 0
    %vm2813 = vcmp.eq.s32.totalorder %v2811, 1
    %vm2814 = vcmp.eq.s32.totalorder %v2812, 1
    %v2815 = vsel %vm2813, %v2805, 0.0
    %v2816 = vsel %vm2814, %v2803, 0.0
    %v2817 = vsel %vm2813, %v2806, 0.0
    %v2818 = vsel %vm2814, %v2804, 0.0
    %v2819 = vpack.c.bf16 %v2816, %v2815
    %v2820 = vpack.c.bf16 %v2818, %v2817
    %v2821 = vld [vmem:[#allocation5] sm:$0xff]
    %v2822 = vld [vmem:[#allocation5 + $0x8] sm:$0xff]
    %v2823 = vld [vmem:[#allocation5 + $0x10] sm:$0xff]
    %v2824 = vld [vmem:[#allocation5 + $0x18] sm:$0xff]
    %v2825 = vld [vmem:[#allocation5 + $0x20] sm:$0xff]
    %v2826 = vld [vmem:[#allocation5 + $0x28] sm:$0xff]
    %v2827 = vld [vmem:[#allocation5 + $0x30] sm:$0xff]
    %v2828 = vld [vmem:[#allocation5 + $0x38] sm:$0xff]
    %v2829 = vld [vmem:[#allocation5 + $0x40] sm:$0xff]
    %v2830 = vld [vmem:[#allocation5 + $0x48] sm:$0xff]
    %v2831 = vld [vmem:[#allocation5 + $0x50] sm:$0xff]
    %v2832 = vld [vmem:[#allocation5 + $0x58] sm:$0xff]
    %v2833 = vld [vmem:[#allocation5 + $0x60] sm:$0xff]
    %v2834 = vld [vmem:[#allocation5 + $0x68] sm:$0xff]
    %v2835 = vld [vmem:[#allocation5 + $0x70] sm:$0xff]
    %v2836 = vld [vmem:[#allocation5 + $0x78] sm:$0xff]
    %v2837 = vpack.c.bf16 %v2517, %v2517
    %v2838 = vpack.c.bf16 %v2524, %v2524
    %v2839 = vpack.c.bf16 %v2531, %v2531
    %v2840 = vpack.c.bf16 %v2538, %v2538
    %v2841 = vpack.c.bf16 %v2545, %v2545
    %v2842 = vpack.c.bf16 %v2552, %v2552
    %v2843 = vpack.c.bf16 %v2559, %v2559
    %v2844 = vpack.c.bf16 %v2566, %v2566
    %v2845 = vpack.c.bf16 %v2573, %v2573
    %v2846 = vpack.c.bf16 %v2580, %v2580
    %v2847 = vpack.c.bf16 %v2587, %v2587
    %v2848 = vpack.c.bf16 %v2594, %v2594
    %v2849 = vpack.c.bf16 %v2601, %v2601
    %v2850 = vpack.c.bf16 %v2608, %v2608
    %v2851 = vpack.c.bf16 %v2615, %v2615
    %v2852 = vpack.c.bf16 %v2622, %v2622
    %v2853 = vpack.c.bf16 %v2629, %v2629
    %v2854 = vpack.c.bf16 %v2636, %v2636
    %v2855 = vpack.c.bf16 %v2643, %v2643
    %v2856 = vpack.c.bf16 %v2650, %v2650
    %v2857 = vpack.c.bf16 %v2657, %v2657
    %v2858 = vpack.c.bf16 %v2664, %v2664
    %v2859 = vpack.c.bf16 %v2671, %v2671
    %v2860 = vpack.c.bf16 %v2678, %v2678
    %v2861 = vpack.c.bf16 %v2685, %v2685
    %v2862 = vpack.c.bf16 %v2692, %v2692
    %v2863 = vpack.c.bf16 %v2699, %v2699
    %v2864 = vpack.c.bf16 %v2706, %v2706
    %v2865 = vpack.c.bf16 %v2713, %v2713
    %v2866 = vpack.c.bf16 %v2720, %v2720
    %v2867 = vpack.c.bf16 %v2727, %v2727
    %v2868 = vpack.c.bf16 %v2734, %v2734
    %s2869 = scalar_lea.vmem [#allocation5], 128
    %v2870 = vld [vmem:[%s2869] sm:$0xff]
    %v2871 = vld [vmem:[%s2869 + $0x8] sm:$0xff]
    %v2872 = vld [vmem:[%s2869 + $0x10] sm:$0xff]
    %v2873 = vld [vmem:[%s2869 + $0x18] sm:$0xff]
    %v2874 = vld [vmem:[%s2869 + $0x20] sm:$0xff]
    %v2875 = vld [vmem:[%s2869 + $0x28] sm:$0xff]
    %v2876 = vld [vmem:[%s2869 + $0x30] sm:$0xff]
    %v2877 = vld [vmem:[%s2869 + $0x38] sm:$0xff]
    %v2878 = vld [vmem:[%s2869 + $0x40] sm:$0xff]
    %v2879 = vld [vmem:[%s2869 + $0x48] sm:$0xff]
    %v2880 = vld [vmem:[%s2869 + $0x50] sm:$0xff]
    %v2881 = vld [vmem:[%s2869 + $0x58] sm:$0xff]
    %v2882 = vld [vmem:[%s2869 + $0x60] sm:$0xff]
    %v2883 = vld [vmem:[%s2869 + $0x68] sm:$0xff]
    %v2884 = vld [vmem:[%s2869 + $0x70] sm:$0xff]
    %v2885 = vld [vmem:[%s2869 + $0x78] sm:$0xff]
    %v2918 = vunpack.c.l.b16 %v2837
    %v2919 = vunpack.c.l.b16 %v2838
    %v2920 = vunpack.c.l.b16 %v2839
    %v2921 = vunpack.c.l.b16 %v2840
    %v2922 = vunpack.c.l.b16 %v2841
    %v2923 = vunpack.c.l.b16 %v2842
    %v2924 = vunpack.c.l.b16 %v2843
    %v2925 = vunpack.c.l.b16 %v2844
    %v2926 = vunpack.c.l.b16 %v2845
    %v2927 = vunpack.c.l.b16 %v2846
    %v2928 = vunpack.c.l.b16 %v2847
    %v2929 = vunpack.c.l.b16 %v2848
    %v2930 = vunpack.c.l.b16 %v2849
    %v2931 = vunpack.c.l.b16 %v2850
    %v2932 = vunpack.c.l.b16 %v2851
    %v2933 = vunpack.c.l.b16 %v2852
    %v2934 = vunpack.c.l.b16 %v2853
    %v2935 = vunpack.c.l.b16 %v2854
    %v2936 = vunpack.c.l.b16 %v2855
    %v2937 = vunpack.c.l.b16 %v2856
    %v2938 = vunpack.c.l.b16 %v2857
    %v2939 = vunpack.c.l.b16 %v2858
    %v2940 = vunpack.c.l.b16 %v2859
    %v2941 = vunpack.c.l.b16 %v2860
    %v2942 = vunpack.c.l.b16 %v2861
    %v2943 = vunpack.c.l.b16 %v2862
    %v2944 = vunpack.c.l.b16 %v2863
    %v2945 = vunpack.c.l.b16 %v2864
    %v2946 = vunpack.c.l.b16 %v2865
    %v2947 = vunpack.c.l.b16 %v2866
    %v2948 = vunpack.c.l.b16 %v2867
    %v2949 = vunpack.c.l.b16 %v2868
    %v2950 = vsel %vm1202, %v2919, %v2918
    %v2951 = vsel %vm1204, %v2920, %v2950
    %v2952 = vsel %vm1206, %v2921, %v2951
    %v2953 = vsel %vm1208, %v2922, %v2952
    %v2954 = vsel %vm1210, %v2923, %v2953
    %v2955 = vsel %vm1212, %v2924, %v2954
    %v2956 = vsel %vm1214, %v2925, %v2955
    %v2957 = vsel %vm1202, %v2927, %v2926
    %v2958 = vsel %vm1204, %v2928, %v2957
    %v2959 = vsel %vm1206, %v2929, %v2958
    %v2960 = vsel %vm1208, %v2930, %v2959
    %v2961 = vsel %vm1210, %v2931, %v2960
    %v2962 = vsel %vm1212, %v2932, %v2961
    %v2963 = vsel %vm1214, %v2933, %v2962
    %v2964 = vsel %vm1202, %v2935, %v2934
    %v2965 = vsel %vm1204, %v2936, %v2964
    %v2966 = vsel %vm1206, %v2937, %v2965
    %v2967 = vsel %vm1208, %v2938, %v2966
    %v2968 = vsel %vm1210, %v2939, %v2967
    %v2969 = vsel %vm1212, %v2940, %v2968
    %v2970 = vsel %vm1214, %v2941, %v2969
    %v2971 = vsel %vm1202, %v2943, %v2942
    %v2972 = vsel %vm1204, %v2944, %v2971
    %v2973 = vsel %vm1206, %v2945, %v2972
    %v2974 = vsel %vm1208, %v2946, %v2973
    %v2975 = vsel %vm1210, %v2947, %v2974
    %v2976 = vsel %vm1212, %v2948, %v2975
    %v2977 = vsel %vm1214, %v2949, %v2976
    %v2978 = vpack.c.b16 %v2963, %v2956
    %v2979 = vpack.c.b16 %v2977, %v2970
    %v2998 = vunpack.c.l.b16 %v2870
    %v2999 = vunpack.c.h.b16 %v2870
    %v3000 = vunpack.c.l.b16 %v2871
    %v3001 = vunpack.c.h.b16 %v2871
    %v3002 = vunpack.c.l.b16 %v2872
    %v3003 = vunpack.c.h.b16 %v2872
    %v3004 = vunpack.c.l.b16 %v2873
    %v3005 = vunpack.c.h.b16 %v2873
    %v3006 = vunpack.c.l.b16 %v2874
    %v3007 = vunpack.c.h.b16 %v2874
    %v3008 = vunpack.c.l.b16 %v2875
    %v3009 = vunpack.c.h.b16 %v2875
    %v3010 = vunpack.c.l.b16 %v2876
    %v3011 = vunpack.c.h.b16 %v2876
    %v3012 = vunpack.c.l.b16 %v2877
    %v3013 = vunpack.c.h.b16 %v2877
    %v3014 = vunpack.c.l.b16 %v2878
    %v3015 = vunpack.c.h.b16 %v2878
    %v3016 = vunpack.c.l.b16 %v2879
    %v3017 = vunpack.c.h.b16 %v2879
    %v3018 = vunpack.c.l.b16 %v2880
    %v3019 = vunpack.c.h.b16 %v2880
    %v3020 = vunpack.c.l.b16 %v2881
    %v3021 = vunpack.c.h.b16 %v2881
    %v3022 = vunpack.c.l.b16 %v2882
    %v3023 = vunpack.c.h.b16 %v2882
    %v3024 = vunpack.c.l.b16 %v2883
    %v3025 = vunpack.c.h.b16 %v2883
    %v3026 = vunpack.c.l.b16 %v2884
    %v3027 = vunpack.c.h.b16 %v2884
    %v3028 = vunpack.c.l.b16 %v2885
    %v3029 = vunpack.c.h.b16 %v2885
    %v3030 = vpack.c.b16 %v3000, %v2998
    %v3031 = vpack.c.b16 %v3001, %v2999
    %v3032 = vpack.c.b16 %v3004, %v3002
    %v3033 = vpack.c.b16 %v3005, %v3003
    %v3034 = vpack.c.b16 %v3008, %v3006
    %v3035 = vpack.c.b16 %v3009, %v3007
    %v3036 = vpack.c.b16 %v3012, %v3010
    %v3037 = vpack.c.b16 %v3013, %v3011
    %v3038 = vpack.c.b16 %v3016, %v3014
    %v3039 = vpack.c.b16 %v3017, %v3015
    %v3040 = vpack.c.b16 %v3020, %v3018
    %v3041 = vpack.c.b16 %v3021, %v3019
    %v3042 = vpack.c.b16 %v3024, %v3022
    %v3043 = vpack.c.b16 %v3025, %v3023
    %v3044 = vpack.c.b16 %v3028, %v3026
    %v3045 = vpack.c.b16 %v3029, %v3027
    %3062 = vmatprep.subr.bf16.mxu0 %v3031
    %3063 = vmatpush1.bf16.msra.mxu0 %v3030
    %3064 = vmatprep.subr.bf16.mxu0 %v3033
    %3065 = vmatpush1.bf16.msra.mxu0 %v3032
    %3066 = vmatprep.subr.bf16.mxu0 %v3035
    %3067 = vmatpush1.bf16.msra.mxu0 %v3034
    %3068 = vmatprep.subr.bf16.mxu0 %v3037
    %3069 = vmatpush1.bf16.msra.mxu0 %v3036
    %3070 = vmatprep.subr.bf16.mxu0 %v3039
    %3071 = vmatpush1.bf16.msra.mxu0 %v3038
    %3072 = vmatprep.subr.bf16.mxu0 %v3041
    %3073 = vmatpush1.bf16.msra.mxu0 %v3040
    %3074 = vmatprep.subr.bf16.mxu0 %v3043
    %3075 = vmatpush1.bf16.msra.mxu0 %v3042
    %3076 = vmatprep.subr.bf16.mxu0 %v3045
    %3077 = vmatpush1.bf16.msra.mxu0 %v3044
    %3078 = vmatprep.subr.bf16.mxu0 0
    %3079 = vmatpush1.bf16.msra.mxu0 0
    %3080 = vmatprep.subr.bf16.mxu0 0
    %3081 = vmatpush1.bf16.msra.mxu0 0
    %3082 = vmatprep.subr.bf16.mxu0 0
    %3083 = vmatpush1.bf16.msra.mxu0 0
    %3084 = vmatprep.subr.bf16.mxu0 0
    %3085 = vmatpush1.bf16.msra.mxu0 0
    %3086 = vmatprep.subr.bf16.mxu0 0
    %3087 = vmatpush1.bf16.msra.mxu0 0
    %3088 = vmatprep.subr.bf16.mxu0 0
    %3089 = vmatpush1.bf16.msra.mxu0 0
    %3090 = vmatprep.subr.bf16.mxu0 0
    %3091 = vmatpush1.bf16.msra.mxu0 0
    %3092 = vmatprep.subr.bf16.mxu0 0
    %3093 = vmatpush1.bf16.msra.mxu0 0
    %3094 = vmatprep.mubr.bf16.mxu0 0
    %3095 = vmatmul.mubr.bf16.gmra.mrb[0].mxu0 %v2978
    %v3096 = vpop.f32.mrb[0].mxu0
    %v3097 = vadd.f32 0.0, %v3096
    %v3098 = vpop.f32.mrb[0].mxu0
    %v3099 = vadd.f32 0.0, %v3098
    %v3100 = vpop.f32.mrb[0].mxu0
    %v3101 = vadd.f32 0.0, %v3100
    %v3102 = vpop.f32.mrb[0].mxu0
    %v3103 = vadd.f32 0.0, %v3102
    %3104 = vmatprep.mubr.bf16.mxu0 0
    %3105 = vmatmul.mubr.bf16.gmra.mrb[0].mxu0 %v2979
    %v3106 = vpop.f32.mrb[0].mxu0
    %v3107 = vadd.f32 0.0, %v3106
    %v3108 = vpop.f32.mrb[0].mxu0
    %v3109 = vadd.f32 0.0, %v3108
    %v3110 = vpop.f32.mrb[0].mxu0
    %v3111 = vadd.f32 0.0, %v3110
    %v3112 = vpop.f32.mrb[0].mxu0
    %v3113 = vadd.f32 0.0, %v3112
    %3114 = vdwg.mxu0
    %v3131 = vunpack.c.l.b16 %v2821
    %v3132 = vunpack.c.h.b16 %v2821
    %v3133 = vunpack.c.l.b16 %v2822
    %v3134 = vunpack.c.h.b16 %v2822
    %v3135 = vunpack.c.l.b16 %v2823
    %v3136 = vunpack.c.h.b16 %v2823
    %v3137 = vunpack.c.l.b16 %v2824
    %v3138 = vunpack.c.h.b16 %v2824
    %v3139 = vunpack.c.l.b16 %v2825
    %v3140 = vunpack.c.h.b16 %v2825
    %v3141 = vunpack.c.l.b16 %v2826
    %v3142 = vunpack.c.h.b16 %v2826
    %v3143 = vunpack.c.l.b16 %v2827
    %v3144 = vunpack.c.h.b16 %v2827
    %v3145 = vunpack.c.l.b16 %v2828
    %v3146 = vunpack.c.h.b16 %v2828
    %v3147 = vunpack.c.l.b16 %v2829
    %v3148 = vunpack.c.h.b16 %v2829
    %v3149 = vunpack.c.l.b16 %v2830
    %v3150 = vunpack.c.h.b16 %v2830
    %v3151 = vunpack.c.l.b16 %v2831
    %v3152 = vunpack.c.h.b16 %v2831
    %v3153 = vunpack.c.l.b16 %v2832
    %v3154 = vunpack.c.h.b16 %v2832
    %v3155 = vunpack.c.l.b16 %v2833
    %v3156 = vunpack.c.h.b16 %v2833
    %v3157 = vunpack.c.l.b16 %v2834
    %v3158 = vunpack.c.h.b16 %v2834
    %v3159 = vunpack.c.l.b16 %v2835
    %v3160 = vunpack.c.h.b16 %v2835
    %v3161 = vunpack.c.l.b16 %v2836
    %v3162 = vunpack.c.h.b16 %v2836
    %v3163 = vpack.c.b16 %v3133, %v3131
    %v3164 = vpack.c.b16 %v3134, %v3132
    %v3165 = vpack.c.b16 %v3137, %v3135
    %v3166 = vpack.c.b16 %v3138, %v3136
    %v3167 = vpack.c.b16 %v3141, %v3139
    %v3168 = vpack.c.b16 %v3142, %v3140
    %v3169 = vpack.c.b16 %v3145, %v3143
    %v3170 = vpack.c.b16 %v3146, %v3144
    %v3171 = vpack.c.b16 %v3149, %v3147
    %v3172 = vpack.c.b16 %v3150, %v3148
    %v3173 = vpack.c.b16 %v3153, %v3151
    %v3174 = vpack.c.b16 %v3154, %v3152
    %v3175 = vpack.c.b16 %v3157, %v3155
    %v3176 = vpack.c.b16 %v3158, %v3156
    %v3177 = vpack.c.b16 %v3161, %v3159
    %v3178 = vpack.c.b16 %v3162, %v3160
    %3195 = vmatprep.subr.bf16.mxu0 %v3164
    %3196 = vmatpush1.bf16.msra.mxu0 %v3163
    %3197 = vmatprep.subr.bf16.mxu0 %v3166
    %3198 = vmatpush1.bf16.msra.mxu0 %v3165
    %3199 = vmatprep.subr.bf16.mxu0 %v3168
    %3200 = vmatpush1.bf16.msra.mxu0 %v3167
    %3201 = vmatprep.subr.bf16.mxu0 %v3170
    %3202 = vmatpush1.bf16.msra.mxu0 %v3169
    %3203 = vmatprep.subr.bf16.mxu0 %v3172
    %3204 = vmatpush1.bf16.msra.mxu0 %v3171
    %3205 = vmatprep.subr.bf16.mxu0 %v3174
    %3206 = vmatpush1.bf16.msra.mxu0 %v3173
    %3207 = vmatprep.subr.bf16.mxu0 %v3176
    %3208 = vmatpush1.bf16.msra.mxu0 %v3175
    %3209 = vmatprep.subr.bf16.mxu0 %v3178
    %3210 = vmatpush1.bf16.msra.mxu0 %v3177
    %3211 = vmatprep.subr.bf16.mxu0 0
    %3212 = vmatpush1.bf16.msra.mxu0 0
    %3213 = vmatprep.subr.bf16.mxu0 0
    %3214 = vmatpush1.bf16.msra.mxu0 0
    %3215 = vmatprep.subr.bf16.mxu0 0
    %3216 = vmatpush1.bf16.msra.mxu0 0
    %3217 = vmatprep.subr.bf16.mxu0 0
    %3218 = vmatpush1.bf16.msra.mxu0 0
    %3219 = vmatprep.subr.bf16.mxu0 0
    %3220 = vmatpush1.bf16.msra.mxu0 0
    %3221 = vmatprep.subr.bf16.mxu0 0
    %3222 = vmatpush1.bf16.msra.mxu0 0
    %3223 = vmatprep.subr.bf16.mxu0 0
    %3224 = vmatpush1.bf16.msra.mxu0 0
    %3225 = vmatprep.subr.bf16.mxu0 0
    %3226 = vmatpush1.bf16.msra.mxu0 0
    %3227 = vmatprep.mubr.bf16.mxu0 0
    %3228 = vmatmul.mubr.bf16.gmra.mrb[0].mxu0 %v2819
    %v3229 = vpop.f32.mrb[0].mxu0
    %v3230 = vadd.f32 %v3097, %v3229
    %v3231 = vpop.f32.mrb[0].mxu0
    %v3232 = vadd.f32 %v3099, %v3231
    %v3233 = vpop.f32.mrb[0].mxu0
    %v3234 = vadd.f32 %v3101, %v3233
    %v3235 = vpop.f32.mrb[0].mxu0
    %v3236 = vadd.f32 %v3103, %v3235
    %3237 = vmatprep.mubr.bf16.mxu0 0
    %3238 = vmatmul.mubr.bf16.gmra.mrb[0].mxu0 %v2820
    %v3239 = vpop.f32.mrb[0].mxu0
    %v3240 = vadd.f32 %v3107, %v3239
    %v3241 = vpop.f32.mrb[0].mxu0
    %v3242 = vadd.f32 %v3109, %v3241
    %v3243 = vpop.f32.mrb[0].mxu0
    %v3244 = vadd.f32 %v3111, %v3243
    %v3245 = vpop.f32.mrb[0].mxu0
    %v3246 = vadd.f32 %v3113, %v3245
    %3247 = vdwg.mxu0
    %v3248 = vrot.slane %v2773, 1
    %v3249 = vrot.slane %v2787, 1
    %v3250 = vrot.slane %v2780, 1
    %v3251 = vrot.slane %v2794, 1
    %v3252 = vsel %vm1977, %v3248, %v3250
    %v3253 = vsel %vm1977, %v3249, %v3251
    %v3254 = vsel %vm1977, %v3250, %v3248
    %v3255 = vsel %vm1977, %v3251, %v3249
    %vm3256 = vcmp.lt.s32.totalorder %v1986, 16
    %vm3257 = vcmp.lt.s32.totalorder %v1987, 16
    %vm3258 = vmand %vm1990, %vm3256
    %vm3259 = vmand %vm1991, %vm3257
    %v3260 = vsel %vm3258, 1, 0
    %v3261 = vsel %vm3259, 1, 0
    %vm3262 = vcmp.eq.s32.totalorder %v3260, 1
    %vm3263 = vcmp.eq.s32.totalorder %v3261, 1
    %v3264 = vsel %vm3262, %v3252, 0.0
    %v3265 = vsel %vm3263, %v3254, 0.0
    %v3266 = vsel %vm3262, %v3253, 0.0
    %v3267 = vsel %vm3263, %v3255, 0.0
    %v3268 = vpack.c.bf16 %v3265, %v3264
    %v3269 = vpack.c.bf16 %v3267, %v3266
    %s3270 = scalar_lea.vmem [#allocation5], 256
    %v3271 = vld [vmem:[%s3270] sm:$0xff]
    %v3272 = vld [vmem:[%s3270 + $0x8] sm:$0xff]
    %v3273 = vld [vmem:[%s3270 + $0x10] sm:$0xff]
    %v3274 = vld [vmem:[%s3270 + $0x18] sm:$0xff]
    %v3275 = vld [vmem:[%s3270 + $0x20] sm:$0xff]
    %v3276 = vld [vmem:[%s3270 + $0x28] sm:$0xff]
    %v3277 = vld [vmem:[%s3270 + $0x30] sm:$0xff]
    %v3278 = vld [vmem:[%s3270 + $0x38] sm:$0xff]
    %v3279 = vld [vmem:[%s3270 + $0x40] sm:$0xff]
    %v3280 = vld [vmem:[%s3270 + $0x48] sm:$0xff]
    %v3281 = vld [vmem:[%s3270 + $0x50] sm:$0xff]
    %v3282 = vld [vmem:[%s3270 + $0x58] sm:$0xff]
    %v3283 = vld [vmem:[%s3270 + $0x60] sm:$0xff]
    %v3284 = vld [vmem:[%s3270 + $0x68] sm:$0xff]
    %v3285 = vld [vmem:[%s3270 + $0x70] sm:$0xff]
    %v3286 = vld [vmem:[%s3270 + $0x78] sm:$0xff]
    %v3303 = vunpack.c.l.b16 %v3271
    %v3304 = vunpack.c.h.b16 %v3271
    %v3305 = vunpack.c.l.b16 %v3272
    %v3306 = vunpack.c.h.b16 %v3272
    %v3307 = vunpack.c.l.b16 %v3273
    %v3308 = vunpack.c.h.b16 %v3273
    %v3309 = vunpack.c.l.b16 %v3274
    %v3310 = vunpack.c.h.b16 %v3274
    %v3311 = vunpack.c.l.b16 %v3275
    %v3312 = vunpack.c.h.b16 %v3275
    %v3313 = vunpack.c.l.b16 %v3276
    %v3314 = vunpack.c.h.b16 %v3276
    %v3315 = vunpack.c.l.b16 %v3277
    %v3316 = vunpack.c.h.b16 %v3277
    %v3317 = vunpack.c.l.b16 %v3278
    %v3318 = vunpack.c.h.b16 %v3278
    %v3319 = vunpack.c.l.b16 %v3279
    %v3320 = vunpack.c.h.b16 %v3279
    %v3321 = vunpack.c.l.b16 %v3280
    %v3322 = vunpack.c.h.b16 %v3280
    %v3323 = vunpack.c.l.b16 %v3281
    %v3324 = vunpack.c.h.b16 %v3281
    %v3325 = vunpack.c.l.b16 %v3282
    %v3326 = vunpack.c.h.b16 %v3282
    %v3327 = vunpack.c.l.b16 %v3283
    %v3328 = vunpack.c.h.b16 %v3283
    %v3329 = vunpack.c.l.b16 %v3284
    %v3330 = vunpack.c.h.b16 %v3284
    %v3331 = vunpack.c.l.b16 %v3285
    %v3332 = vunpack.c.h.b16 %v3285
    %v3333 = vunpack.c.l.b16 %v3286
    %v3334 = vunpack.c.h.b16 %v3286
    %v3335 = vpack.c.b16 %v3305, %v3303
    %v3336 = vpack.c.b16 %v3306, %v3304
    %v3337 = vpack.c.b16 %v3309, %v3307
    %v3338 = vpack.c.b16 %v3310, %v3308
    %v3339 = vpack.c.b16 %v3313, %v3311
    %v3340 = vpack.c.b16 %v3314, %v3312
    %v3341 = vpack.c.b16 %v3317, %v3315
    %v3342 = vpack.c.b16 %v3318, %v3316
    %v3343 = vpack.c.b16 %v3321, %v3319
    %v3344 = vpack.c.b16 %v3322, %v3320
    %v3345 = vpack.c.b16 %v3325, %v3323
    %v3346 = vpack.c.b16 %v3326, %v3324
    %v3347 = vpack.c.b16 %v3329, %v3327
    %v3348 = vpack.c.b16 %v3330, %v3328
    %v3349 = vpack.c.b16 %v3333, %v3331
    %v3350 = vpack.c.b16 %v3334, %v3332
    %3367 = vmatprep.subr.bf16.mxu0 %v3336
    %3368 = vmatpush1.bf16.msra.mxu0 %v3335
    %3369 = vmatprep.subr.bf16.mxu0 %v3338
    %3370 = vmatpush1.bf16.msra.mxu0 %v3337
    %3371 = vmatprep.subr.bf16.mxu0 %v3340
    %3372 = vmatpush1.bf16.msra.mxu0 %v3339
    %3373 = vmatprep.subr.bf16.mxu0 %v3342
    %3374 = vmatpush1.bf16.msra.mxu0 %v3341
    %3375 = vmatprep.subr.bf16.mxu0 %v3344
    %3376 = vmatpush1.bf16.msra.mxu0 %v3343
    %3377 = vmatprep.subr.bf16.mxu0 %v3346
    %3378 = vmatpush1.bf16.msra.mxu0 %v3345
    %3379 = vmatprep.subr.bf16.mxu0 %v3348
    %3380 = vmatpush1.bf16.msra.mxu0 %v3347
    %3381 = vmatprep.subr.bf16.mxu0 %v3350
    %3382 = vmatpush1.bf16.msra.mxu0 %v3349
    %3383 = vmatprep.subr.bf16.mxu0 0
    %3384 = vmatpush1.bf16.msra.mxu0 0
    %3385 = vmatprep.subr.bf16.mxu0 0
    %3386 = vmatpush1.bf16.msra.mxu0 0
    %3387 = vmatprep.subr.bf16.mxu0 0
    %3388 = vmatpush1.bf16.msra.mxu0 0
    %3389 = vmatprep.subr.bf16.mxu0 0
    %3390 = vmatpush1.bf16.msra.mxu0 0
    %3391 = vmatprep.subr.bf16.mxu0 0
    %3392 = vmatpush1.bf16.msra.mxu0 0
    %3393 = vmatprep.subr.bf16.mxu0 0
    %3394 = vmatpush1.bf16.msra.mxu0 0
    %3395 = vmatprep.subr.bf16.mxu0 0
    %3396 = vmatpush1.bf16.msra.mxu0 0
    %3397 = vmatprep.subr.bf16.mxu0 0
    %3398 = vmatpush1.bf16.msra.mxu0 0
    %3399 = vmatprep.mubr.bf16.mxu0 0
    %3400 = vmatmul.mubr.bf16.gmra.mrb[0].mxu0 %v3268
    %v3401 = vpop.f32.mrb[0].mxu0
    %v3402 = vadd.f32 0.0, %v3401
    %v3403 = vpop.f32.mrb[0].mxu0
    %v3404 = vadd.f32 0.0, %v3403
    %v3405 = vpop.f32.mrb[0].mxu0
    %v3406 = vadd.f32 0.0, %v3405
    %v3407 = vpop.f32.mrb[0].mxu0
    %v3408 = vadd.f32 0.0, %v3407
    %3409 = vmatprep.mubr.bf16.mxu0 0
    %3410 = vmatmul.mubr.bf16.gmra.mrb[0].mxu0 %v3269
    %v3411 = vpop.f32.mrb[0].mxu0
    %v3412 = vadd.f32 0.0, %v3411
    %v3413 = vpop.f32.mrb[0].mxu0
    %v3414 = vadd.f32 0.0, %v3413
    %v3415 = vpop.f32.mrb[0].mxu0
    %v3416 = vadd.f32 0.0, %v3415
    %v3417 = vpop.f32.mrb[0].mxu0
    %v3418 = vadd.f32 0.0, %v3417
    %3419 = vdwg.mxu0
    %v3420 = vadd.f32 %v3230, %v3402
    %v3421 = vadd.f32 %v3232, %v3404
    %v3422 = vadd.f32 %v3234, %v3406
    %v3423 = vadd.f32 %v3236, %v3408
    %v3424 = vadd.f32 %v3240, %v3412
    %v3425 = vadd.f32 %v3242, %v3414
    %v3426 = vadd.f32 %v3244, %v3416
    %v3427 = vadd.f32 %v3246, %v3418
    %v3428 = vld [vmem:[%s6] sm:$0x3]
    %v3430 = vlaneseq
    %v3431 = vshrl.u32 %v3430, 7
    %v3432 = vsub.s32 0, %v3431
    %v3433 = vrot.slane %v3428, %v3432
    %v3434 = vlaneseq
    %v3435 = vshrl.u32 %v3434, 7
    %v3436 = vsub.s32 1, %v3435
    %v3437 = vrot.slane %v3428, %v3436
    %v3440 = vadd.f32 %v3420, %v3433
    %v3441 = vadd.f32 %v3421, %v3437
    %v3442 = vadd.f32 %v3422, %v3433
    %v3443 = vadd.f32 %v3423, %v3437
    %v3444 = vadd.f32 %v3424, %v3433
    %v3445 = vadd.f32 %v3425, %v3437
    %v3446 = vadd.f32 %v3426, %v3433
    %v3447 = vadd.f32 %v3427, %v3437
    %v3448 = vmax.f32 %v3440, 0.0
    %v3449 = vmax.f32 %v3441, 0.0
    %v3450 = vmax.f32 %v3442, 0.0
    %v3451 = vmax.f32 %v3443, 0.0
    %v3452 = vmax.f32 %v3444, 0.0
    %v3453 = vmax.f32 %v3445, 0.0
    %v3454 = vmax.f32 %v3446, 0.0
    %v3455 = vmax.f32 %v3447, 0.0
    %v3464 = vcombine.low %v3448, %v3449
    %v3465 = vcombine.high %v3448, %v3449
    %v3467 = vunpack.c.l.s4 1983009808
    %v3468 = vunpack.c.0.s8 %v3467
    %v3469 = vlaneseq
    %v3470 = vshrl.u32 %v3469, 7
    %v3471 = vsub.s32 %v3468, %v3470
    %v3472 = vrot.slane %v3464, %v3471
    %v3474 = vunpack.c.l.s4 1983009808
    %v3475 = vunpack.c.0.s8 %v3474
    %v3476 = vlaneseq
    %v3477 = vshrl.u32 %v3476, 7
    %v3478 = vsub.s32 %v3475, %v3477
    %v3479 = vrot.slane %v3465, %v3478
    %v3480 = vcombine.high %v3472, %v3472
    %v3481 = vcombine.high %v3479, %v3479
    %v3482 = vcombine.low %v3450, %v3451
    %v3483 = vcombine.high %v3450, %v3451
    %v3485 = vunpack.c.l.s4 1983009808
    %v3486 = vunpack.c.0.s8 %v3485
    %v3487 = vlaneseq
    %v3488 = vshrl.u32 %v3487, 7
    %v3489 = vsub.s32 %v3486, %v3488
    %v3490 = vrot.slane %v3482, %v3489
    %v3492 = vunpack.c.l.s4 1983009808
    %v3493 = vunpack.c.0.s8 %v3492
    %v3494 = vlaneseq
    %v3495 = vshrl.u32 %v3494, 7
    %v3496 = vsub.s32 %v3493, %v3495
    %v3497 = vrot.slane %v3483, %v3496
    %v3498 = vcombine.high %v3490, %v3490
    %v3499 = vcombine.high %v3497, %v3497
    %v3500 = vcombine.low %v3452, %v3453
    %v3501 = vcombine.high %v3452, %v3453
    %v3503 = vunpack.c.l.s4 1983009808
    %v3504 = vunpack.c.0.s8 %v3503
    %v3505 = vlaneseq
    %v3506 = vshrl.u32 %v3505, 7
    %v3507 = vsub.s32 %v3504, %v3506
    %v3508 = vrot.slane %v3500, %v3507
    %v3510 = vunpack.c.l.s4 1983009808
    %v3511 = vunpack.c.0.s8 %v3510
    %v3512 = vlaneseq
    %v3513 = vshrl.u32 %v3512, 7
    %v3514 = vsub.s32 %v3511, %v3513
    %v3515 = vrot.slane %v3501, %v3514
    %v3516 = vcombine.high %v3508, %v3508
    %v3517 = vcombine.high %v3515, %v3515
    %v3518 = vcombine.low %v3454, %v3455
    %v3519 = vcombine.high %v3454, %v3455
    %v3521 = vunpack.c.l.s4 1983009808
    %v3522 = vunpack.c.0.s8 %v3521
    %v3523 = vlaneseq
    %v3524 = vshrl.u32 %v3523, 7
    %v3525 = vsub.s32 %v3522, %v3524
    %v3526 = vrot.slane %v3518, %v3525
    %v3528 = vunpack.c.l.s4 1983009808
    %v3529 = vunpack.c.0.s8 %v3528
    %v3530 = vlaneseq
    %v3531 = vshrl.u32 %v3530, 7
    %v3532 = vsub.s32 %v3529, %v3531
    %v3533 = vrot.slane %v3519, %v3532
    %v3534 = vcombine.high %v3526, %v3526
    %v3535 = vcombine.high %v3533, %v3533
    %v3537 = vunpack.c.l.s4 1983009808
    %v3538 = vunpack.c.0.s8 %v3537
    %v3539 = vlaneseq
    %v3540 = vshrl.u32 %v3539, 7
    %v3541 = vsub.s32 %v3538, %v3540
    %v3542 = vrot.slane %v3472, %v3541
    %v3543 = vcombine.high %v3542, %v3542
    %v3545 = vunpack.c.l.s4 1983009808
    %v3546 = vunpack.c.0.s8 %v3545
    %v3547 = vlaneseq
    %v3548 = vshrl.u32 %v3547, 7
    %v3549 = vsub.s32 %v3546, %v3548
    %v3550 = vrot.slane %v3480, %v3549
    %v3551 = vcombine.high %v3550, %v3550
    %v3553 = vunpack.c.l.s4 1983009808
    %v3554 = vunpack.c.0.s8 %v3553
    %v3555 = vlaneseq
    %v3556 = vshrl.u32 %v3555, 7
    %v3557 = vsub.s32 %v3554, %v3556
    %v3558 = vrot.slane %v3479, %v3557
    %v3559 = vcombine.high %v3558, %v3558
    %v3561 = vunpack.c.l.s4 1983009808
    %v3562 = vunpack.c.0.s8 %v3561
    %v3563 = vlaneseq
    %v3564 = vshrl.u32 %v3563, 7
    %v3565 = vsub.s32 %v3562, %v3564
    %v3566 = vrot.slane %v3481, %v3565
    %v3567 = vcombine.high %v3566, %v3566
    %v3569 = vunpack.c.l.s4 1983009808
    %v3570 = vunpack.c.0.s8 %v3569
    %v3571 = vlaneseq
    %v3572 = vshrl.u32 %v3571, 7
    %v3573 = vsub.s32 %v3570, %v3572
    %v3574 = vrot.slane %v3490, %v3573
    %v3575 = vcombine.high %v3574, %v3574
    %v3577 = vunpack.c.l.s4 1983009808
    %v3578 = vunpack.c.0.s8 %v3577
    %v3579 = vlaneseq
    %v3580 = vshrl.u32 %v3579, 7
    %v3581 = vsub.s32 %v3578, %v3580
    %v3582 = vrot.slane %v3498, %v3581
    %v3583 = vcombine.high %v3582, %v3582
    %v3585 = vunpack.c.l.s4 1983009808
    %v3586 = vunpack.c.0.s8 %v3585
    %v3587 = vlaneseq
    %v3588 = vshrl.u32 %v3587, 7
    %v3589 = vsub.s32 %v3586, %v3588
    %v3590 = vrot.slane %v3497, %v3589
    %v3591 = vcombine.high %v3590, %v3590
    %v3593 = vunpack.c.l.s4 1983009808
    %v3594 = vunpack.c.0.s8 %v3593
    %v3595 = vlaneseq
    %v3596 = vshrl.u32 %v3595, 7
    %v3597 = vsub.s32 %v3594, %v3596
    %v3598 = vrot.slane %v3499, %v3597
    %v3599 = vcombine.high %v3598, %v3598
    %v3601 = vunpack.c.l.s4 1983009808
    %v3602 = vunpack.c.0.s8 %v3601
    %v3603 = vlaneseq
    %v3604 = vshrl.u32 %v3603, 7
    %v3605 = vsub.s32 %v3602, %v3604
    %v3606 = vrot.slane %v3508, %v3605
    %v3607 = vcombine.high %v3606, %v3606
    %v3609 = vunpack.c.l.s4 1983009808
    %v3610 = vunpack.c.0.s8 %v3609
    %v3611 = vlaneseq
    %v3612 = vshrl.u32 %v3611, 7
    %v3613 = vsub.s32 %v3610, %v3612
    %v3614 = vrot.slane %v3516, %v3613
    %v3615 = vcombine.high %v3614, %v3614
    %v3617 = vunpack.c.l.s4 1983009808
    %v3618 = vunpack.c.0.s8 %v3617
    %v3619 = vlaneseq
    %v3620 = vshrl.u32 %v3619, 7
    %v3621 = vsub.s32 %v3618, %v3620
    %v3622 = vrot.slane %v3515, %v3621
    %v3623 = vcombine.high %v3622, %v3622
    %v3625 = vunpack.c.l.s4 1983009808
    %v3626 = vunpack.c.0.s8 %v3625
    %v3627 = vlaneseq
    %v3628 = vshrl.u32 %v3627, 7
    %v3629 = vsub.s32 %v3626, %v3628
    %v3630 = vrot.slane %v3517, %v3629
    %v3631 = vcombine.high %v3630, %v3630
    %v3633 = vunpack.c.l.s4 1983009808
    %v3634 = vunpack.c.0.s8 %v3633
    %v3635 = vlaneseq
    %v3636 = vshrl.u32 %v3635, 7
    %v3637 = vsub.s32 %v3634, %v3636
    %v3638 = vrot.slane %v3526, %v3637
    %v3639 = vcombine.high %v3638, %v3638
    %v3641 = vunpack.c.l.s4 1983009808
    %v3642 = vunpack.c.0.s8 %v3641
    %v3643 = vlaneseq
    %v3644 = vshrl.u32 %v3643, 7
    %v3645 = vsub.s32 %v3642, %v3644
    %v3646 = vrot.slane %v3534, %v3645
    %v3647 = vcombine.high %v3646, %v3646
    %v3649 = vunpack.c.l.s4 1983009808
    %v3650 = vunpack.c.0.s8 %v3649
    %v3651 = vlaneseq
    %v3652 = vshrl.u32 %v3651, 7
    %v3653 = vsub.s32 %v3650, %v3652
    %v3654 = vrot.slane %v3533, %v3653
    %v3655 = vcombine.high %v3654, %v3654
    %v3657 = vunpack.c.l.s4 1983009808
    %v3658 = vunpack.c.0.s8 %v3657
    %v3659 = vlaneseq
    %v3660 = vshrl.u32 %v3659, 7
    %v3661 = vsub.s32 %v3658, %v3660
    %v3662 = vrot.slane %v3535, %v3661
    %v3663 = vcombine.high %v3662, %v3662
    %v3696 = vsel %vm2510, %v3542, -inf
    %v3697 = vrot.slane %v3696, 4
    %v3698 = vmax.f32 %v3696, %v3697
    %v3699 = vrot.slane %v3698, 2
    %v3700 = vmax.f32 %v3698, %v3699
    %v3701 = vrot.slane %v3700, 1
    %v3702 = vmax.f32 %v3700, %v3701
    %v3703 = vsel %vm2510, %v3543, -inf
    %v3704 = vrot.slane %v3703, 4
    %v3705 = vmax.f32 %v3703, %v3704
    %v3706 = vrot.slane %v3705, 2
    %v3707 = vmax.f32 %v3705, %v3706
    %v3708 = vrot.slane %v3707, 1
    %v3709 = vmax.f32 %v3707, %v3708
    %v3710 = vsel %vm2510, %v3550, -inf
    %v3711 = vrot.slane %v3710, 4
    %v3712 = vmax.f32 %v3710, %v3711
    %v3713 = vrot.slane %v3712, 2
    %v3714 = vmax.f32 %v3712, %v3713
    %v3715 = vrot.slane %v3714, 1
    %v3716 = vmax.f32 %v3714, %v3715
    %v3717 = vsel %vm2510, %v3551, -inf
    %v3718 = vrot.slane %v3717, 4
    %v3719 = vmax.f32 %v3717, %v3718
    %v3720 = vrot.slane %v3719, 2
    %v3721 = vmax.f32 %v3719, %v3720
    %v3722 = vrot.slane %v3721, 1
    %v3723 = vmax.f32 %v3721, %v3722
    %v3724 = vsel %vm2510, %v3558, -inf
    %v3725 = vrot.slane %v3724, 4
    %v3726 = vmax.f32 %v3724, %v3725
    %v3727 = vrot.slane %v3726, 2
    %v3728 = vmax.f32 %v3726, %v3727
    %v3729 = vrot.slane %v3728, 1
    %v3730 = vmax.f32 %v3728, %v3729
    %v3731 = vsel %vm2510, %v3559, -inf
    %v3732 = vrot.slane %v3731, 4
    %v3733 = vmax.f32 %v3731, %v3732
    %v3734 = vrot.slane %v3733, 2
    %v3735 = vmax.f32 %v3733, %v3734
    %v3736 = vrot.slane %v3735, 1
    %v3737 = vmax.f32 %v3735, %v3736
    %v3738 = vsel %vm2510, %v3566, -inf
    %v3739 = vrot.slane %v3738, 4
    %v3740 = vmax.f32 %v3738, %v3739
    %v3741 = vrot.slane %v3740, 2
    %v3742 = vmax.f32 %v3740, %v3741
    %v3743 = vrot.slane %v3742, 1
    %v3744 = vmax.f32 %v3742, %v3743
    %v3745 = vsel %vm2510, %v3567, -inf
    %v3746 = vrot.slane %v3745, 4
    %v3747 = vmax.f32 %v3745, %v3746
    %v3748 = vrot.slane %v3747, 2
    %v3749 = vmax.f32 %v3747, %v3748
    %v3750 = vrot.slane %v3749, 1
    %v3751 = vmax.f32 %v3749, %v3750
    %v3752 = vsel %vm2510, %v3574, -inf
    %v3753 = vrot.slane %v3752, 4
    %v3754 = vmax.f32 %v3752, %v3753
    %v3755 = vrot.slane %v3754, 2
    %v3756 = vmax.f32 %v3754, %v3755
    %v3757 = vrot.slane %v3756, 1
    %v3758 = vmax.f32 %v3756, %v3757
    %v3759 = vsel %vm2510, %v3575, -inf
    %v3760 = vrot.slane %v3759, 4
    %v3761 = vmax.f32 %v3759, %v3760
    %v3762 = vrot.slane %v3761, 2
    %v3763 = vmax.f32 %v3761, %v3762
    %v3764 = vrot.slane %v3763, 1
    %v3765 = vmax.f32 %v3763, %v3764
    %v3766 = vsel %vm2510, %v3582, -inf
    %v3767 = vrot.slane %v3766, 4
    %v3768 = vmax.f32 %v3766, %v3767
    %v3769 = vrot.slane %v3768, 2
    %v3770 = vmax.f32 %v3768, %v3769
    %v3771 = vrot.slane %v3770, 1
    %v3772 = vmax.f32 %v3770, %v3771
    %v3773 = vsel %vm2510, %v3583, -inf
    %v3774 = vrot.slane %v3773, 4
    %v3775 = vmax.f32 %v3773, %v3774
    %v3776 = vrot.slane %v3775, 2
    %v3777 = vmax.f32 %v3775, %v3776
    %v3778 = vrot.slane %v3777, 1
    %v3779 = vmax.f32 %v3777, %v3778
    %v3780 = vsel %vm2510, %v3590, -inf
    %v3781 = vrot.slane %v3780, 4
    %v3782 = vmax.f32 %v3780, %v3781
    %v3783 = vrot.slane %v3782, 2
    %v3784 = vmax.f32 %v3782, %v3783
    %v3785 = vrot.slane %v3784, 1
    %v3786 = vmax.f32 %v3784, %v3785
    %v3787 = vsel %vm2510, %v3591, -inf
    %v3788 = vrot.slane %v3787, 4
    %v3789 = vmax.f32 %v3787, %v3788
    %v3790 = vrot.slane %v3789, 2
    %v3791 = vmax.f32 %v3789, %v3790
    %v3792 = vrot.slane %v3791, 1
    %v3793 = vmax.f32 %v3791, %v3792
    %v3794 = vsel %vm2510, %v3598, -inf
    %v3795 = vrot.slane %v3794, 4
    %v3796 = vmax.f32 %v3794, %v3795
    %v3797 = vrot.slane %v3796, 2
    %v3798 = vmax.f32 %v3796, %v3797
    %v3799 = vrot.slane %v3798, 1
    %v3800 = vmax.f32 %v3798, %v3799
    %v3801 = vsel %vm2510, %v3599, -inf
    %v3802 = vrot.slane %v3801, 4
    %v3803 = vmax.f32 %v3801, %v3802
    %v3804 = vrot.slane %v3803, 2
    %v3805 = vmax.f32 %v3803, %v3804
    %v3806 = vrot.slane %v3805, 1
    %v3807 = vmax.f32 %v3805, %v3806
    %v3808 = vsel %vm2510, %v3606, -inf
    %v3809 = vrot.slane %v3808, 4
    %v3810 = vmax.f32 %v3808, %v3809
    %v3811 = vrot.slane %v3810, 2
    %v3812 = vmax.f32 %v3810, %v3811
    %v3813 = vrot.slane %v3812, 1
    %v3814 = vmax.f32 %v3812, %v3813
    %v3815 = vsel %vm2510, %v3607, -inf
    %v3816 = vrot.slane %v3815, 4
    %v3817 = vmax.f32 %v3815, %v3816
    %v3818 = vrot.slane %v3817, 2
    %v3819 = vmax.f32 %v3817, %v3818
    %v3820 = vrot.slane %v3819, 1
    %v3821 = vmax.f32 %v3819, %v3820
    %v3822 = vsel %vm2510, %v3614, -inf
    %v3823 = vrot.slane %v3822, 4
    %v3824 = vmax.f32 %v3822, %v3823
    %v3825 = vrot.slane %v3824, 2
    %v3826 = vmax.f32 %v3824, %v3825
    %v3827 = vrot.slane %v3826, 1
    %v3828 = vmax.f32 %v3826, %v3827
    %v3829 = vsel %vm2510, %v3615, -inf
    %v3830 = vrot.slane %v3829, 4
    %v3831 = vmax.f32 %v3829, %v3830
    %v3832 = vrot.slane %v3831, 2
    %v3833 = vmax.f32 %v3831, %v3832
    %v3834 = vrot.slane %v3833, 1
    %v3835 = vmax.f32 %v3833, %v3834
    %v3836 = vsel %vm2510, %v3622, -inf
    %v3837 = vrot.slane %v3836, 4
    %v3838 = vmax.f32 %v3836, %v3837
    %v3839 = vrot.slane %v3838, 2
    %v3840 = vmax.f32 %v3838, %v3839
    %v3841 = vrot.slane %v3840, 1
    %v3842 = vmax.f32 %v3840, %v3841
    %v3843 = vsel %vm2510, %v3623, -inf
    %v3844 = vrot.slane %v3843, 4
    %v3845 = vmax.f32 %v3843, %v3844
    %v3846 = vrot.slane %v3845, 2
    %v3847 = vmax.f32 %v3845, %v3846
    %v3848 = vrot.slane %v3847, 1
    %v3849 = vmax.f32 %v3847, %v3848
    %v3850 = vsel %vm2510, %v3630, -inf
    %v3851 = vrot.slane %v3850, 4
    %v3852 = vmax.f32 %v3850, %v3851
    %v3853 = vrot.slane %v3852, 2
    %v3854 = vmax.f32 %v3852, %v3853
    %v3855 = vrot.slane %v3854, 1
    %v3856 = vmax.f32 %v3854, %v3855
    %v3857 = vsel %vm2510, %v3631, -inf
    %v3858 = vrot.slane %v3857, 4
    %v3859 = vmax.f32 %v3857, %v3858
    %v3860 = vrot.slane %v3859, 2
    %v3861 = vmax.f32 %v3859, %v3860
    %v3862 = vrot.slane %v3861, 1
    %v3863 = vmax.f32 %v3861, %v3862
    %v3864 = vsel %vm2510, %v3638, -inf
    %v3865 = vrot.slane %v3864, 4
    %v3866 = vmax.f32 %v3864, %v3865
    %v3867 = vrot.slane %v3866, 2
    %v3868 = vmax.f32 %v3866, %v3867
    %v3869 = vrot.slane %v3868, 1
    %v3870 = vmax.f32 %v3868, %v3869
    %v3871 = vsel %vm2510, %v3639, -inf
    %v3872 = vrot.slane %v3871, 4
    %v3873 = vmax.f32 %v3871, %v3872
    %v3874 = vrot.slane %v3873, 2
    %v3875 = vmax.f32 %v3873, %v3874
    %v3876 = vrot.slane %v3875, 1
    %v3877 = vmax.f32 %v3875, %v3876
    %v3878 = vsel %vm2510, %v3646, -inf
    %v3879 = vrot.slane %v3878, 4
    %v3880 = vmax.f32 %v3878, %v3879
    %v3881 = vrot.slane %v3880, 2
    %v3882 = vmax.f32 %v3880, %v3881
    %v3883 = vrot.slane %v3882, 1
    %v3884 = vmax.f32 %v3882, %v3883
    %v3885 = vsel %vm2510, %v3647, -inf
    %v3886 = vrot.slane %v3885, 4
    %v3887 = vmax.f32 %v3885, %v3886
    %v3888 = vrot.slane %v3887, 2
    %v3889 = vmax.f32 %v3887, %v3888
    %v3890 = vrot.slane %v3889, 1
    %v3891 = vmax.f32 %v3889, %v3890
    %v3892 = vsel %vm2510, %v3654, -inf
    %v3893 = vrot.slane %v3892, 4
    %v3894 = vmax.f32 %v3892, %v3893
    %v3895 = vrot.slane %v3894, 2
    %v3896 = vmax.f32 %v3894, %v3895
    %v3897 = vrot.slane %v3896, 1
    %v3898 = vmax.f32 %v3896, %v3897
    %v3899 = vsel %vm2510, %v3655, -inf
    %v3900 = vrot.slane %v3899, 4
    %v3901 = vmax.f32 %v3899, %v3900
    %v3902 = vrot.slane %v3901, 2
    %v3903 = vmax.f32 %v3901, %v3902
    %v3904 = vrot.slane %v3903, 1
    %v3905 = vmax.f32 %v3903, %v3904
    %v3906 = vsel %vm2510, %v3662, -inf
    %v3907 = vrot.slane %v3906, 4
    %v3908 = vmax.f32 %v3906, %v3907
    %v3909 = vrot.slane %v3908, 2
    %v3910 = vmax.f32 %v3908, %v3909
    %v3911 = vrot.slane %v3910, 1
    %v3912 = vmax.f32 %v3910, %v3911
    %v3913 = vsel %vm2510, %v3663, -inf
    %v3914 = vrot.slane %v3913, 4
    %v3915 = vmax.f32 %v3913, %v3914
    %v3916 = vrot.slane %v3915, 2
    %v3917 = vmax.f32 %v3915, %v3916
    %v3918 = vrot.slane %v3917, 1
    %v3919 = vmax.f32 %v3917, %v3918
    %v3952 = vsel %vm1202, %v3716, %v3702
    %v3953 = vsel %vm1204, %v3730, %v3952
    %v3954 = vsel %vm1206, %v3744, %v3953
    %v3955 = vsel %vm1208, %v3758, %v3954
    %v3956 = vsel %vm1210, %v3772, %v3955
    %v3957 = vsel %vm1212, %v3786, %v3956
    %v3958 = vsel %vm1214, %v3800, %v3957
    %v3959 = vsel %vm1202, %v3723, %v3709
    %v3960 = vsel %vm1204, %v3737, %v3959
    %v3961 = vsel %vm1206, %v3751, %v3960
    %v3962 = vsel %vm1208, %v3765, %v3961
    %v3963 = vsel %vm1210, %v3779, %v3962
    %v3964 = vsel %vm1212, %v3793, %v3963
    %v3965 = vsel %vm1214, %v3807, %v3964
    %v3966 = vsel %vm1202, %v3828, %v3814
    %v3967 = vsel %vm1204, %v3842, %v3966
    %v3968 = vsel %vm1206, %v3856, %v3967
    %v3969 = vsel %vm1208, %v3870, %v3968
    %v3970 = vsel %vm1210, %v3884, %v3969
    %v3971 = vsel %vm1212, %v3898, %v3970
    %v3972 = vsel %vm1214, %v3912, %v3971
    %v3973 = vsel %vm1202, %v3835, %v3821
    %v3974 = vsel %vm1204, %v3849, %v3973
    %v3975 = vsel %vm1206, %v3863, %v3974
    %v3976 = vsel %vm1208, %v3877, %v3975
    %v3977 = vsel %vm1210, %v3891, %v3976
    %v3978 = vsel %vm1212, %v3905, %v3977
    %v3979 = vsel %vm1214, %v3919, %v3978
    %v3984 = vrot.slane %v3958, 7
    %v3985 = vrot.slane %v3965, 7
    %v3986 = vrot.slane %v3972, 7
    %v3987 = vrot.slane %v3979, 7
    %vm3988 = vcmp.lt.s32.totalorder %v1351, 8
    %vm3989 = vmand %vm1355, %vm3988
    %v3990 = vsel %vm3989, 1, 0
    %vm3991 = vcmp.eq.s32.totalorder %v3990, 1
    %v3992 = vsel %vm3991, %v3984, 0.0
    %v3993 = vsel %vm3991, %v3985, 0.0
    %v3994 = vsel %vm3991, %v3986, 0.0
    %v3995 = vsel %vm3991, %v3987, 0.0
    %v3996 = vpack.c.bf16 %v3994, %v3992
    %v3997 = vpack.c.bf16 %v3995, %v3993
    %v3998 = vld [vmem:[#allocation7] sm:$0xff]
    %v3999 = vld [vmem:[#allocation7 + $0x8] sm:$0xff]
    %v4000 = vld [vmem:[#allocation7 + $0x10] sm:$0xff]
    %v4001 = vld [vmem:[#allocation7 + $0x18] sm:$0xff]
    %v4002 = vld [vmem:[#allocation7 + $0x20] sm:$0xff]
    %v4003 = vld [vmem:[#allocation7 + $0x28] sm:$0xff]
    %v4004 = vld [vmem:[#allocation7 + $0x30] sm:$0xff]
    %v4005 = vld [vmem:[#allocation7 + $0x38] sm:$0xff]
    %v4006 = vld [vmem:[#allocation7 + $0x40] sm:$0xff]
    %v4007 = vld [vmem:[#allocation7 + $0x48] sm:$0xff]
    %v4008 = vld [vmem:[#allocation7 + $0x50] sm:$0xff]
    %v4009 = vld [vmem:[#allocation7 + $0x58] sm:$0xff]
    %v4010 = vld [vmem:[#allocation7 + $0x60] sm:$0xff]
    %v4011 = vld [vmem:[#allocation7 + $0x68] sm:$0xff]
    %v4012 = vld [vmem:[#allocation7 + $0x70] sm:$0xff]
    %v4013 = vld [vmem:[#allocation7 + $0x78] sm:$0xff]
    %v4014 = vld [vmem:[#allocation7 + $0x80] sm:$0xff]
    %v4015 = vld [vmem:[#allocation7 + $0x88] sm:$0xff]
    %v4016 = vld [vmem:[#allocation7 + $0x90] sm:$0xff]
    %v4017 = vld [vmem:[#allocation7 + $0x98] sm:$0xff]
    %v4018 = vld [vmem:[#allocation7 + $0xa0] sm:$0xff]
    %v4019 = vld [vmem:[#allocation7 + $0xa8] sm:$0xff]
    %v4020 = vld [vmem:[#allocation7 + $0xb0] sm:$0xff]
    %v4021 = vld [vmem:[#allocation7 + $0xb8] sm:$0xff]
    %v4022 = vld [vmem:[#allocation7 + $0xc0] sm:$0xff]
    %v4023 = vld [vmem:[#allocation7 + $0xc8] sm:$0xff]
    %v4024 = vld [vmem:[#allocation7 + $0xd0] sm:$0xff]
    %v4025 = vld [vmem:[#allocation7 + $0xd8] sm:$0xff]
    %v4026 = vld [vmem:[#allocation7 + $0xe0] sm:$0xff]
    %v4027 = vld [vmem:[#allocation7 + $0xe8] sm:$0xff]
    %v4028 = vld [vmem:[#allocation7 + $0xf0] sm:$0xff]
    %v4029 = vld [vmem:[#allocation7 + $0xf8] sm:$0xff]
    %v4030 = vld [vmem:[#allocation7 + $0x100] sm:$0xff]
    %v4031 = vld [vmem:[#allocation7 + $0x108] sm:$0xff]
    %v4032 = vld [vmem:[#allocation7 + $0x110] sm:$0xff]
    %v4033 = vld [vmem:[#allocation7 + $0x118] sm:$0xff]
    %v4034 = vld [vmem:[#allocation7 + $0x120] sm:$0xff]
    %v4035 = vld [vmem:[#allocation7 + $0x128] sm:$0xff]
    %v4036 = vld [vmem:[#allocation7 + $0x130] sm:$0xff]
    %v4037 = vld [vmem:[#allocation7 + $0x138] sm:$0xff]
    %v4038 = vld [vmem:[#allocation7 + $0x140] sm:$0xff]
    %v4039 = vld [vmem:[#allocation7 + $0x148] sm:$0xff]
    %v4040 = vld [vmem:[#allocation7 + $0x150] sm:$0xff]
    %v4041 = vld [vmem:[#allocation7 + $0x158] sm:$0xff]
    %v4042 = vld [vmem:[#allocation7 + $0x160] sm:$0xff]
    %v4043 = vld [vmem:[#allocation7 + $0x168] sm:$0xff]
    %v4044 = vld [vmem:[#allocation7 + $0x170] sm:$0xff]
    %v4045 = vld [vmem:[#allocation7 + $0x178] sm:$0xff]
    %v4046 = vld [vmem:[#allocation7 + $0x180] sm:$0xff]
    %v4047 = vld [vmem:[#allocation7 + $0x188] sm:$0xff]
    %v4048 = vld [vmem:[#allocation7 + $0x190] sm:$0xff]
    %v4049 = vld [vmem:[#allocation7 + $0x198] sm:$0xff]
    %v4050 = vld [vmem:[#allocation7 + $0x1a0] sm:$0xff]
    %v4051 = vld [vmem:[#allocation7 + $0x1a8] sm:$0xff]
    %v4052 = vld [vmem:[#allocation7 + $0x1b0] sm:$0xff]
    %v4053 = vld [vmem:[#allocation7 + $0x1b8] sm:$0xff]
    %v4054 = vld [vmem:[#allocation7 + $0x1c0] sm:$0xff]
    %v4055 = vld [vmem:[#allocation7 + $0x1c8] sm:$0xff]
    %v4056 = vld [vmem:[#allocation7 + $0x1d0] sm:$0xff]
    %v4057 = vld [vmem:[#allocation7 + $0x1d8] sm:$0xff]
    %v4058 = vld [vmem:[#allocation7 + $0x1e0] sm:$0xff]
    %v4059 = vld [vmem:[#allocation7 + $0x1e8] sm:$0xff]
    %v4060 = vld [vmem:[#allocation7 + $0x1f0] sm:$0xff]
    %v4061 = vld [vmem:[#allocation7 + $0x1f8] sm:$0xff]
    %v4062 = vpack.c.bf16 %v3702, %v3702
    %v4063 = vpack.c.bf16 %v3709, %v3709
    %v4064 = vpack.c.bf16 %v3716, %v3716
    %v4065 = vpack.c.bf16 %v3723, %v3723
    %v4066 = vpack.c.bf16 %v3730, %v3730
    %v4067 = vpack.c.bf16 %v3737, %v3737
    %v4068 = vpack.c.bf16 %v3744, %v3744
    %v4069 = vpack.c.bf16 %v3751, %v3751
    %v4070 = vpack.c.bf16 %v3758, %v3758
    %v4071 = vpack.c.bf16 %v3765, %v3765
    %v4072 = vpack.c.bf16 %v3772, %v3772
    %v4073 = vpack.c.bf16 %v3779, %v3779
    %v4074 = vpack.c.bf16 %v3786, %v3786
    %v4075 = vpack.c.bf16 %v3793, %v3793
    %v4076 = vpack.c.bf16 %v3800, %v3800
    %v4077 = vpack.c.bf16 %v3807, %v3807
    %v4078 = vpack.c.bf16 %v3814, %v3814
    %v4079 = vpack.c.bf16 %v3821, %v3821
    %v4080 = vpack.c.bf16 %v3828, %v3828
    %v4081 = vpack.c.bf16 %v3835, %v3835
    %v4082 = vpack.c.bf16 %v3842, %v3842
    %v4083 = vpack.c.bf16 %v3849, %v3849
    %v4084 = vpack.c.bf16 %v3856, %v3856
    %v4085 = vpack.c.bf16 %v3863, %v3863
    %v4086 = vpack.c.bf16 %v3870, %v3870
    %v4087 = vpack.c.bf16 %v3877, %v3877
    %v4088 = vpack.c.bf16 %v3884, %v3884
    %v4089 = vpack.c.bf16 %v3891, %v3891
    %v4090 = vpack.c.bf16 %v3898, %v3898
    %v4091 = vpack.c.bf16 %v3905, %v3905
    %v4092 = vpack.c.bf16 %v3912, %v3912
    %v4093 = vpack.c.bf16 %v3919, %v3919
    %s4094 = scalar_lea.vmem [#allocation7], 512
    %v4095 = vld [vmem:[%s4094] sm:$0xff]
    %v4096 = vld [vmem:[%s4094 + $0x8] sm:$0xff]
    %v4097 = vld [vmem:[%s4094 + $0x10] sm:$0xff]
    %v4098 = vld [vmem:[%s4094 + $0x18] sm:$0xff]
    %v4099 = vld [vmem:[%s4094 + $0x20] sm:$0xff]
    %v4100 = vld [vmem:[%s4094 + $0x28] sm:$0xff]
    %v4101 = vld [vmem:[%s4094 + $0x30] sm:$0xff]
    %v4102 = vld [vmem:[%s4094 + $0x38] sm:$0xff]
    %v4103 = vld [vmem:[%s4094 + $0x40] sm:$0xff]
    %v4104 = vld [vmem:[%s4094 + $0x48] sm:$0xff]
    %v4105 = vld [vmem:[%s4094 + $0x50] sm:$0xff]
    %v4106 = vld [vmem:[%s4094 + $0x58] sm:$0xff]
    %v4107 = vld [vmem:[%s4094 + $0x60] sm:$0xff]
    %v4108 = vld [vmem:[%s4094 + $0x68] sm:$0xff]
    %v4109 = vld [vmem:[%s4094 + $0x70] sm:$0xff]
    %v4110 = vld [vmem:[%s4094 + $0x78] sm:$0xff]
    %v4111 = vld [vmem:[%s4094 + $0x80] sm:$0xff]
    %v4112 = vld [vmem:[%s4094 + $0x88] sm:$0xff]
    %v4113 = vld [vmem:[%s4094 + $0x90] sm:$0xff]
    %v4114 = vld [vmem:[%s4094 + $0x98] sm:$0xff]
    %v4115 = vld [vmem:[%s4094 + $0xa0] sm:$0xff]
    %v4116 = vld [vmem:[%s4094 + $0xa8] sm:$0xff]
    %v4117 = vld [vmem:[%s4094 + $0xb0] sm:$0xff]
    %v4118 = vld [vmem:[%s4094 + $0xb8] sm:$0xff]
    %v4119 = vld [vmem:[%s4094 + $0xc0] sm:$0xff]
    %v4120 = vld [vmem:[%s4094 + $0xc8] sm:$0xff]
    %v4121 = vld [vmem:[%s4094 + $0xd0] sm:$0xff]
    %v4122 = vld [vmem:[%s4094 + $0xd8] sm:$0xff]
    %v4123 = vld [vmem:[%s4094 + $0xe0] sm:$0xff]
    %v4124 = vld [vmem:[%s4094 + $0xe8] sm:$0xff]
    %v4125 = vld [vmem:[%s4094 + $0xf0] sm:$0xff]
    %v4126 = vld [vmem:[%s4094 + $0xf8] sm:$0xff]
    %v4127 = vld [vmem:[%s4094 + $0x100] sm:$0xff]
    %v4128 = vld [vmem:[%s4094 + $0x108] sm:$0xff]
    %v4129 = vld [vmem:[%s4094 + $0x110] sm:$0xff]
    %v4130 = vld [vmem:[%s4094 + $0x118] sm:$0xff]
    %v4131 = vld [vmem:[%s4094 + $0x120] sm:$0xff]
    %v4132 = vld [vmem:[%s4094 + $0x128] sm:$0xff]
    %v4133 = vld [vmem:[%s4094 + $0x130] sm:$0xff]
    %v4134 = vld [vmem:[%s4094 + $0x138] sm:$0xff]
    %v4135 = vld [vmem:[%s4094 + $0x140] sm:$0xff]
    %v4136 = vld [vmem:[%s4094 + $0x148] sm:$0xff]
    %v4137 = vld [vmem:[%s4094 + $0x150] sm:$0xff]
    %v4138 = vld [vmem:[%s4094 + $0x158] sm:$0xff]
    %v4139 = vld [vmem:[%s4094 + $0x160] sm:$0xff]
    %v4140 = vld [vmem:[%s4094 + $0x168] sm:$0xff]
    %v4141 = vld [vmem:[%s4094 + $0x170] sm:$0xff]
    %v4142 = vld [vmem:[%s4094 + $0x178] sm:$0xff]
    %v4143 = vld [vmem:[%s4094 + $0x180] sm:$0xff]
    %v4144 = vld [vmem:[%s4094 + $0x188] sm:$0xff]
    %v4145 = vld [vmem:[%s4094 + $0x190] sm:$0xff]
    %v4146 = vld [vmem:[%s4094 + $0x198] sm:$0xff]
    %v4147 = vld [vmem:[%s4094 + $0x1a0] sm:$0xff]
    %v4148 = vld [vmem:[%s4094 + $0x1a8] sm:$0xff]
    %v4149 = vld [vmem:[%s4094 + $0x1b0] sm:$0xff]
    %v4150 = vld [vmem:[%s4094 + $0x1b8] sm:$0xff]
    %v4151 = vld [vmem:[%s4094 + $0x1c0] sm:$0xff]
    %v4152 = vld [vmem:[%s4094 + $0x1c8] sm:$0xff]
    %v4153 = vld [vmem:[%s4094 + $0x1d0] sm:$0xff]
    %v4154 = vld [vmem:[%s4094 + $0x1d8] sm:$0xff]
    %v4155 = vld [vmem:[%s4094 + $0x1e0] sm:$0xff]
    %v4156 = vld [vmem:[%s4094 + $0x1e8] sm:$0xff]
    %v4157 = vld [vmem:[%s4094 + $0x1f0] sm:$0xff]
    %v4158 = vld [vmem:[%s4094 + $0x1f8] sm:$0xff]
    %v4191 = vunpack.c.l.b16 %v4062
    %v4192 = vunpack.c.l.b16 %v4063
    %v4193 = vunpack.c.l.b16 %v4064
    %v4194 = vunpack.c.l.b16 %v4065
    %v4195 = vunpack.c.l.b16 %v4066
    %v4196 = vunpack.c.l.b16 %v4067
    %v4197 = vunpack.c.l.b16 %v4068
    %v4198 = vunpack.c.l.b16 %v4069
    %v4199 = vunpack.c.l.b16 %v4070
    %v4200 = vunpack.c.l.b16 %v4071
    %v4201 = vunpack.c.l.b16 %v4072
    %v4202 = vunpack.c.l.b16 %v4073
    %v4203 = vunpack.c.l.b16 %v4074
    %v4204 = vunpack.c.l.b16 %v4075
    %v4205 = vunpack.c.l.b16 %v4076
    %v4206 = vunpack.c.l.b16 %v4077
    %v4207 = vunpack.c.l.b16 %v4078
    %v4208 = vunpack.c.l.b16 %v4079
    %v4209 = vunpack.c.l.b16 %v4080
    %v4210 = vunpack.c.l.b16 %v4081
    %v4211 = vunpack.c.l.b16 %v4082
    %v4212 = vunpack.c.l.b16 %v4083
    %v4213 = vunpack.c.l.b16 %v4084
    %v4214 = vunpack.c.l.b16 %v4085
    %v4215 = vunpack.c.l.b16 %v4086
    %v4216 = vunpack.c.l.b16 %v4087
    %v4217 = vunpack.c.l.b16 %v4088
    %v4218 = vunpack.c.l.b16 %v4089
    %v4219 = vunpack.c.l.b16 %v4090
    %v4220 = vunpack.c.l.b16 %v4091
    %v4221 = vunpack.c.l.b16 %v4092
    %v4222 = vunpack.c.l.b16 %v4093
    %v4223 = vsel %vm1202, %v4193, %v4191
    %v4224 = vsel %vm1204, %v4195, %v4223
    %v4225 = vsel %vm1206, %v4197, %v4224
    %v4226 = vsel %vm1208, %v4199, %v4225
    %v4227 = vsel %vm1210, %v4201, %v4226
    %v4228 = vsel %vm1212, %v4203, %v4227
    %v4229 = vsel %vm1214, %v4205, %v4228
    %v4230 = vsel %vm1202, %v4194, %v4192
    %v4231 = vsel %vm1204, %v4196, %v4230
    %v4232 = vsel %vm1206, %v4198, %v4231
    %v4233 = vsel %vm1208, %v4200, %v4232
    %v4234 = vsel %vm1210, %v4202, %v4233
    %v4235 = vsel %vm1212, %v4204, %v4234
    %v4236 = vsel %vm1214, %v4206, %v4235
    %v4237 = vsel %vm1202, %v4209, %v4207
    %v4238 = vsel %vm1204, %v4211, %v4237
    %v4239 = vsel %vm1206, %v4213, %v4238
    %v4240 = vsel %vm1208, %v4215, %v4239
    %v4241 = vsel %vm1210, %v4217, %v4240
    %v4242 = vsel %vm1212, %v4219, %v4241
    %v4243 = vsel %vm1214, %v4221, %v4242
    %v4244 = vsel %vm1202, %v4210, %v4208
    %v4245 = vsel %vm1204, %v4212, %v4244
    %v4246 = vsel %vm1206, %v4214, %v4245
    %v4247 = vsel %vm1208, %v4216, %v4246
    %v4248 = vsel %vm1210, %v4218, %v4247
    %v4249 = vsel %vm1212, %v4220, %v4248
    %v4250 = vsel %vm1214, %v4222, %v4249
    %v4251 = vpack.c.b16 %v4243, %v4229
    %v4252 = vpack.c.b16 %v4250, %v4236
    %v4319 = vunpack.c.l.b16 %v4095
    %v4320 = vunpack.c.h.b16 %v4095
    %v4321 = vunpack.c.l.b16 %v4096
    %v4322 = vunpack.c.h.b16 %v4096
    %v4323 = vunpack.c.l.b16 %v4097
    %v4324 = vunpack.c.h.b16 %v4097
    %v4325 = vunpack.c.l.b16 %v4098
    %v4326 = vunpack.c.h.b16 %v4098
    %v4327 = vunpack.c.l.b16 %v4099
    %v4328 = vunpack.c.h.b16 %v4099
    %v4329 = vunpack.c.l.b16 %v4100
    %v4330 = vunpack.c.h.b16 %v4100
    %v4331 = vunpack.c.l.b16 %v4101
    %v4332 = vunpack.c.h.b16 %v4101
    %v4333 = vunpack.c.l.b16 %v4102
    %v4334 = vunpack.c.h.b16 %v4102
    %v4335 = vunpack.c.l.b16 %v4103
    %v4336 = vunpack.c.h.b16 %v4103
    %v4337 = vunpack.c.l.b16 %v4104
    %v4338 = vunpack.c.h.b16 %v4104
    %v4339 = vunpack.c.l.b16 %v4105
    %v4340 = vunpack.c.h.b16 %v4105
    %v4341 = vunpack.c.l.b16 %v4106
    %v4342 = vunpack.c.h.b16 %v4106
    %v4343 = vunpack.c.l.b16 %v4107
    %v4344 = vunpack.c.h.b16 %v4107
    %v4345 = vunpack.c.l.b16 %v4108
    %v4346 = vunpack.c.h.b16 %v4108
    %v4347 = vunpack.c.l.b16 %v4109
    %v4348 = vunpack.c.h.b16 %v4109
    %v4349 = vunpack.c.l.b16 %v4110
    %v4350 = vunpack.c.h.b16 %v4110
    %v4351 = vunpack.c.l.b16 %v4111
    %v4352 = vunpack.c.h.b16 %v4111
    %v4353 = vunpack.c.l.b16 %v4112
    %v4354 = vunpack.c.h.b16 %v4112
    %v4355 = vunpack.c.l.b16 %v4113
    %v4356 = vunpack.c.h.b16 %v4113
    %v4357 = vunpack.c.l.b16 %v4114
    %v4358 = vunpack.c.h.b16 %v4114
    %v4359 = vunpack.c.l.b16 %v4115
    %v4360 = vunpack.c.h.b16 %v4115
    %v4361 = vunpack.c.l.b16 %v4116
    %v4362 = vunpack.c.h.b16 %v4116
    %v4363 = vunpack.c.l.b16 %v4117
    %v4364 = vunpack.c.h.b16 %v4117
    %v4365 = vunpack.c.l.b16 %v4118
    %v4366 = vunpack.c.h.b16 %v4118
    %v4367 = vunpack.c.l.b16 %v4119
    %v4368 = vunpack.c.h.b16 %v4119
    %v4369 = vunpack.c.l.b16 %v4120
    %v4370 = vunpack.c.h.b16 %v4120
    %v4371 = vunpack.c.l.b16 %v4121
    %v4372 = vunpack.c.h.b16 %v4121
    %v4373 = vunpack.c.l.b16 %v4122
    %v4374 = vunpack.c.h.b16 %v4122
    %v4375 = vunpack.c.l.b16 %v4123
    %v4376 = vunpack.c.h.b16 %v4123
    %v4377 = vunpack.c.l.b16 %v4124
    %v4378 = vunpack.c.h.b16 %v4124
    %v4379 = vunpack.c.l.b16 %v4125
    %v4380 = vunpack.c.h.b16 %v4125
    %v4381 = vunpack.c.l.b16 %v4126
    %v4382 = vunpack.c.h.b16 %v4126
    %v4383 = vunpack.c.l.b16 %v4127
    %v4384 = vunpack.c.h.b16 %v4127
    %v4385 = vunpack.c.l.b16 %v4128
    %v4386 = vunpack.c.h.b16 %v4128
    %v4387 = vunpack.c.l.b16 %v4129
    %v4388 = vunpack.c.h.b16 %v4129
    %v4389 = vunpack.c.l.b16 %v4130
    %v4390 = vunpack.c.h.b16 %v4130
    %v4391 = vunpack.c.l.b16 %v4131
    %v4392 = vunpack.c.h.b16 %v4131
    %v4393 = vunpack.c.l.b16 %v4132
    %v4394 = vunpack.c.h.b16 %v4132
    %v4395 = vunpack.c.l.b16 %v4133
    %v4396 = vunpack.c.h.b16 %v4133
    %v4397 = vunpack.c.l.b16 %v4134
    %v4398 = vunpack.c.h.b16 %v4134
    %v4399 = vunpack.c.l.b16 %v4135
    %v4400 = vunpack.c.h.b16 %v4135
    %v4401 = vunpack.c.l.b16 %v4136
    %v4402 = vunpack.c.h.b16 %v4136
    %v4403 = vunpack.c.l.b16 %v4137
    %v4404 = vunpack.c.h.b16 %v4137
    %v4405 = vunpack.c.l.b16 %v4138
    %v4406 = vunpack.c.h.b16 %v4138
    %v4407 = vunpack.c.l.b16 %v4139
    %v4408 = vunpack.c.h.b16 %v4139
    %v4409 = vunpack.c.l.b16 %v4140
    %v4410 = vunpack.c.h.b16 %v4140
    %v4411 = vunpack.c.l.b16 %v4141
    %v4412 = vunpack.c.h.b16 %v4141
    %v4413 = vunpack.c.l.b16 %v4142
    %v4414 = vunpack.c.h.b16 %v4142
    %v4415 = vunpack.c.l.b16 %v4143
    %v4416 = vunpack.c.h.b16 %v4143
    %v4417 = vunpack.c.l.b16 %v4144
    %v4418 = vunpack.c.h.b16 %v4144
    %v4419 = vunpack.c.l.b16 %v4145
    %v4420 = vunpack.c.h.b16 %v4145
    %v4421 = vunpack.c.l.b16 %v4146
    %v4422 = vunpack.c.h.b16 %v4146
    %v4423 = vunpack.c.l.b16 %v4147
    %v4424 = vunpack.c.h.b16 %v4147
    %v4425 = vunpack.c.l.b16 %v4148
    %v4426 = vunpack.c.h.b16 %v4148
    %v4427 = vunpack.c.l.b16 %v4149
    %v4428 = vunpack.c.h.b16 %v4149
    %v4429 = vunpack.c.l.b16 %v4150
    %v4430 = vunpack.c.h.b16 %v4150
    %v4431 = vunpack.c.l.b16 %v4151
    %v4432 = vunpack.c.h.b16 %v4151
    %v4433 = vunpack.c.l.b16 %v4152
    %v4434 = vunpack.c.h.b16 %v4152
    %v4435 = vunpack.c.l.b16 %v4153
    %v4436 = vunpack.c.h.b16 %v4153
    %v4437 = vunpack.c.l.b16 %v4154
    %v4438 = vunpack.c.h.b16 %v4154
    %v4439 = vunpack.c.l.b16 %v4155
    %v4440 = vunpack.c.h.b16 %v4155
    %v4441 = vunpack.c.l.b16 %v4156
    %v4442 = vunpack.c.h.b16 %v4156
    %v4443 = vunpack.c.l.b16 %v4157
    %v4444 = vunpack.c.h.b16 %v4157
    %v4445 = vunpack.c.l.b16 %v4158
    %v4446 = vunpack.c.h.b16 %v4158
    %v4447 = vpack.c.b16 %v4323, %v4319
    %v4448 = vpack.c.b16 %v4324, %v4320
    %v4449 = vpack.c.b16 %v4325, %v4321
    %v4450 = vpack.c.b16 %v4326, %v4322
    %v4451 = vpack.c.b16 %v4331, %v4327
    %v4452 = vpack.c.b16 %v4332, %v4328
    %v4453 = vpack.c.b16 %v4333, %v4329
    %v4454 = vpack.c.b16 %v4334, %v4330
    %v4455 = vpack.c.b16 %v4339, %v4335
    %v4456 = vpack.c.b16 %v4340, %v4336
    %v4457 = vpack.c.b16 %v4341, %v4337
    %v4458 = vpack.c.b16 %v4342, %v4338
    %v4459 = vpack.c.b16 %v4347, %v4343
    %v4460 = vpack.c.b16 %v4348, %v4344
    %v4461 = vpack.c.b16 %v4349, %v4345
    %v4462 = vpack.c.b16 %v4350, %v4346
    %v4463 = vpack.c.b16 %v4355, %v4351
    %v4464 = vpack.c.b16 %v4356, %v4352
    %v4465 = vpack.c.b16 %v4357, %v4353
    %v4466 = vpack.c.b16 %v4358, %v4354
    %v4467 = vpack.c.b16 %v4363, %v4359
    %v4468 = vpack.c.b16 %v4364, %v4360
    %v4469 = vpack.c.b16 %v4365, %v4361
    %v4470 = vpack.c.b16 %v4366, %v4362
    %v4471 = vpack.c.b16 %v4371, %v4367
    %v4472 = vpack.c.b16 %v4372, %v4368
    %v4473 = vpack.c.b16 %v4373, %v4369
    %v4474 = vpack.c.b16 %v4374, %v4370
    %v4475 = vpack.c.b16 %v4379, %v4375
    %v4476 = vpack.c.b16 %v4380, %v4376
    %v4477 = vpack.c.b16 %v4381, %v4377
    %v4478 = vpack.c.b16 %v4382, %v4378
    %v4479 = vpack.c.b16 %v4387, %v4383
    %v4480 = vpack.c.b16 %v4388, %v4384
    %v4481 = vpack.c.b16 %v4389, %v4385
    %v4482 = vpack.c.b16 %v4390, %v4386
    %v4483 = vpack.c.b16 %v4395, %v4391
    %v4484 = vpack.c.b16 %v4396, %v4392
    %v4485 = vpack.c.b16 %v4397, %v4393
    %v4486 = vpack.c.b16 %v4398, %v4394
    %v4487 = vpack.c.b16 %v4403, %v4399
    %v4488 = vpack.c.b16 %v4404, %v4400
    %v4489 = vpack.c.b16 %v4405, %v4401
    %v4490 = vpack.c.b16 %v4406, %v4402
    %v4491 = vpack.c.b16 %v4411, %v4407
    %v4492 = vpack.c.b16 %v4412, %v4408
    %v4493 = vpack.c.b16 %v4413, %v4409
    %v4494 = vpack.c.b16 %v4414, %v4410
    %v4495 = vpack.c.b16 %v4419, %v4415
    %v4496 = vpack.c.b16 %v4420, %v4416
    %v4497 = vpack.c.b16 %v4421, %v4417
    %v4498 = vpack.c.b16 %v4422, %v4418
    %v4499 = vpack.c.b16 %v4427, %v4423
    %v4500 = vpack.c.b16 %v4428, %v4424
    %v4501 = vpack.c.b16 %v4429, %v4425
    %v4502 = vpack.c.b16 %v4430, %v4426
    %v4503 = vpack.c.b16 %v4435, %v4431
    %v4504 = vpack.c.b16 %v4436, %v4432
    %v4505 = vpack.c.b16 %v4437, %v4433
    %v4506 = vpack.c.b16 %v4438, %v4434
    %v4507 = vpack.c.b16 %v4443, %v4439
    %v4508 = vpack.c.b16 %v4444, %v4440
    %v4509 = vpack.c.b16 %v4445, %v4441
    %v4510 = vpack.c.b16 %v4446, %v4442
    %4575 = vmatprep.subr.bf16.mxu0 %v4448
    %4576 = vmatpush1.bf16.msra.mxu0 %v4447
    %4577 = vmatprep.subr.bf16.mxu0 %v4452
    %4578 = vmatpush1.bf16.msra.mxu0 %v4451
    %4579 = vmatprep.subr.bf16.mxu0 %v4456
    %4580 = vmatpush1.bf16.msra.mxu0 %v4455
    %4581 = vmatprep.subr.bf16.mxu0 %v4460
    %4582 = vmatpush1.bf16.msra.mxu0 %v4459
    %4583 = vmatprep.subr.bf16.mxu0 %v4464
    %4584 = vmatpush1.bf16.msra.mxu0 %v4463
    %4585 = vmatprep.subr.bf16.mxu0 %v4468
    %4586 = vmatpush1.bf16.msra.mxu0 %v4467
    %4587 = vmatprep.subr.bf16.mxu0 %v4472
    %4588 = vmatpush1.bf16.msra.mxu0 %v4471
    %4589 = vmatprep.subr.bf16.mxu0 %v4476
    %4590 = vmatpush1.bf16.msra.mxu0 %v4475
    %4591 = vmatprep.subr.bf16.mxu0 %v4480
    %4592 = vmatpush1.bf16.msra.mxu0 %v4479
    %4593 = vmatprep.subr.bf16.mxu0 %v4484
    %4594 = vmatpush1.bf16.msra.mxu0 %v4483
    %4595 = vmatprep.subr.bf16.mxu0 %v4488
    %4596 = vmatpush1.bf16.msra.mxu0 %v4487
    %4597 = vmatprep.subr.bf16.mxu0 %v4492
    %4598 = vmatpush1.bf16.msra.mxu0 %v4491
    %4599 = vmatprep.subr.bf16.mxu0 %v4496
    %4600 = vmatpush1.bf16.msra.mxu0 %v4495
    %4601 = vmatprep.subr.bf16.mxu0 %v4500
    %4602 = vmatpush1.bf16.msra.mxu0 %v4499
    %4603 = vmatprep.subr.bf16.mxu0 %v4504
    %4604 = vmatpush1.bf16.msra.mxu0 %v4503
    %4605 = vmatprep.subr.bf16.mxu0 %v4508
    %4606 = vmatpush1.bf16.msra.mxu0 %v4507
    %4607 = vmatprep.mubr.bf16.mxu0 %v4252
    %4608 = vmatmul.mubr.bf16.gmra.mrb[0].mxu0 %v4251
    %v4609 = vpop.f32.mrb[0].mxu0
    %v4610 = vadd.f32 0.0, %v4609
    %v4611 = vpop.f32.mrb[0].mxu0
    %v4612 = vadd.f32 0.0, %v4611
    %v4613 = vpop.f32.mrb[0].mxu0
    %v4614 = vadd.f32 0.0, %v4613
    %v4615 = vpop.f32.mrb[0].mxu0
    %v4616 = vadd.f32 0.0, %v4615
    %4617 = vdwg.mxu0
    %4618 = vmatprep.subr.bf16.mxu0 %v4450
    %4619 = vmatpush1.bf16.msra.mxu0 %v4449
    %4620 = vmatprep.subr.bf16.mxu0 %v4454
    %4621 = vmatpush1.bf16.msra.mxu0 %v4453
    %4622 = vmatprep.subr.bf16.mxu0 %v4458
    %4623 = vmatpush1.bf16.msra.mxu0 %v4457
    %4624 = vmatprep.subr.bf16.mxu0 %v4462
    %4625 = vmatpush1.bf16.msra.mxu0 %v4461
    %4626 = vmatprep.subr.bf16.mxu0 %v4466
    %4627 = vmatpush1.bf16.msra.mxu0 %v4465
    %4628 = vmatprep.subr.bf16.mxu0 %v4470
    %4629 = vmatpush1.bf16.msra.mxu0 %v4469
    %4630 = vmatprep.subr.bf16.mxu0 %v4474
    %4631 = vmatpush1.bf16.msra.mxu0 %v4473
    %4632 = vmatprep.subr.bf16.mxu0 %v4478
    %4633 = vmatpush1.bf16.msra.mxu0 %v4477
    %4634 = vmatprep.subr.bf16.mxu0 %v4482
    %4635 = vmatpush1.bf16.msra.mxu0 %v4481
    %4636 = vmatprep.subr.bf16.mxu0 %v4486
    %4637 = vmatpush1.bf16.msra.mxu0 %v4485
    %4638 = vmatprep.subr.bf16.mxu0 %v4490
    %4639 = vmatpush1.bf16.msra.mxu0 %v4489
    %4640 = vmatprep.subr.bf16.mxu0 %v4494
    %4641 = vmatpush1.bf16.msra.mxu0 %v4493
    %4642 = vmatprep.subr.bf16.mxu0 %v4498
    %4643 = vmatpush1.bf16.msra.mxu0 %v4497
    %4644 = vmatprep.subr.bf16.mxu0 %v4502
    %4645 = vmatpush1.bf16.msra.mxu0 %v4501
    %4646 = vmatprep.subr.bf16.mxu0 %v4506
    %4647 = vmatpush1.bf16.msra.mxu0 %v4505
    %4648 = vmatprep.subr.bf16.mxu0 %v4510
    %4649 = vmatpush1.bf16.msra.mxu0 %v4509
    %4650 = vmatprep.mubr.bf16.mxu0 %v4252
    %4651 = vmatmul.mubr.bf16.gmra.mrb[0].mxu0 %v4251
    %v4652 = vpop.f32.mrb[0].mxu0
    %v4653 = vadd.f32 0.0, %v4652
    %v4654 = vpop.f32.mrb[0].mxu0
    %v4655 = vadd.f32 0.0, %v4654
    %v4656 = vpop.f32.mrb[0].mxu0
    %v4657 = vadd.f32 0.0, %v4656
    %v4658 = vpop.f32.mrb[0].mxu0
    %v4659 = vadd.f32 0.0, %v4658
    %4660 = vdwg.mxu0
    %v4725 = vunpack.c.l.b16 %v3998
    %v4726 = vunpack.c.h.b16 %v3998
    %v4727 = vunpack.c.l.b16 %v3999
    %v4728 = vunpack.c.h.b16 %v3999
    %v4729 = vunpack.c.l.b16 %v4000
    %v4730 = vunpack.c.h.b16 %v4000
    %v4731 = vunpack.c.l.b16 %v4001
    %v4732 = vunpack.c.h.b16 %v4001
    %v4733 = vunpack.c.l.b16 %v4002
    %v4734 = vunpack.c.h.b16 %v4002
    %v4735 = vunpack.c.l.b16 %v4003
    %v4736 = vunpack.c.h.b16 %v4003
    %v4737 = vunpack.c.l.b16 %v4004
    %v4738 = vunpack.c.h.b16 %v4004
    %v4739 = vunpack.c.l.b16 %v4005
    %v4740 = vunpack.c.h.b16 %v4005
    %v4741 = vunpack.c.l.b16 %v4006
    %v4742 = vunpack.c.h.b16 %v4006
    %v4743 = vunpack.c.l.b16 %v4007
    %v4744 = vunpack.c.h.b16 %v4007
    %v4745 = vunpack.c.l.b16 %v4008
    %v4746 = vunpack.c.h.b16 %v4008
    %v4747 = vunpack.c.l.b16 %v4009
    %v4748 = vunpack.c.h.b16 %v4009
    %v4749 = vunpack.c.l.b16 %v4010
    %v4750 = vunpack.c.h.b16 %v4010
    %v4751 = vunpack.c.l.b16 %v4011
    %v4752 = vunpack.c.h.b16 %v4011
    %v4753 = vunpack.c.l.b16 %v4012
    %v4754 = vunpack.c.h.b16 %v4012
    %v4755 = vunpack.c.l.b16 %v4013
    %v4756 = vunpack.c.h.b16 %v4013
    %v4757 = vunpack.c.l.b16 %v4014
    %v4758 = vunpack.c.h.b16 %v4014
    %v4759 = vunpack.c.l.b16 %v4015
    %v4760 = vunpack.c.h.b16 %v4015
    %v4761 = vunpack.c.l.b16 %v4016
    %v4762 = vunpack.c.h.b16 %v4016
    %v4763 = vunpack.c.l.b16 %v4017
    %v4764 = vunpack.c.h.b16 %v4017
    %v4765 = vunpack.c.l.b16 %v4018
    %v4766 = vunpack.c.h.b16 %v4018
    %v4767 = vunpack.c.l.b16 %v4019
    %v4768 = vunpack.c.h.b16 %v4019
    %v4769 = vunpack.c.l.b16 %v4020
    %v4770 = vunpack.c.h.b16 %v4020
    %v4771 = vunpack.c.l.b16 %v4021
    %v4772 = vunpack.c.h.b16 %v4021
    %v4773 = vunpack.c.l.b16 %v4022
    %v4774 = vunpack.c.h.b16 %v4022
    %v4775 = vunpack.c.l.b16 %v4023
    %v4776 = vunpack.c.h.b16 %v4023
    %v4777 = vunpack.c.l.b16 %v4024
    %v4778 = vunpack.c.h.b16 %v4024
    %v4779 = vunpack.c.l.b16 %v4025
    %v4780 = vunpack.c.h.b16 %v4025
    %v4781 = vunpack.c.l.b16 %v4026
    %v4782 = vunpack.c.h.b16 %v4026
    %v4783 = vunpack.c.l.b16 %v4027
    %v4784 = vunpack.c.h.b16 %v4027
    %v4785 = vunpack.c.l.b16 %v4028
    %v4786 = vunpack.c.h.b16 %v4028
    %v4787 = vunpack.c.l.b16 %v4029
    %v4788 = vunpack.c.h.b16 %v4029
    %v4789 = vunpack.c.l.b16 %v4030
    %v4790 = vunpack.c.h.b16 %v4030
    %v4791 = vunpack.c.l.b16 %v4031
    %v4792 = vunpack.c.h.b16 %v4031
    %v4793 = vunpack.c.l.b16 %v4032
    %v4794 = vunpack.c.h.b16 %v4032
    %v4795 = vunpack.c.l.b16 %v4033
    %v4796 = vunpack.c.h.b16 %v4033
    %v4797 = vunpack.c.l.b16 %v4034
    %v4798 = vunpack.c.h.b16 %v4034
    %v4799 = vunpack.c.l.b16 %v4035
    %v4800 = vunpack.c.h.b16 %v4035
    %v4801 = vunpack.c.l.b16 %v4036
    %v4802 = vunpack.c.h.b16 %v4036
    %v4803 = vunpack.c.l.b16 %v4037
    %v4804 = vunpack.c.h.b16 %v4037
    %v4805 = vunpack.c.l.b16 %v4038
    %v4806 = vunpack.c.h.b16 %v4038
    %v4807 = vunpack.c.l.b16 %v4039
    %v4808 = vunpack.c.h.b16 %v4039
    %v4809 = vunpack.c.l.b16 %v4040
    %v4810 = vunpack.c.h.b16 %v4040
    %v4811 = vunpack.c.l.b16 %v4041
    %v4812 = vunpack.c.h.b16 %v4041
    %v4813 = vunpack.c.l.b16 %v4042
    %v4814 = vunpack.c.h.b16 %v4042
    %v4815 = vunpack.c.l.b16 %v4043
    %v4816 = vunpack.c.h.b16 %v4043
    %v4817 = vunpack.c.l.b16 %v4044
    %v4818 = vunpack.c.h.b16 %v4044
    %v4819 = vunpack.c.l.b16 %v4045
    %v4820 = vunpack.c.h.b16 %v4045
    %v4821 = vunpack.c.l.b16 %v4046
    %v4822 = vunpack.c.h.b16 %v4046
    %v4823 = vunpack.c.l.b16 %v4047
    %v4824 = vunpack.c.h.b16 %v4047
    %v4825 = vunpack.c.l.b16 %v4048
    %v4826 = vunpack.c.h.b16 %v4048
    %v4827 = vunpack.c.l.b16 %v4049
    %v4828 = vunpack.c.h.b16 %v4049
    %v4829 = vunpack.c.l.b16 %v4050
    %v4830 = vunpack.c.h.b16 %v4050
    %v4831 = vunpack.c.l.b16 %v4051
    %v4832 = vunpack.c.h.b16 %v4051
    %v4833 = vunpack.c.l.b16 %v4052
    %v4834 = vunpack.c.h.b16 %v4052
    %v4835 = vunpack.c.l.b16 %v4053
    %v4836 = vunpack.c.h.b16 %v4053
    %v4837 = vunpack.c.l.b16 %v4054
    %v4838 = vunpack.c.h.b16 %v4054
    %v4839 = vunpack.c.l.b16 %v4055
    %v4840 = vunpack.c.h.b16 %v4055
    %v4841 = vunpack.c.l.b16 %v4056
    %v4842 = vunpack.c.h.b16 %v4056
    %v4843 = vunpack.c.l.b16 %v4057
    %v4844 = vunpack.c.h.b16 %v4057
    %v4845 = vunpack.c.l.b16 %v4058
    %v4846 = vunpack.c.h.b16 %v4058
    %v4847 = vunpack.c.l.b16 %v4059
    %v4848 = vunpack.c.h.b16 %v4059
    %v4849 = vunpack.c.l.b16 %v4060
    %v4850 = vunpack.c.h.b16 %v4060
    %v4851 = vunpack.c.l.b16 %v4061
    %v4852 = vunpack.c.h.b16 %v4061
    %v4853 = vpack.c.b16 %v4729, %v4725
    %v4854 = vpack.c.b16 %v4730, %v4726
    %v4855 = vpack.c.b16 %v4731, %v4727
    %v4856 = vpack.c.b16 %v4732, %v4728
    %v4857 = vpack.c.b16 %v4737, %v4733
    %v4858 = vpack.c.b16 %v4738, %v4734
    %v4859 = vpack.c.b16 %v4739, %v4735
    %v4860 = vpack.c.b16 %v4740, %v4736
    %v4861 = vpack.c.b16 %v4745, %v4741
    %v4862 = vpack.c.b16 %v4746, %v4742
    %v4863 = vpack.c.b16 %v4747, %v4743
    %v4864 = vpack.c.b16 %v4748, %v4744
    %v4865 = vpack.c.b16 %v4753, %v4749
    %v4866 = vpack.c.b16 %v4754, %v4750
    %v4867 = vpack.c.b16 %v4755, %v4751
    %v4868 = vpack.c.b16 %v4756, %v4752
    %v4869 = vpack.c.b16 %v4761, %v4757
    %v4870 = vpack.c.b16 %v4762, %v4758
    %v4871 = vpack.c.b16 %v4763, %v4759
    %v4872 = vpack.c.b16 %v4764, %v4760
    %v4873 = vpack.c.b16 %v4769, %v4765
    %v4874 = vpack.c.b16 %v4770, %v4766
    %v4875 = vpack.c.b16 %v4771, %v4767
    %v4876 = vpack.c.b16 %v4772, %v4768
    %v4877 = vpack.c.b16 %v4777, %v4773
    %v4878 = vpack.c.b16 %v4778, %v4774
    %v4879 = vpack.c.b16 %v4779, %v4775
    %v4880 = vpack.c.b16 %v4780, %v4776
    %v4881 = vpack.c.b16 %v4785, %v4781
    %v4882 = vpack.c.b16 %v4786, %v4782
    %v4883 = vpack.c.b16 %v4787, %v4783
    %v4884 = vpack.c.b16 %v4788, %v4784
    %v4885 = vpack.c.b16 %v4793, %v4789
    %v4886 = vpack.c.b16 %v4794, %v4790
    %v4887 = vpack.c.b16 %v4795, %v4791
    %v4888 = vpack.c.b16 %v4796, %v4792
    %v4889 = vpack.c.b16 %v4801, %v4797
    %v4890 = vpack.c.b16 %v4802, %v4798
    %v4891 = vpack.c.b16 %v4803, %v4799
    %v4892 = vpack.c.b16 %v4804, %v4800
    %v4893 = vpack.c.b16 %v4809, %v4805
    %v4894 = vpack.c.b16 %v4810, %v4806
    %v4895 = vpack.c.b16 %v4811, %v4807
    %v4896 = vpack.c.b16 %v4812, %v4808
    %v4897 = vpack.c.b16 %v4817, %v4813
    %v4898 = vpack.c.b16 %v4818, %v4814
    %v4899 = vpack.c.b16 %v4819, %v4815
    %v4900 = vpack.c.b16 %v4820, %v4816
    %v4901 = vpack.c.b16 %v4825, %v4821
    %v4902 = vpack.c.b16 %v4826, %v4822
    %v4903 = vpack.c.b16 %v4827, %v4823
    %v4904 = vpack.c.b16 %v4828, %v4824
    %v4905 = vpack.c.b16 %v4833, %v4829
    %v4906 = vpack.c.b16 %v4834, %v4830
    %v4907 = vpack.c.b16 %v4835, %v4831
    %v4908 = vpack.c.b16 %v4836, %v4832
    %v4909 = vpack.c.b16 %v4841, %v4837
    %v4910 = vpack.c.b16 %v4842, %v4838
    %v4911 = vpack.c.b16 %v4843, %v4839
    %v4912 = vpack.c.b16 %v4844, %v4840
    %v4913 = vpack.c.b16 %v4849, %v4845
    %v4914 = vpack.c.b16 %v4850, %v4846
    %v4915 = vpack.c.b16 %v4851, %v4847
    %v4916 = vpack.c.b16 %v4852, %v4848
    %4981 = vmatprep.subr.bf16.mxu0 %v4854
    %4982 = vmatpush1.bf16.msra.mxu0 %v4853
    %4983 = vmatprep.subr.bf16.mxu0 %v4858
    %4984 = vmatpush1.bf16.msra.mxu0 %v4857
    %4985 = vmatprep.subr.bf16.mxu0 %v4862
    %4986 = vmatpush1.bf16.msra.mxu0 %v4861
    %4987 = vmatprep.subr.bf16.mxu0 %v4866
    %4988 = vmatpush1.bf16.msra.mxu0 %v4865
    %4989 = vmatprep.subr.bf16.mxu0 %v4870
    %4990 = vmatpush1.bf16.msra.mxu0 %v4869
    %4991 = vmatprep.subr.bf16.mxu0 %v4874
    %4992 = vmatpush1.bf16.msra.mxu0 %v4873
    %4993 = vmatprep.subr.bf16.mxu0 %v4878
    %4994 = vmatpush1.bf16.msra.mxu0 %v4877
    %4995 = vmatprep.subr.bf16.mxu0 %v4882
    %4996 = vmatpush1.bf16.msra.mxu0 %v4881
    %4997 = vmatprep.subr.bf16.mxu0 %v4886
    %4998 = vmatpush1.bf16.msra.mxu0 %v4885
    %4999 = vmatprep.subr.bf16.mxu0 %v4890
    %5000 = vmatpush1.bf16.msra.mxu0 %v4889
    %5001 = vmatprep.subr.bf16.mxu0 %v4894
    %5002 = vmatpush1.bf16.msra.mxu0 %v4893
    %5003 = vmatprep.subr.bf16.mxu0 %v4898
    %5004 = vmatpush1.bf16.msra.mxu0 %v4897
    %5005 = vmatprep.subr.bf16.mxu0 %v4902
    %5006 = vmatpush1.bf16.msra.mxu0 %v4901
    %5007 = vmatprep.subr.bf16.mxu0 %v4906
    %5008 = vmatpush1.bf16.msra.mxu0 %v4905
    %5009 = vmatprep.subr.bf16.mxu0 %v4910
    %5010 = vmatpush1.bf16.msra.mxu0 %v4909
    %5011 = vmatprep.subr.bf16.mxu0 %v4914
    %5012 = vmatpush1.bf16.msra.mxu0 %v4913
    %5013 = vmatprep.mubr.bf16.mxu0 %v3997
    %5014 = vmatmul.mubr.bf16.gmra.mrb[0].mxu0 %v3996
    %v5015 = vpop.f32.mrb[0].mxu0
    %v5016 = vadd.f32 %v4610, %v5015
    %v5017 = vpop.f32.mrb[0].mxu0
    %v5018 = vadd.f32 %v4612, %v5017
    %v5019 = vpop.f32.mrb[0].mxu0
    %v5020 = vadd.f32 %v4614, %v5019
    %v5021 = vpop.f32.mrb[0].mxu0
    %v5022 = vadd.f32 %v4616, %v5021
    %5023 = vdwg.mxu0
    %5024 = vmatprep.subr.bf16.mxu0 %v4856
    %5025 = vmatpush1.bf16.msra.mxu0 %v4855
    %5026 = vmatprep.subr.bf16.mxu0 %v4860
    %5027 = vmatpush1.bf16.msra.mxu0 %v4859
    %5028 = vmatprep.subr.bf16.mxu0 %v4864
    %5029 = vmatpush1.bf16.msra.mxu0 %v4863
    %5030 = vmatprep.subr.bf16.mxu0 %v4868
    %5031 = vmatpush1.bf16.msra.mxu0 %v4867
    %5032 = vmatprep.subr.bf16.mxu0 %v4872
    %5033 = vmatpush1.bf16.msra.mxu0 %v4871
    %5034 = vmatprep.subr.bf16.mxu0 %v4876
    %5035 = vmatpush1.bf16.msra.mxu0 %v4875
    %5036 = vmatprep.subr.bf16.mxu0 %v4880
    %5037 = vmatpush1.bf16.msra.mxu0 %v4879
    %5038 = vmatprep.subr.bf16.mxu0 %v4884
    %5039 = vmatpush1.bf16.msra.mxu0 %v4883
    %5040 = vmatprep.subr.bf16.mxu0 %v4888
    %5041 = vmatpush1.bf16.msra.mxu0 %v4887
    %5042 = vmatprep.subr.bf16.mxu0 %v4892
    %5043 = vmatpush1.bf16.msra.mxu0 %v4891
    %5044 = vmatprep.subr.bf16.mxu0 %v4896
    %5045 = vmatpush1.bf16.msra.mxu0 %v4895
    %5046 = vmatprep.subr.bf16.mxu0 %v4900
    %5047 = vmatpush1.bf16.msra.mxu0 %v4899
    %5048 = vmatprep.subr.bf16.mxu0 %v4904
    %5049 = vmatpush1.bf16.msra.mxu0 %v4903
    %5050 = vmatprep.subr.bf16.mxu0 %v4908
    %5051 = vmatpush1.bf16.msra.mxu0 %v4907
    %5052 = vmatprep.subr.bf16.mxu0 %v4912
    %5053 = vmatpush1.bf16.msra.mxu0 %v4911
    %5054 = vmatprep.subr.bf16.mxu0 %v4916
    %5055 = vmatpush1.bf16.msra.mxu0 %v4915
    %5056 = vmatprep.mubr.bf16.mxu0 %v3997
    %5057 = vmatmul.mubr.bf16.gmra.mrb[0].mxu0 %v3996
    %v5058 = vpop.f32.mrb[0].mxu0
    %v5059 = vadd.f32 %v4653, %v5058
    %v5060 = vpop.f32.mrb[0].mxu0
    %v5061 = vadd.f32 %v4655, %v5060
    %v5062 = vpop.f32.mrb[0].mxu0
    %v5063 = vadd.f32 %v4657, %v5062
    %v5064 = vpop.f32.mrb[0].mxu0
    %v5065 = vadd.f32 %v4659, %v5064
    %5066 = vdwg.mxu0
    %v5067 = vrot.slane %v3958, 1
    %v5068 = vrot.slane %v3965, 1
    %v5069 = vrot.slane %v3972, 1
    %v5070 = vrot.slane %v3979, 1
    %vm5071 = vcmp.lt.s32.totalorder %v1986, 8
    %vm5072 = vmand %vm1990, %vm5071
    %v5073 = vsel %vm5072, 1, 0
    %vm5074 = vcmp.eq.s32.totalorder %v5073, 1
    %v5075 = vsel %vm5074, %v5067, 0.0
    %v5076 = vsel %vm5074, %v5068, 0.0
    %v5077 = vsel %vm5074, %v5069, 0.0
    %v5078 = vsel %vm5074, %v5070, 0.0
    %v5079 = vpack.c.bf16 %v5077, %v5075
    %v5080 = vpack.c.bf16 %v5078, %v5076
    %s5081 = scalar_lea.vmem [#allocation7], 1024
    %v5082 = vld [vmem:[%s5081] sm:$0xff]
    %v5083 = vld [vmem:[%s5081 + $0x8] sm:$0xff]
    %v5084 = vld [vmem:[%s5081 + $0x10] sm:$0xff]
    %v5085 = vld [vmem:[%s5081 + $0x18] sm:$0xff]
    %v5086 = vld [vmem:[%s5081 + $0x20] sm:$0xff]
    %v5087 = vld [vmem:[%s5081 + $0x28] sm:$0xff]
    %v5088 = vld [vmem:[%s5081 + $0x30] sm:$0xff]
    %v5089 = vld [vmem:[%s5081 + $0x38] sm:$0xff]
    %v5090 = vld [vmem:[%s5081 + $0x40] sm:$0xff]
    %v5091 = vld [vmem:[%s5081 + $0x48] sm:$0xff]
    %v5092 = vld [vmem:[%s5081 + $0x50] sm:$0xff]
    %v5093 = vld [vmem:[%s5081 + $0x58] sm:$0xff]
    %v5094 = vld [vmem:[%s5081 + $0x60] sm:$0xff]
    %v5095 = vld [vmem:[%s5081 + $0x68] sm:$0xff]
    %v5096 = vld [vmem:[%s5081 + $0x70] sm:$0xff]
    %v5097 = vld [vmem:[%s5081 + $0x78] sm:$0xff]
    %v5098 = vld [vmem:[%s5081 + $0x80] sm:$0xff]
    %v5099 = vld [vmem:[%s5081 + $0x88] sm:$0xff]
    %v5100 = vld [vmem:[%s5081 + $0x90] sm:$0xff]
    %v5101 = vld [vmem:[%s5081 + $0x98] sm:$0xff]
    %v5102 = vld [vmem:[%s5081 + $0xa0] sm:$0xff]
    %v5103 = vld [vmem:[%s5081 + $0xa8] sm:$0xff]
    %v5104 = vld [vmem:[%s5081 + $0xb0] sm:$0xff]
    %v5105 = vld [vmem:[%s5081 + $0xb8] sm:$0xff]
    %v5106 = vld [vmem:[%s5081 + $0xc0] sm:$0xff]
    %v5107 = vld [vmem:[%s5081 + $0xc8] sm:$0xff]
    %v5108 = vld [vmem:[%s5081 + $0xd0] sm:$0xff]
    %v5109 = vld [vmem:[%s5081 + $0xd8] sm:$0xff]
    %v5110 = vld [vmem:[%s5081 + $0xe0] sm:$0xff]
    %v5111 = vld [vmem:[%s5081 + $0xe8] sm:$0xff]
    %v5112 = vld [vmem:[%s5081 + $0xf0] sm:$0xff]
    %v5113 = vld [vmem:[%s5081 + $0xf8] sm:$0xff]
    %v5114 = vld [vmem:[%s5081 + $0x100] sm:$0xff]
    %v5115 = vld [vmem:[%s5081 + $0x108] sm:$0xff]
    %v5116 = vld [vmem:[%s5081 + $0x110] sm:$0xff]
    %v5117 = vld [vmem:[%s5081 + $0x118] sm:$0xff]
    %v5118 = vld [vmem:[%s5081 + $0x120] sm:$0xff]
    %v5119 = vld [vmem:[%s5081 + $0x128] sm:$0xff]
    %v5120 = vld [vmem:[%s5081 + $0x130] sm:$0xff]
    %v5121 = vld [vmem:[%s5081 + $0x138] sm:$0xff]
    %v5122 = vld [vmem:[%s5081 + $0x140] sm:$0xff]
    %v5123 = vld [vmem:[%s5081 + $0x148] sm:$0xff]
    %v5124 = vld [vmem:[%s5081 + $0x150] sm:$0xff]
    %v5125 = vld [vmem:[%s5081 + $0x158] sm:$0xff]
    %v5126 = vld [vmem:[%s5081 + $0x160] sm:$0xff]
    %v5127 = vld [vmem:[%s5081 + $0x168] sm:$0xff]
    %v5128 = vld [vmem:[%s5081 + $0x170] sm:$0xff]
    %v5129 = vld [vmem:[%s5081 + $0x178] sm:$0xff]
    %v5130 = vld [vmem:[%s5081 + $0x180] sm:$0xff]
    %v5131 = vld [vmem:[%s5081 + $0x188] sm:$0xff]
    %v5132 = vld [vmem:[%s5081 + $0x190] sm:$0xff]
    %v5133 = vld [vmem:[%s5081 + $0x198] sm:$0xff]
    %v5134 = vld [vmem:[%s5081 + $0x1a0] sm:$0xff]
    %v5135 = vld [vmem:[%s5081 + $0x1a8] sm:$0xff]
    %v5136 = vld [vmem:[%s5081 + $0x1b0] sm:$0xff]
    %v5137 = vld [vmem:[%s5081 + $0x1b8] sm:$0xff]
    %v5138 = vld [vmem:[%s5081 + $0x1c0] sm:$0xff]
    %v5139 = vld [vmem:[%s5081 + $0x1c8] sm:$0xff]
    %v5140 = vld [vmem:[%s5081 + $0x1d0] sm:$0xff]
    %v5141 = vld [vmem:[%s5081 + $0x1d8] sm:$0xff]
    %v5142 = vld [vmem:[%s5081 + $0x1e0] sm:$0xff]
    %v5143 = vld [vmem:[%s5081 + $0x1e8] sm:$0xff]
    %v5144 = vld [vmem:[%s5081 + $0x1f0] sm:$0xff]
    %v5145 = vld [vmem:[%s5081 + $0x1f8] sm:$0xff]
    %v5210 = vunpack.c.l.b16 %v5082
    %v5211 = vunpack.c.h.b16 %v5082
    %v5212 = vunpack.c.l.b16 %v5083
    %v5213 = vunpack.c.h.b16 %v5083
    %v5214 = vunpack.c.l.b16 %v5084
    %v5215 = vunpack.c.h.b16 %v5084
    %v5216 = vunpack.c.l.b16 %v5085
    %v5217 = vunpack.c.h.b16 %v5085
    %v5218 = vunpack.c.l.b16 %v5086
    %v5219 = vunpack.c.h.b16 %v5086
    %v5220 = vunpack.c.l.b16 %v5087
    %v5221 = vunpack.c.h.b16 %v5087
    %v5222 = vunpack.c.l.b16 %v5088
    %v5223 = vunpack.c.h.b16 %v5088
    %v5224 = vunpack.c.l.b16 %v5089
    %v5225 = vunpack.c.h.b16 %v5089
    %v5226 = vunpack.c.l.b16 %v5090
    %v5227 = vunpack.c.h.b16 %v5090
    %v5228 = vunpack.c.l.b16 %v5091
    %v5229 = vunpack.c.h.b16 %v5091
    %v5230 = vunpack.c.l.b16 %v5092
    %v5231 = vunpack.c.h.b16 %v5092
    %v5232 = vunpack.c.l.b16 %v5093
    %v5233 = vunpack.c.h.b16 %v5093
    %v5234 = vunpack.c.l.b16 %v5094
    %v5235 = vunpack.c.h.b16 %v5094
    %v5236 = vunpack.c.l.b16 %v5095
    %v5237 = vunpack.c.h.b16 %v5095
    %v5238 = vunpack.c.l.b16 %v5096
    %v5239 = vunpack.c.h.b16 %v5096
    %v5240 = vunpack.c.l.b16 %v5097
    %v5241 = vunpack.c.h.b16 %v5097
    %v5242 = vunpack.c.l.b16 %v5098
    %v5243 = vunpack.c.h.b16 %v5098
    %v5244 = vunpack.c.l.b16 %v5099
    %v5245 = vunpack.c.h.b16 %v5099
    %v5246 = vunpack.c.l.b16 %v5100
    %v5247 = vunpack.c.h.b16 %v5100
    %v5248 = vunpack.c.l.b16 %v5101
    %v5249 = vunpack.c.h.b16 %v5101
    %v5250 = vunpack.c.l.b16 %v5102
    %v5251 = vunpack.c.h.b16 %v5102
    %v5252 = vunpack.c.l.b16 %v5103
    %v5253 = vunpack.c.h.b16 %v5103
    %v5254 = vunpack.c.l.b16 %v5104
    %v5255 = vunpack.c.h.b16 %v5104
    %v5256 = vunpack.c.l.b16 %v5105
    %v5257 = vunpack.c.h.b16 %v5105
    %v5258 = vunpack.c.l.b16 %v5106
    %v5259 = vunpack.c.h.b16 %v5106
    %v5260 = vunpack.c.l.b16 %v5107
    %v5261 = vunpack.c.h.b16 %v5107
    %v5262 = vunpack.c.l.b16 %v5108
    %v5263 = vunpack.c.h.b16 %v5108
    %v5264 = vunpack.c.l.b16 %v5109
    %v5265 = vunpack.c.h.b16 %v5109
    %v5266 = vunpack.c.l.b16 %v5110
    %v5267 = vunpack.c.h.b16 %v5110
    %v5268 = vunpack.c.l.b16 %v5111
    %v5269 = vunpack.c.h.b16 %v5111
    %v5270 = vunpack.c.l.b16 %v5112
    %v5271 = vunpack.c.h.b16 %v5112
    %v5272 = vunpack.c.l.b16 %v5113
    %v5273 = vunpack.c.h.b16 %v5113
    %v5274 = vunpack.c.l.b16 %v5114
    %v5275 = vunpack.c.h.b16 %v5114
    %v5276 = vunpack.c.l.b16 %v5115
    %v5277 = vunpack.c.h.b16 %v5115
    %v5278 = vunpack.c.l.b16 %v5116
    %v5279 = vunpack.c.h.b16 %v5116
    %v5280 = vunpack.c.l.b16 %v5117
    %v5281 = vunpack.c.h.b16 %v5117
    %v5282 = vunpack.c.l.b16 %v5118
    %v5283 = vunpack.c.h.b16 %v5118
    %v5284 = vunpack.c.l.b16 %v5119
    %v5285 = vunpack.c.h.b16 %v5119
    %v5286 = vunpack.c.l.b16 %v5120
    %v5287 = vunpack.c.h.b16 %v5120
    %v5288 = vunpack.c.l.b16 %v5121
    %v5289 = vunpack.c.h.b16 %v5121
    %v5290 = vunpack.c.l.b16 %v5122
    %v5291 = vunpack.c.h.b16 %v5122
    %v5292 = vunpack.c.l.b16 %v5123
    %v5293 = vunpack.c.h.b16 %v5123
    %v5294 = vunpack.c.l.b16 %v5124
    %v5295 = vunpack.c.h.b16 %v5124
    %v5296 = vunpack.c.l.b16 %v5125
    %v5297 = vunpack.c.h.b16 %v5125
    %v5298 = vunpack.c.l.b16 %v5126
    %v5299 = vunpack.c.h.b16 %v5126
    %v5300 = vunpack.c.l.b16 %v5127
    %v5301 = vunpack.c.h.b16 %v5127
    %v5302 = vunpack.c.l.b16 %v5128
    %v5303 = vunpack.c.h.b16 %v5128
    %v5304 = vunpack.c.l.b16 %v5129
    %v5305 = vunpack.c.h.b16 %v5129
    %v5306 = vunpack.c.l.b16 %v5130
    %v5307 = vunpack.c.h.b16 %v5130
    %v5308 = vunpack.c.l.b16 %v5131
    %v5309 = vunpack.c.h.b16 %v5131
    %v5310 = vunpack.c.l.b16 %v5132
    %v5311 = vunpack.c.h.b16 %v5132
    %v5312 = vunpack.c.l.b16 %v5133
    %v5313 = vunpack.c.h.b16 %v5133
    %v5314 = vunpack.c.l.b16 %v5134
    %v5315 = vunpack.c.h.b16 %v5134
    %v5316 = vunpack.c.l.b16 %v5135
    %v5317 = vunpack.c.h.b16 %v5135
    %v5318 = vunpack.c.l.b16 %v5136
    %v5319 = vunpack.c.h.b16 %v5136
    %v5320 = vunpack.c.l.b16 %v5137
    %v5321 = vunpack.c.h.b16 %v5137
    %v5322 = vunpack.c.l.b16 %v5138
    %v5323 = vunpack.c.h.b16 %v5138
    %v5324 = vunpack.c.l.b16 %v5139
    %v5325 = vunpack.c.h.b16 %v5139
    %v5326 = vunpack.c.l.b16 %v5140
    %v5327 = vunpack.c.h.b16 %v5140
    %v5328 = vunpack.c.l.b16 %v5141
    %v5329 = vunpack.c.h.b16 %v5141
    %v5330 = vunpack.c.l.b16 %v5142
    %v5331 = vunpack.c.h.b16 %v5142
    %v5332 = vunpack.c.l.b16 %v5143
    %v5333 = vunpack.c.h.b16 %v5143
    %v5334 = vunpack.c.l.b16 %v5144
    %v5335 = vunpack.c.h.b16 %v5144
    %v5336 = vunpack.c.l.b16 %v5145
    %v5337 = vunpack.c.h.b16 %v5145
    %v5338 = vpack.c.b16 %v5214, %v5210
    %v5339 = vpack.c.b16 %v5215, %v5211
    %v5340 = vpack.c.b16 %v5216, %v5212
    %v5341 = vpack.c.b16 %v5217, %v5213
    %v5342 = vpack.c.b16 %v5222, %v5218
    %v5343 = vpack.c.b16 %v5223, %v5219
    %v5344 = vpack.c.b16 %v5224, %v5220
    %v5345 = vpack.c.b16 %v5225, %v5221
    %v5346 = vpack.c.b16 %v5230, %v5226
    %v5347 = vpack.c.b16 %v5231, %v5227
    %v5348 = vpack.c.b16 %v5232, %v5228
    %v5349 = vpack.c.b16 %v5233, %v5229
    %v5350 = vpack.c.b16 %v5238, %v5234
    %v5351 = vpack.c.b16 %v5239, %v5235
    %v5352 = vpack.c.b16 %v5240, %v5236
    %v5353 = vpack.c.b16 %v5241, %v5237
    %v5354 = vpack.c.b16 %v5246, %v5242
    %v5355 = vpack.c.b16 %v5247, %v5243
    %v5356 = vpack.c.b16 %v5248, %v5244
    %v5357 = vpack.c.b16 %v5249, %v5245
    %v5358 = vpack.c.b16 %v5254, %v5250
    %v5359 = vpack.c.b16 %v5255, %v5251
    %v5360 = vpack.c.b16 %v5256, %v5252
    %v5361 = vpack.c.b16 %v5257, %v5253
    %v5362 = vpack.c.b16 %v5262, %v5258
    %v5363 = vpack.c.b16 %v5263, %v5259
    %v5364 = vpack.c.b16 %v5264, %v5260
    %v5365 = vpack.c.b16 %v5265, %v5261
    %v5366 = vpack.c.b16 %v5270, %v5266
    %v5367 = vpack.c.b16 %v5271, %v5267
    %v5368 = vpack.c.b16 %v5272, %v5268
    %v5369 = vpack.c.b16 %v5273, %v5269
    %v5370 = vpack.c.b16 %v5278, %v5274
    %v5371 = vpack.c.b16 %v5279, %v5275
    %v5372 = vpack.c.b16 %v5280, %v5276
    %v5373 = vpack.c.b16 %v5281, %v5277
    %v5374 = vpack.c.b16 %v5286, %v5282
    %v5375 = vpack.c.b16 %v5287, %v5283
    %v5376 = vpack.c.b16 %v5288, %v5284
    %v5377 = vpack.c.b16 %v5289, %v5285
    %v5378 = vpack.c.b16 %v5294, %v5290
    %v5379 = vpack.c.b16 %v5295, %v5291
    %v5380 = vpack.c.b16 %v5296, %v5292
    %v5381 = vpack.c.b16 %v5297, %v5293
    %v5382 = vpack.c.b16 %v5302, %v5298
    %v5383 = vpack.c.b16 %v5303, %v5299
    %v5384 = vpack.c.b16 %v5304, %v5300
    %v5385 = vpack.c.b16 %v5305, %v5301
    %v5386 = vpack.c.b16 %v5310, %v5306
    %v5387 = vpack.c.b16 %v5311, %v5307
    %v5388 = vpack.c.b16 %v5312, %v5308
    %v5389 = vpack.c.b16 %v5313, %v5309
    %v5390 = vpack.c.b16 %v5318, %v5314
    %v5391 = vpack.c.b16 %v5319, %v5315
    %v5392 = vpack.c.b16 %v5320, %v5316
    %v5393 = vpack.c.b16 %v5321, %v5317
    %v5394 = vpack.c.b16 %v5326, %v5322
    %v5395 = vpack.c.b16 %v5327, %v5323
    %v5396 = vpack.c.b16 %v5328, %v5324
    %v5397 = vpack.c.b16 %v5329, %v5325
    %v5398 = vpack.c.b16 %v5334, %v5330
    %v5399 = vpack.c.b16 %v5335, %v5331
    %v5400 = vpack.c.b16 %v5336, %v5332
    %v5401 = vpack.c.b16 %v5337, %v5333
    %5466 = vmatprep.subr.bf16.mxu0 %v5339
    %5467 = vmatpush1.bf16.msra.mxu0 %v5338
    %5468 = vmatprep.subr.bf16.mxu0 %v5343
    %5469 = vmatpush1.bf16.msra.mxu0 %v5342
    %5470 = vmatprep.subr.bf16.mxu0 %v5347
    %5471 = vmatpush1.bf16.msra.mxu0 %v5346
    %5472 = vmatprep.subr.bf16.mxu0 %v5351
    %5473 = vmatpush1.bf16.msra.mxu0 %v5350
    %5474 = vmatprep.subr.bf16.mxu0 %v5355
    %5475 = vmatpush1.bf16.msra.mxu0 %v5354
    %5476 = vmatprep.subr.bf16.mxu0 %v5359
    %5477 = vmatpush1.bf16.msra.mxu0 %v5358
    %5478 = vmatprep.subr.bf16.mxu0 %v5363
    %5479 = vmatpush1.bf16.msra.mxu0 %v5362
    %5480 = vmatprep.subr.bf16.mxu0 %v5367
    %5481 = vmatpush1.bf16.msra.mxu0 %v5366
    %5482 = vmatprep.subr.bf16.mxu0 %v5371
    %5483 = vmatpush1.bf16.msra.mxu0 %v5370
    %5484 = vmatprep.subr.bf16.mxu0 %v5375
    %5485 = vmatpush1.bf16.msra.mxu0 %v5374
    %5486 = vmatprep.subr.bf16.mxu0 %v5379
    %5487 = vmatpush1.bf16.msra.mxu0 %v5378
    %5488 = vmatprep.subr.bf16.mxu0 %v5383
    %5489 = vmatpush1.bf16.msra.mxu0 %v5382
    %5490 = vmatprep.subr.bf16.mxu0 %v5387
    %5491 = vmatpush1.bf16.msra.mxu0 %v5386
    %5492 = vmatprep.subr.bf16.mxu0 %v5391
    %5493 = vmatpush1.bf16.msra.mxu0 %v5390
    %5494 = vmatprep.subr.bf16.mxu0 %v5395
    %5495 = vmatpush1.bf16.msra.mxu0 %v5394
    %5496 = vmatprep.subr.bf16.mxu0 %v5399
    %5497 = vmatpush1.bf16.msra.mxu0 %v5398
    %5498 = vmatprep.mubr.bf16.mxu0 %v5080
    %5499 = vmatmul.mubr.bf16.gmra.mrb[0].mxu0 %v5079
    %v5500 = vpop.f32.mrb[0].mxu0
    %v5501 = vadd.f32 0.0, %v5500
    %v5502 = vpop.f32.mrb[0].mxu0
    %v5503 = vadd.f32 0.0, %v5502
    %v5504 = vpop.f32.mrb[0].mxu0
    %v5505 = vadd.f32 0.0, %v5504
    %v5506 = vpop.f32.mrb[0].mxu0
    %v5507 = vadd.f32 0.0, %v5506
    %5508 = vdwg.mxu0
    %5509 = vmatprep.subr.bf16.mxu0 %v5341
    %5510 = vmatpush1.bf16.msra.mxu0 %v5340
    %5511 = vmatprep.subr.bf16.mxu0 %v5345
    %5512 = vmatpush1.bf16.msra.mxu0 %v5344
    %5513 = vmatprep.subr.bf16.mxu0 %v5349
    %5514 = vmatpush1.bf16.msra.mxu0 %v5348
    %5515 = vmatprep.subr.bf16.mxu0 %v5353
    %5516 = vmatpush1.bf16.msra.mxu0 %v5352
    %5517 = vmatprep.subr.bf16.mxu0 %v5357
    %5518 = vmatpush1.bf16.msra.mxu0 %v5356
    %5519 = vmatprep.subr.bf16.mxu0 %v5361
    %5520 = vmatpush1.bf16.msra.mxu0 %v5360
    %5521 = vmatprep.subr.bf16.mxu0 %v5365
    %5522 = vmatpush1.bf16.msra.mxu0 %v5364
    %5523 = vmatprep.subr.bf16.mxu0 %v5369
    %5524 = vmatpush1.bf16.msra.mxu0 %v5368
    %5525 = vmatprep.subr.bf16.mxu0 %v5373
    %5526 = vmatpush1.bf16.msra.mxu0 %v5372
    %5527 = vmatprep.subr.bf16.mxu0 %v5377
    %5528 = vmatpush1.bf16.msra.mxu0 %v5376
    %5529 = vmatprep.subr.bf16.mxu0 %v5381
    %5530 = vmatpush1.bf16.msra.mxu0 %v5380
    %5531 = vmatprep.subr.bf16.mxu0 %v5385
    %5532 = vmatpush1.bf16.msra.mxu0 %v5384
    %5533 = vmatprep.subr.bf16.mxu0 %v5389
    %5534 = vmatpush1.bf16.msra.mxu0 %v5388
    %5535 = vmatprep.subr.bf16.mxu0 %v5393
    %5536 = vmatpush1.bf16.msra.mxu0 %v5392
    %5537 = vmatprep.subr.bf16.mxu0 %v5397
    %5538 = vmatpush1.bf16.msra.mxu0 %v5396
    %5539 = vmatprep.subr.bf16.mxu0 %v5401
    %5540 = vmatpush1.bf16.msra.mxu0 %v5400
    %5541 = vmatprep.mubr.bf16.mxu0 %v5080
    %5542 = vmatmul.mubr.bf16.gmra.mrb[0].mxu0 %v5079
    %v5543 = vpop.f32.mrb[0].mxu0
    %v5544 = vadd.f32 0.0, %v5543
    %v5545 = vpop.f32.mrb[0].mxu0
    %v5546 = vadd.f32 0.0, %v5545
    %v5547 = vpop.f32.mrb[0].mxu0
    %v5548 = vadd.f32 0.0, %v5547
    %v5549 = vpop.f32.mrb[0].mxu0
    %v5550 = vadd.f32 0.0, %v5549
    %5551 = vdwg.mxu0
    %v5552 = vadd.f32 %v5016, %v5501
    %v5553 = vadd.f32 %v5018, %v5503
    %v5554 = vadd.f32 %v5059, %v5544
    %v5555 = vadd.f32 %v5061, %v5546
    %v5556 = vadd.f32 %v5020, %v5505
    %v5557 = vadd.f32 %v5022, %v5507
    %v5558 = vadd.f32 %v5063, %v5548
    %v5559 = vadd.f32 %v5065, %v5550
    %v5560 = vld [vmem:[%s8] sm:$0xf]
    %v5562 = vlaneseq
    %v5563 = vshrl.u32 %v5562, 7
    %v5564 = vsub.s32 0, %v5563
    %v5565 = vrot.slane %v5560, %v5564
    %v5566 = vlaneseq
    %v5567 = vshrl.u32 %v5566, 7
    %v5568 = vsub.s32 1, %v5567
    %v5569 = vrot.slane %v5560, %v5568
    %v5570 = vlaneseq
    %v5571 = vshrl.u32 %v5570, 7
    %v5572 = vsub.s32 2, %v5571
    %v5573 = vrot.slane %v5560, %v5572
    %v5574 = vlaneseq
    %v5575 = vshrl.u32 %v5574, 7
    %v5576 = vsub.s32 3, %v5575
    %v5577 = vrot.slane %v5560, %v5576
    %v5582 = vadd.f32 %v5552, %v5565
    %v5583 = vadd.f32 %v5553, %v5569
    %v5584 = vadd.f32 %v5554, %v5573
    %v5585 = vadd.f32 %v5555, %v5577
    %v5586 = vadd.f32 %v5556, %v5565
    %v5587 = vadd.f32 %v5557, %v5569
    %v5588 = vadd.f32 %v5558, %v5573
    %v5589 = vadd.f32 %v5559, %v5577
    %v5590 = vmax.f32 %v5582, 0.0
    %v5591 = vmax.f32 %v5583, 0.0
    %v5592 = vmax.f32 %v5584, 0.0
    %v5593 = vmax.f32 %v5585, 0.0
    %v5594 = vmax.f32 %v5586, 0.0
    %v5595 = vmax.f32 %v5587, 0.0
    %v5596 = vmax.f32 %v5588, 0.0
    %v5597 = vmax.f32 %v5589, 0.0
    %v5598 = vrot.slane %v5590, 4
    %v5599 = vadd.f32 %v5590, %v5598
    %v5600 = vrot.slane %v5599, 2
    %v5601 = vadd.f32 %v5599, %v5600
    %v5602 = vrot.slane %v5601, 1
    %v5603 = vadd.f32 %v5601, %v5602
    %v5604 = vrot.slane %v5591, 4
    %v5605 = vadd.f32 %v5591, %v5604
    %v5606 = vrot.slane %v5605, 2
    %v5607 = vadd.f32 %v5605, %v5606
    %v5608 = vrot.slane %v5607, 1
    %v5609 = vadd.f32 %v5607, %v5608
    %v5610 = vrot.slane %v5592, 4
    %v5611 = vadd.f32 %v5592, %v5610
    %v5612 = vrot.slane %v5611, 2
    %v5613 = vadd.f32 %v5611, %v5612
    %v5614 = vrot.slane %v5613, 1
    %v5615 = vadd.f32 %v5613, %v5614
    %v5616 = vrot.slane %v5593, 4
    %v5617 = vadd.f32 %v5593, %v5616
    %v5618 = vrot.slane %v5617, 2
    %v5619 = vadd.f32 %v5617, %v5618
    %v5620 = vrot.slane %v5619, 1
    %v5621 = vadd.f32 %v5619, %v5620
    %v5622 = vrot.slane %v5594, 4
    %v5623 = vadd.f32 %v5594, %v5622
    %v5624 = vrot.slane %v5623, 2
    %v5625 = vadd.f32 %v5623, %v5624
    %v5626 = vrot.slane %v5625, 1
    %v5627 = vadd.f32 %v5625, %v5626
    %v5628 = vrot.slane %v5595, 4
    %v5629 = vadd.f32 %v5595, %v5628
    %v5630 = vrot.slane %v5629, 2
    %v5631 = vadd.f32 %v5629, %v5630
    %v5632 = vrot.slane %v5631, 1
    %v5633 = vadd.f32 %v5631, %v5632
    %v5634 = vrot.slane %v5596, 4
    %v5635 = vadd.f32 %v5596, %v5634
    %v5636 = vrot.slane %v5635, 2
    %v5637 = vadd.f32 %v5635, %v5636
    %v5638 = vrot.slane %v5637, 1
    %v5639 = vadd.f32 %v5637, %v5638
    %v5640 = vrot.slane %v5597, 4
    %v5641 = vadd.f32 %v5597, %v5640
    %v5642 = vrot.slane %v5641, 2
    %v5643 = vadd.f32 %v5641, %v5642
    %v5644 = vrot.slane %v5643, 1
    %v5645 = vadd.f32 %v5643, %v5644
    %v5646 = vrcp.pop 8.0
    %v5647 = vmul.f32 %v5603, %v5646
    %v5648 = vmul.f32 %v5609, %v5646
    %v5649 = vmul.f32 %v5615, %v5646
    %v5650 = vmul.f32 %v5621, %v5646
    %v5651 = vmul.f32 %v5627, %v5646
    %v5652 = vmul.f32 %v5633, %v5646
    %v5653 = vmul.f32 %v5639, %v5646
    %v5654 = vmul.f32 %v5645, %v5646
    %v5655 = vpack.c.bf16 %v5647, %v5647
    %v5656 = vpack.c.bf16 %v5648, %v5648
    %v5657 = vpack.c.bf16 %v5649, %v5649
    %v5658 = vpack.c.bf16 %v5650, %v5650
    %v5659 = vpack.c.bf16 %v5651, %v5651
    %v5660 = vpack.c.bf16 %v5652, %v5652
    %v5661 = vpack.c.bf16 %v5653, %v5653
    %v5662 = vpack.c.bf16 %v5654, %v5654
    %v5663 = vld [vmem:[#allocation8] sm:$0xff]
    %v5664 = vld [vmem:[#allocation8 + $0x8] sm:$0xff]
    %v5665 = vld [vmem:[#allocation8 + $0x10] sm:$0xff]
    %v5666 = vld [vmem:[#allocation8 + $0x18] sm:$0xff]
    %v5667 = vld [vmem:[#allocation8 + $0x20] sm:$0xff]
    %v5668 = vld [vmem:[#allocation8 + $0x28] sm:$0xff]
    %v5669 = vld [vmem:[#allocation8 + $0x30] sm:$0xff]
    %v5670 = vld [vmem:[#allocation8 + $0x38] sm:$0xff]
    %v5671 = vld [vmem:[#allocation8 + $0x40] sm:$0xff]
    %v5672 = vld [vmem:[#allocation8 + $0x48] sm:$0xff]
    %v5673 = vld [vmem:[#allocation8 + $0x50] sm:$0xff]
    %v5674 = vld [vmem:[#allocation8 + $0x58] sm:$0xff]
    %v5675 = vld [vmem:[#allocation8 + $0x60] sm:$0xff]
    %v5676 = vld [vmem:[#allocation8 + $0x68] sm:$0xff]
    %v5677 = vld [vmem:[#allocation8 + $0x70] sm:$0xff]
    %v5678 = vld [vmem:[#allocation8 + $0x78] sm:$0xff]
    %v5679 = vld [vmem:[#allocation8 + $0x80] sm:$0xff]
    %v5680 = vld [vmem:[#allocation8 + $0x88] sm:$0xff]
    %v5681 = vld [vmem:[#allocation8 + $0x90] sm:$0xff]
    %v5682 = vld [vmem:[#allocation8 + $0x98] sm:$0xff]
    %v5683 = vld [vmem:[#allocation8 + $0xa0] sm:$0xff]
    %v5684 = vld [vmem:[#allocation8 + $0xa8] sm:$0xff]
    %v5685 = vld [vmem:[#allocation8 + $0xb0] sm:$0xff]
    %v5686 = vld [vmem:[#allocation8 + $0xb8] sm:$0xff]
    %v5687 = vld [vmem:[#allocation8 + $0xc0] sm:$0xff]
    %v5688 = vld [vmem:[#allocation8 + $0xc8] sm:$0xff]
    %v5689 = vld [vmem:[#allocation8 + $0xd0] sm:$0xff]
    %v5690 = vld [vmem:[#allocation8 + $0xd8] sm:$0xff]
    %v5691 = vld [vmem:[#allocation8 + $0xe0] sm:$0xff]
    %v5692 = vld [vmem:[#allocation8 + $0xe8] sm:$0xff]
    %v5693 = vld [vmem:[#allocation8 + $0xf0] sm:$0xff]
    %v5694 = vld [vmem:[#allocation8 + $0xf8] sm:$0xff]
    %v5695 = vld [vmem:[#allocation8 + $0x100] sm:$0xff]
    %v5696 = vld [vmem:[#allocation8 + $0x108] sm:$0xff]
    %v5697 = vld [vmem:[#allocation8 + $0x110] sm:$0xff]
    %v5698 = vld [vmem:[#allocation8 + $0x118] sm:$0xff]
    %v5699 = vld [vmem:[#allocation8 + $0x120] sm:$0xff]
    %v5700 = vld [vmem:[#allocation8 + $0x128] sm:$0xff]
    %v5701 = vld [vmem:[#allocation8 + $0x130] sm:$0xff]
    %v5702 = vld [vmem:[#allocation8 + $0x138] sm:$0xff]
    %v5703 = vld [vmem:[#allocation8 + $0x140] sm:$0xff]
    %v5704 = vld [vmem:[#allocation8 + $0x148] sm:$0xff]
    %v5705 = vld [vmem:[#allocation8 + $0x150] sm:$0xff]
    %v5706 = vld [vmem:[#allocation8 + $0x158] sm:$0xff]
    %v5707 = vld [vmem:[#allocation8 + $0x160] sm:$0xff]
    %v5708 = vld [vmem:[#allocation8 + $0x168] sm:$0xff]
    %v5709 = vld [vmem:[#allocation8 + $0x170] sm:$0xff]
    %v5710 = vld [vmem:[#allocation8 + $0x178] sm:$0xff]
    %v5711 = vld [vmem:[#allocation8 + $0x180] sm:$0xff]
    %v5712 = vld [vmem:[#allocation8 + $0x188] sm:$0xff]
    %v5713 = vld [vmem:[#allocation8 + $0x190] sm:$0xff]
    %v5714 = vld [vmem:[#allocation8 + $0x198] sm:$0xff]
    %v5715 = vld [vmem:[#allocation8 + $0x1a0] sm:$0xff]
    %v5716 = vld [vmem:[#allocation8 + $0x1a8] sm:$0xff]
    %v5717 = vld [vmem:[#allocation8 + $0x1b0] sm:$0xff]
    %v5718 = vld [vmem:[#allocation8 + $0x1b8] sm:$0xff]
    %v5719 = vld [vmem:[#allocation8 + $0x1c0] sm:$0xff]
    %v5720 = vld [vmem:[#allocation8 + $0x1c8] sm:$0xff]
    %v5721 = vld [vmem:[#allocation8 + $0x1d0] sm:$0xff]
    %v5722 = vld [vmem:[#allocation8 + $0x1d8] sm:$0xff]
    %v5723 = vld [vmem:[#allocation8 + $0x1e0] sm:$0xff]
    %v5724 = vld [vmem:[#allocation8 + $0x1e8] sm:$0xff]
    %v5725 = vld [vmem:[#allocation8 + $0x1f0] sm:$0xff]
    %v5726 = vld [vmem:[#allocation8 + $0x1f8] sm:$0xff]
    %v5727 = vld [vmem:[%s10] sm:$0x3]
    %v5729 = vlaneseq
    %v5730 = vshrl.u32 %v5729, 7
    %v5731 = vsub.s32 0, %v5730
    %v5732 = vrot.slane %v5727, %v5731
    %v5733 = vlaneseq
    %v5734 = vshrl.u32 %v5733, 7
    %v5735 = vsub.s32 1, %v5734
    %v5736 = vrot.slane %v5727, %v5735
    %v5747 = vunpack.c.l.b16 %v5655
    %v5748 = vunpack.c.l.b16 %v5656
    %v5749 = vunpack.c.l.b16 %v5657
    %v5750 = vunpack.c.l.b16 %v5658
    %v5751 = vunpack.c.l.b16 %v5659
    %v5752 = vunpack.c.l.b16 %v5660
    %v5753 = vunpack.c.l.b16 %v5661
    %v5754 = vunpack.c.l.b16 %v5662
    %v5755 = vsel %vm1202, %v5751, %v5747
    %v5756 = vsel %vm1202, %v5752, %v5748
    %v5757 = vsel %vm1202, %v5753, %v5749
    %v5758 = vsel %vm1202, %v5754, %v5750
    %v5759 = vpack.c.b16 %v5755, %v5755
    %v5760 = vpack.c.b16 %v5756, %v5756
    %v5761 = vpack.c.b16 %v5757, %v5757
    %v5762 = vpack.c.b16 %v5758, %v5758
    %v5831 = vunpack.c.l.b16 %v5663
    %v5832 = vunpack.c.h.b16 %v5663
    %v5833 = vunpack.c.l.b16 %v5664
    %v5834 = vunpack.c.h.b16 %v5664
    %v5835 = vunpack.c.l.b16 %v5665
    %v5836 = vunpack.c.h.b16 %v5665
    %v5837 = vunpack.c.l.b16 %v5666
    %v5838 = vunpack.c.h.b16 %v5666
    %v5839 = vunpack.c.l.b16 %v5667
    %v5840 = vunpack.c.h.b16 %v5667
    %v5841 = vunpack.c.l.b16 %v5668
    %v5842 = vunpack.c.h.b16 %v5668
    %v5843 = vunpack.c.l.b16 %v5669
    %v5844 = vunpack.c.h.b16 %v5669
    %v5845 = vunpack.c.l.b16 %v5670
    %v5846 = vunpack.c.h.b16 %v5670
    %v5847 = vunpack.c.l.b16 %v5671
    %v5848 = vunpack.c.h.b16 %v5671
    %v5849 = vunpack.c.l.b16 %v5672
    %v5850 = vunpack.c.h.b16 %v5672
    %v5851 = vunpack.c.l.b16 %v5673
    %v5852 = vunpack.c.h.b16 %v5673
    %v5853 = vunpack.c.l.b16 %v5674
    %v5854 = vunpack.c.h.b16 %v5674
    %v5855 = vunpack.c.l.b16 %v5675
    %v5856 = vunpack.c.h.b16 %v5675
    %v5857 = vunpack.c.l.b16 %v5676
    %v5858 = vunpack.c.h.b16 %v5676
    %v5859 = vunpack.c.l.b16 %v5677
    %v5860 = vunpack.c.h.b16 %v5677
    %v5861 = vunpack.c.l.b16 %v5678
    %v5862 = vunpack.c.h.b16 %v5678
    %v5863 = vunpack.c.l.b16 %v5679
    %v5864 = vunpack.c.h.b16 %v5679
    %v5865 = vunpack.c.l.b16 %v5680
    %v5866 = vunpack.c.h.b16 %v5680
    %v5867 = vunpack.c.l.b16 %v5681
    %v5868 = vunpack.c.h.b16 %v5681
    %v5869 = vunpack.c.l.b16 %v5682
    %v5870 = vunpack.c.h.b16 %v5682
    %v5871 = vunpack.c.l.b16 %v5683
    %v5872 = vunpack.c.h.b16 %v5683
    %v5873 = vunpack.c.l.b16 %v5684
    %v5874 = vunpack.c.h.b16 %v5684
    %v5875 = vunpack.c.l.b16 %v5685
    %v5876 = vunpack.c.h.b16 %v5685
    %v5877 = vunpack.c.l.b16 %v5686
    %v5878 = vunpack.c.h.b16 %v5686
    %v5879 = vunpack.c.l.b16 %v5687
    %v5880 = vunpack.c.h.b16 %v5687
    %v5881 = vunpack.c.l.b16 %v5688
    %v5882 = vunpack.c.h.b16 %v5688
    %v5883 = vunpack.c.l.b16 %v5689
    %v5884 = vunpack.c.h.b16 %v5689
    %v5885 = vunpack.c.l.b16 %v5690
    %v5886 = vunpack.c.h.b16 %v5690
    %v5887 = vunpack.c.l.b16 %v5691
    %v5888 = vunpack.c.h.b16 %v5691
    %v5889 = vunpack.c.l.b16 %v5692
    %v5890 = vunpack.c.h.b16 %v5692
    %v5891 = vunpack.c.l.b16 %v5693
    %v5892 = vunpack.c.h.b16 %v5693
    %v5893 = vunpack.c.l.b16 %v5694
    %v5894 = vunpack.c.h.b16 %v5694
    %v5895 = vunpack.c.l.b16 %v5695
    %v5896 = vunpack.c.h.b16 %v5695
    %v5897 = vunpack.c.l.b16 %v5696
    %v5898 = vunpack.c.h.b16 %v5696
    %v5899 = vunpack.c.l.b16 %v5697
    %v5900 = vunpack.c.h.b16 %v5697
    %v5901 = vunpack.c.l.b16 %v5698
    %v5902 = vunpack.c.h.b16 %v5698
    %v5903 = vunpack.c.l.b16 %v5699
    %v5904 = vunpack.c.h.b16 %v5699
    %v5905 = vunpack.c.l.b16 %v5700
    %v5906 = vunpack.c.h.b16 %v5700
    %v5907 = vunpack.c.l.b16 %v5701
    %v5908 = vunpack.c.h.b16 %v5701
    %v5909 = vunpack.c.l.b16 %v5702
    %v5910 = vunpack.c.h.b16 %v5702
    %v5911 = vunpack.c.l.b16 %v5703
    %v5912 = vunpack.c.h.b16 %v5703
    %v5913 = vunpack.c.l.b16 %v5704
    %v5914 = vunpack.c.h.b16 %v5704
    %v5915 = vunpack.c.l.b16 %v5705
    %v5916 = vunpack.c.h.b16 %v5705
    %v5917 = vunpack.c.l.b16 %v5706
    %v5918 = vunpack.c.h.b16 %v5706
    %v5919 = vunpack.c.l.b16 %v5707
    %v5920 = vunpack.c.h.b16 %v5707
    %v5921 = vunpack.c.l.b16 %v5708
    %v5922 = vunpack.c.h.b16 %v5708
    %v5923 = vunpack.c.l.b16 %v5709
    %v5924 = vunpack.c.h.b16 %v5709
    %v5925 = vunpack.c.l.b16 %v5710
    %v5926 = vunpack.c.h.b16 %v5710
    %v5927 = vunpack.c.l.b16 %v5711
    %v5928 = vunpack.c.h.b16 %v5711
    %v5929 = vunpack.c.l.b16 %v5712
    %v5930 = vunpack.c.h.b16 %v5712
    %v5931 = vunpack.c.l.b16 %v5713
    %v5932 = vunpack.c.h.b16 %v5713
    %v5933 = vunpack.c.l.b16 %v5714
    %v5934 = vunpack.c.h.b16 %v5714
    %v5935 = vunpack.c.l.b16 %v5715
    %v5936 = vunpack.c.h.b16 %v5715
    %v5937 = vunpack.c.l.b16 %v5716
    %v5938 = vunpack.c.h.b16 %v5716
    %v5939 = vunpack.c.l.b16 %v5717
    %v5940 = vunpack.c.h.b16 %v5717
    %v5941 = vunpack.c.l.b16 %v5718
    %v5942 = vunpack.c.h.b16 %v5718
    %v5943 = vunpack.c.l.b16 %v5719
    %v5944 = vunpack.c.h.b16 %v5719
    %v5945 = vunpack.c.l.b16 %v5720
    %v5946 = vunpack.c.h.b16 %v5720
    %v5947 = vunpack.c.l.b16 %v5721
    %v5948 = vunpack.c.h.b16 %v5721
    %v5949 = vunpack.c.l.b16 %v5722
    %v5950 = vunpack.c.h.b16 %v5722
    %v5951 = vunpack.c.l.b16 %v5723
    %v5952 = vunpack.c.h.b16 %v5723
    %v5953 = vunpack.c.l.b16 %v5724
    %v5954 = vunpack.c.h.b16 %v5724
    %v5955 = vunpack.c.l.b16 %v5725
    %v5956 = vunpack.c.h.b16 %v5725
    %v5957 = vunpack.c.l.b16 %v5726
    %v5958 = vunpack.c.h.b16 %v5726
    %v5959 = vpack.c.b16 %v5833, %v5831
    %v5960 = vpack.c.b16 %v5834, %v5832
    %v5961 = vpack.c.b16 %v5837, %v5835
    %v5962 = vpack.c.b16 %v5838, %v5836
    %v5963 = vpack.c.b16 %v5841, %v5839
    %v5964 = vpack.c.b16 %v5842, %v5840
    %v5965 = vpack.c.b16 %v5845, %v5843
    %v5966 = vpack.c.b16 %v5846, %v5844
    %v5967 = vpack.c.b16 %v5849, %v5847
    %v5968 = vpack.c.b16 %v5850, %v5848
    %v5969 = vpack.c.b16 %v5853, %v5851
    %v5970 = vpack.c.b16 %v5854, %v5852
    %v5971 = vpack.c.b16 %v5857, %v5855
    %v5972 = vpack.c.b16 %v5858, %v5856
    %v5973 = vpack.c.b16 %v5861, %v5859
    %v5974 = vpack.c.b16 %v5862, %v5860
    %v5975 = vpack.c.b16 %v5865, %v5863
    %v5976 = vpack.c.b16 %v5866, %v5864
    %v5977 = vpack.c.b16 %v5869, %v5867
    %v5978 = vpack.c.b16 %v5870, %v5868
    %v5979 = vpack.c.b16 %v5873, %v5871
    %v5980 = vpack.c.b16 %v5874, %v5872
    %v5981 = vpack.c.b16 %v5877, %v5875
    %v5982 = vpack.c.b16 %v5878, %v5876
    %v5983 = vpack.c.b16 %v5881, %v5879
    %v5984 = vpack.c.b16 %v5882, %v5880
    %v5985 = vpack.c.b16 %v5885, %v5883
    %v5986 = vpack.c.b16 %v5886, %v5884
    %v5987 = vpack.c.b16 %v5889, %v5887
    %v5988 = vpack.c.b16 %v5890, %v5888
    %v5989 = vpack.c.b16 %v5893, %v5891
    %v5990 = vpack.c.b16 %v5894, %v5892
    %v5991 = vpack.c.b16 %v5897, %v5895
    %v5992 = vpack.c.b16 %v5898, %v5896
    %v5993 = vpack.c.b16 %v5901, %v5899
    %v5994 = vpack.c.b16 %v5902, %v5900
    %v5995 = vpack.c.b16 %v5905, %v5903
    %v5996 = vpack.c.b16 %v5906, %v5904
    %v5997 = vpack.c.b16 %v5909, %v5907
    %v5998 = vpack.c.b16 %v5910, %v5908
    %v5999 = vpack.c.b16 %v5913, %v5911
    %v6000 = vpack.c.b16 %v5914, %v5912
    %v6001 = vpack.c.b16 %v5917, %v5915
    %v6002 = vpack.c.b16 %v5918, %v5916
    %v6003 = vpack.c.b16 %v5921, %v5919
    %v6004 = vpack.c.b16 %v5922, %v5920
    %v6005 = vpack.c.b16 %v5925, %v5923
    %v6006 = vpack.c.b16 %v5926, %v5924
    %v6007 = vpack.c.b16 %v5929, %v5927
    %v6008 = vpack.c.b16 %v5930, %v5928
    %v6009 = vpack.c.b16 %v5933, %v5931
    %v6010 = vpack.c.b16 %v5934, %v5932
    %v6011 = vpack.c.b16 %v5937, %v5935
    %v6012 = vpack.c.b16 %v5938, %v5936
    %v6013 = vpack.c.b16 %v5941, %v5939
    %v6014 = vpack.c.b16 %v5942, %v5940
    %v6015 = vpack.c.b16 %v5945, %v5943
    %v6016 = vpack.c.b16 %v5946, %v5944
    %v6017 = vpack.c.b16 %v5949, %v5947
    %v6018 = vpack.c.b16 %v5950, %v5948
    %v6019 = vpack.c.b16 %v5953, %v5951
    %v6020 = vpack.c.b16 %v5954, %v5952
    %v6021 = vpack.c.b16 %v5957, %v5955
    %v6022 = vpack.c.b16 %v5958, %v5956
    %6087 = vmatprep.subr.bf16.mxu0 %v5960
    %6088 = vmatpush1.bf16.msra.mxu0 %v5959
    %6089 = vmatprep.subr.bf16.mxu0 %v5962
    %6090 = vmatpush1.bf16.msra.mxu0 %v5961
    %6091 = vmatprep.subr.bf16.mxu0 %v5964
    %6092 = vmatpush1.bf16.msra.mxu0 %v5963
    %6093 = vmatprep.subr.bf16.mxu0 %v5966
    %6094 = vmatpush1.bf16.msra.mxu0 %v5965
    %6095 = vmatprep.subr.bf16.mxu0 %v5968
    %6096 = vmatpush1.bf16.msra.mxu0 %v5967
    %6097 = vmatprep.subr.bf16.mxu0 %v5970
    %6098 = vmatpush1.bf16.msra.mxu0 %v5969
    %6099 = vmatprep.subr.bf16.mxu0 %v5972
    %6100 = vmatpush1.bf16.msra.mxu0 %v5971
    %6101 = vmatprep.subr.bf16.mxu0 %v5974
    %6102 = vmatpush1.bf16.msra.mxu0 %v5973
    %6103 = vmatprep.subr.bf16.mxu0 %v5976
    %6104 = vmatpush1.bf16.msra.mxu0 %v5975
    %6105 = vmatprep.subr.bf16.mxu0 %v5978
    %6106 = vmatpush1.bf16.msra.mxu0 %v5977
    %6107 = vmatprep.subr.bf16.mxu0 %v5980
    %6108 = vmatpush1.bf16.msra.mxu0 %v5979
    %6109 = vmatprep.subr.bf16.mxu0 %v5982
    %6110 = vmatpush1.bf16.msra.mxu0 %v5981
    %6111 = vmatprep.subr.bf16.mxu0 %v5984
    %6112 = vmatpush1.bf16.msra.mxu0 %v5983
    %6113 = vmatprep.subr.bf16.mxu0 %v5986
    %6114 = vmatpush1.bf16.msra.mxu0 %v5985
    %6115 = vmatprep.subr.bf16.mxu0 %v5988
    %6116 = vmatpush1.bf16.msra.mxu0 %v5987
    %6117 = vmatprep.subr.bf16.mxu0 %v5990
    %6118 = vmatpush1.bf16.msra.mxu0 %v5989
    %6119 = vmatprep.mubr.bf16.mxu0 %v5760
    %6120 = vmatmul.mubr.bf16.gmra.mrb[0].mxu0 %v5759
    %v6121 = vpop.f32.mrb[0].mxu0
    %v6122 = vadd.f32 %v5732, %v6121
    %v6123 = vpop.f32.mrb[0].mxu0
    %v6124 = vadd.f32 %v5736, %v6123
    %v6125 = vpop.f32.mrb[0].mxu0
    %v6126 = vpop.f32.mrb[0].mxu0
    %6127 = vdwg.mxu0
    %6128 = vmatprep.subr.bf16.mxu0 %v5992
    %6129 = vmatpush1.bf16.msra.mxu0 %v5991
    %6130 = vmatprep.subr.bf16.mxu0 %v5994
    %6131 = vmatpush1.bf16.msra.mxu0 %v5993
    %6132 = vmatprep.subr.bf16.mxu0 %v5996
    %6133 = vmatpush1.bf16.msra.mxu0 %v5995
    %6134 = vmatprep.subr.bf16.mxu0 %v5998
    %6135 = vmatpush1.bf16.msra.mxu0 %v5997
    %6136 = vmatprep.subr.bf16.mxu0 %v6000
    %6137 = vmatpush1.bf16.msra.mxu0 %v5999
    %6138 = vmatprep.subr.bf16.mxu0 %v6002
    %6139 = vmatpush1.bf16.msra.mxu0 %v6001
    %6140 = vmatprep.subr.bf16.mxu0 %v6004
    %6141 = vmatpush1.bf16.msra.mxu0 %v6003
    %6142 = vmatprep.subr.bf16.mxu0 %v6006
    %6143 = vmatpush1.bf16.msra.mxu0 %v6005
    %6144 = vmatprep.subr.bf16.mxu0 %v6008
    %6145 = vmatpush1.bf16.msra.mxu0 %v6007
    %6146 = vmatprep.subr.bf16.mxu0 %v6010
    %6147 = vmatpush1.bf16.msra.mxu0 %v6009
    %6148 = vmatprep.subr.bf16.mxu0 %v6012
    %6149 = vmatpush1.bf16.msra.mxu0 %v6011
    %6150 = vmatprep.subr.bf16.mxu0 %v6014
    %6151 = vmatpush1.bf16.msra.mxu0 %v6013
    %6152 = vmatprep.subr.bf16.mxu0 %v6016
    %6153 = vmatpush1.bf16.msra.mxu0 %v6015
    %6154 = vmatprep.subr.bf16.mxu0 %v6018
    %6155 = vmatpush1.bf16.msra.mxu0 %v6017
    %6156 = vmatprep.subr.bf16.mxu0 %v6020
    %6157 = vmatpush1.bf16.msra.mxu0 %v6019
    %6158 = vmatprep.subr.bf16.mxu0 %v6022
    %6159 = vmatpush1.bf16.msra.mxu0 %v6021
    %6160 = vmatprep.mubr.bf16.mxu0 %v5762
    %6161 = vmatmul.mubr.bf16.gmra.mrb[0].mxu0 %v5761
    %v6162 = vpop.f32.mrb[0].mxu0
    %v6163 = vadd.f32 %v6122, %v6162
    %v6164 = vpop.f32.mrb[0].mxu0
    %v6165 = vadd.f32 %v6124, %v6164
    %v6166 = vpop.f32.mrb[0].mxu0
    %v6167 = vpop.f32.mrb[0].mxu0
    %6168 = vdwg.mxu0
    %v6169 = vmax.f32 %v6163, 0.0
    %v6170 = vmax.f32 %v6165, 0.0
    %v6171 = vpack.c.bf16 %v6169, %v6169
    %v6172 = vpack.c.bf16 %v6170, %v6170
    %v6173 = vld [vmem:[#allocation10] sm:$0xf]
    %v6174 = vld [vmem:[#allocation10 + $0x4] sm:$0xf]
    %v6175 = vld [vmem:[#allocation10 + $0x8] sm:$0xf]
    %v6176 = vld [vmem:[#allocation10 + $0xc] sm:$0xf]
    %v6177 = vld [vmem:[#allocation10 + $0x10] sm:$0xf]
    %v6178 = vld [vmem:[#allocation10 + $0x14] sm:$0xf]
    %v6179 = vld [vmem:[#allocation10 + $0x18] sm:$0xf]
    %v6180 = vld [vmem:[#allocation10 + $0x1c] sm:$0xf]
    %v6181 = vld [vmem:[#allocation10 + $0x20] sm:$0xf]
    %v6182 = vld [vmem:[#allocation10 + $0x24] sm:$0xf]
    %v6183 = vld [vmem:[#allocation10 + $0x28] sm:$0xf]
    %v6184 = vld [vmem:[#allocation10 + $0x2c] sm:$0xf]
    %v6185 = vld [vmem:[#allocation10 + $0x30] sm:$0xf]
    %v6186 = vld [vmem:[#allocation10 + $0x34] sm:$0xf]
    %v6187 = vld [vmem:[#allocation10 + $0x38] sm:$0xf]
    %v6188 = vld [vmem:[#allocation10 + $0x3c] sm:$0xf]
    %v6189 = vld [vmem:[#allocation10 + $0x40] sm:$0xf]
    %v6190 = vld [vmem:[#allocation10 + $0x44] sm:$0xf]
    %v6191 = vld [vmem:[#allocation10 + $0x48] sm:$0xf]
    %v6192 = vld [vmem:[#allocation10 + $0x4c] sm:$0xf]
    %v6193 = vld [vmem:[#allocation10 + $0x50] sm:$0xf]
    %v6194 = vld [vmem:[#allocation10 + $0x54] sm:$0xf]
    %v6195 = vld [vmem:[#allocation10 + $0x58] sm:$0xf]
    %v6196 = vld [vmem:[#allocation10 + $0x5c] sm:$0xf]
    %v6197 = vld [vmem:[#allocation10 + $0x60] sm:$0xf]
    %v6198 = vld [vmem:[#allocation10 + $0x64] sm:$0xf]
    %v6199 = vld [vmem:[#allocation10 + $0x68] sm:$0xf]
    %v6200 = vld [vmem:[#allocation10 + $0x6c] sm:$0xf]
    %v6201 = vld [vmem:[#allocation10 + $0x70] sm:$0xf]
    %v6202 = vld [vmem:[#allocation10 + $0x74] sm:$0xf]
    %v6203 = vld [vmem:[#allocation10 + $0x78] sm:$0xf]
    %v6204 = vld [vmem:[#allocation10 + $0x7c] sm:$0xf]
    %v6205 = vld [vmem:[%s12] sm:$0x1]
    %v6207 = vlaneseq
    %v6208 = vshrl.u32 %v6207, 7
    %v6209 = vsub.s32 0, %v6208
    %v6210 = vrot.slane %v6205, %v6209
    %v6244 = vunpack.c.l.b16 %v6173
    %v6245 = vunpack.c.l.b16 %v6174
    %v6246 = vunpack.c.l.b16 %v6175
    %v6247 = vunpack.c.l.b16 %v6176
    %v6248 = vunpack.c.l.b16 %v6177
    %v6249 = vunpack.c.l.b16 %v6178
    %v6250 = vunpack.c.l.b16 %v6179
    %v6251 = vunpack.c.l.b16 %v6180
    %v6252 = vunpack.c.l.b16 %v6181
    %v6253 = vunpack.c.l.b16 %v6182
    %v6254 = vunpack.c.l.b16 %v6183
    %v6255 = vunpack.c.l.b16 %v6184
    %v6256 = vunpack.c.l.b16 %v6185
    %v6257 = vunpack.c.l.b16 %v6186
    %v6258 = vunpack.c.l.b16 %v6187
    %v6259 = vunpack.c.l.b16 %v6188
    %v6260 = vunpack.c.l.b16 %v6189
    %v6261 = vunpack.c.l.b16 %v6190
    %v6262 = vunpack.c.l.b16 %v6191
    %v6263 = vunpack.c.l.b16 %v6192
    %v6264 = vunpack.c.l.b16 %v6193
    %v6265 = vunpack.c.l.b16 %v6194
    %v6266 = vunpack.c.l.b16 %v6195
    %v6267 = vunpack.c.l.b16 %v6196
    %v6268 = vunpack.c.l.b16 %v6197
    %v6269 = vunpack.c.l.b16 %v6198
    %v6270 = vunpack.c.l.b16 %v6199
    %v6271 = vunpack.c.l.b16 %v6200
    %v6272 = vunpack.c.l.b16 %v6201
    %v6273 = vunpack.c.l.b16 %v6202
    %v6274 = vunpack.c.l.b16 %v6203
    %v6275 = vunpack.c.l.b16 %v6204
    %v6276 = vpack.c.b16 %v6245, %v6244
    %v6277 = vpack.c.b16 %v6247, %v6246
    %v6278 = vpack.c.b16 %v6249, %v6248
    %v6279 = vpack.c.b16 %v6251, %v6250
    %v6280 = vpack.c.b16 %v6253, %v6252
    %v6281 = vpack.c.b16 %v6255, %v6254
    %v6282 = vpack.c.b16 %v6257, %v6256
    %v6283 = vpack.c.b16 %v6259, %v6258
    %v6284 = vpack.c.b16 %v6261, %v6260
    %v6285 = vpack.c.b16 %v6263, %v6262
    %v6286 = vpack.c.b16 %v6265, %v6264
    %v6287 = vpack.c.b16 %v6267, %v6266
    %v6288 = vpack.c.b16 %v6269, %v6268
    %v6289 = vpack.c.b16 %v6271, %v6270
    %v6290 = vpack.c.b16 %v6273, %v6272
    %v6291 = vpack.c.b16 %v6275, %v6274
    %6308 = vmatprep.subr.bf16.mxu0 0
    %6309 = vmatpush1.bf16.msra.mxu0 %v6276
    %6310 = vmatprep.subr.bf16.mxu0 0
    %6311 = vmatpush1.bf16.msra.mxu0 %v6277
    %6312 = vmatprep.subr.bf16.mxu0 0
    %6313 = vmatpush1.bf16.msra.mxu0 %v6278
    %6314 = vmatprep.subr.bf16.mxu0 0
    %6315 = vmatpush1.bf16.msra.mxu0 %v6279
    %6316 = vmatprep.subr.bf16.mxu0 0
    %6317 = vmatpush1.bf16.msra.mxu0 %v6280
    %6318 = vmatprep.subr.bf16.mxu0 0
    %6319 = vmatpush1.bf16.msra.mxu0 %v6281
    %6320 = vmatprep.subr.bf16.mxu0 0
    %6321 = vmatpush1.bf16.msra.mxu0 %v6282
    %6322 = vmatprep.subr.bf16.mxu0 0
    %6323 = vmatpush1.bf16.msra.mxu0 %v6283
    %6324 = vmatprep.subr.bf16.mxu0 0
    %6325 = vmatpush1.bf16.msra.mxu0 %v6284
    %6326 = vmatprep.subr.bf16.mxu0 0
    %6327 = vmatpush1.bf16.msra.mxu0 %v6285
    %6328 = vmatprep.subr.bf16.mxu0 0
    %6329 = vmatpush1.bf16.msra.mxu0 %v6286
    %6330 = vmatprep.subr.bf16.mxu0 0
    %6331 = vmatpush1.bf16.msra.mxu0 %v6287
    %6332 = vmatprep.subr.bf16.mxu0 0
    %6333 = vmatpush1.bf16.msra.mxu0 %v6288
    %6334 = vmatprep.subr.bf16.mxu0 0
    %6335 = vmatpush1.bf16.msra.mxu0 %v6289
    %6336 = vmatprep.subr.bf16.mxu0 0
    %6337 = vmatpush1.bf16.msra.mxu0 %v6290
    %6338 = vmatprep.subr.bf16.mxu0 0
    %6339 = vmatpush1.bf16.msra.mxu0 %v6291
    %6340 = vmatprep.mubr.bf16.mxu0 %v6172
    %6341 = vmatmul.mubr.bf16.gmra.mrb[0].mxu0 %v6171
    %v6342 = vpop.f32.mrb[0].mxu0
    %v6343 = vadd.f32 %v6210, %v6342
    %v6344 = vpop.f32.mrb[0].mxu0
    %v6345 = vpop.f32.mrb[0].mxu0
    %v6346 = vpop.f32.mrb[0].mxu0
    %6347 = vdwg.mxu0
    %v6348 = vmax.f32 %v6343, 0.0
    %v6349 = vpack.c.bf16 %v6348, %v6348
    %v6350 = vld [vmem:[%s13] sm:$0xf]
    %v6351 = vld [vmem:[%s13 + $0x4] sm:$0xf]
    %v6352 = vld [vmem:[%s13 + $0x8] sm:$0xf]
    %v6353 = vld [vmem:[%s13 + $0xc] sm:$0xf]
    %v6354 = vld [vmem:[%s13 + $0x10] sm:$0xf]
    %v6355 = vld [vmem:[%s13 + $0x14] sm:$0xf]
    %v6356 = vld [vmem:[%s13 + $0x18] sm:$0xf]
    %v6357 = vld [vmem:[%s13 + $0x1c] sm:$0xf]
    %v6358 = vld [vmem:[%s13 + $0x20] sm:$0xf]
    %v6359 = vld [vmem:[%s13 + $0x24] sm:$0xf]
    %v6360 = vld [vmem:[%s13 + $0x28] sm:$0xf]
    %v6361 = vld [vmem:[%s13 + $0x2c] sm:$0xf]
    %v6362 = vld [vmem:[%s13 + $0x30] sm:$0xf]
    %v6363 = vld [vmem:[%s13 + $0x34] sm:$0xf]
    %v6364 = vld [vmem:[%s13 + $0x38] sm:$0xf]
    %v6365 = vld [vmem:[%s13 + $0x3c] sm:$0xf]
    %v6366 = vld [vmem:[%s14] sm:$0x1]
    %v6368 = vlaneseq
    %v6369 = vshrl.u32 %v6368, 7
    %v6370 = vsub.s32 0, %v6369
    %v6371 = vrot.slane %v6366, %v6370
    %v6389 = vunpack.c.l.b16 %v6350
    %v6390 = vunpack.c.l.b16 %v6351
    %v6391 = vunpack.c.l.b16 %v6352
    %v6392 = vunpack.c.l.b16 %v6353
    %v6393 = vunpack.c.l.b16 %v6354
    %v6394 = vunpack.c.l.b16 %v6355
    %v6395 = vunpack.c.l.b16 %v6356
    %v6396 = vunpack.c.l.b16 %v6357
    %v6397 = vunpack.c.l.b16 %v6358
    %v6398 = vunpack.c.l.b16 %v6359
    %v6399 = vunpack.c.l.b16 %v6360
    %v6400 = vunpack.c.l.b16 %v6361
    %v6401 = vunpack.c.l.b16 %v6362
    %v6402 = vunpack.c.l.b16 %v6363
    %v6403 = vunpack.c.l.b16 %v6364
    %v6404 = vunpack.c.l.b16 %v6365
    %v6405 = vpack.c.b16 %v6390, %v6389
    %v6406 = vpack.c.b16 %v6392, %v6391
    %v6407 = vpack.c.b16 %v6394, %v6393
    %v6408 = vpack.c.b16 %v6396, %v6395
    %v6409 = vpack.c.b16 %v6398, %v6397
    %v6410 = vpack.c.b16 %v6400, %v6399
    %v6411 = vpack.c.b16 %v6402, %v6401
    %v6412 = vpack.c.b16 %v6404, %v6403
    %6421 = vmatprep.subr.bf16.mxu0 0
    %6422 = vmatpush1.bf16.msra.mxu0 %v6405
    %6423 = vmatprep.subr.bf16.mxu0 0
    %6424 = vmatpush1.bf16.msra.mxu0 %v6406
    %6425 = vmatprep.subr.bf16.mxu0 0
    %6426 = vmatpush1.bf16.msra.mxu0 %v6407
    %6427 = vmatprep.subr.bf16.mxu0 0
    %6428 = vmatpush1.bf16.msra.mxu0 %v6408
    %6429 = vmatprep.subr.bf16.mxu0 0
    %6430 = vmatpush1.bf16.msra.mxu0 %v6409
    %6431 = vmatprep.subr.bf16.mxu0 0
    %6432 = vmatpush1.bf16.msra.mxu0 %v6410
    %6433 = vmatprep.subr.bf16.mxu0 0
    %6434 = vmatpush1.bf16.msra.mxu0 %v6411
    %6435 = vmatprep.subr.bf16.mxu0 0
    %6436 = vmatpush1.bf16.msra.mxu0 %v6412
    %6437 = vmatprep.subr.bf16.mxu0 0
    %6438 = vmatpush1.bf16.msra.mxu0 0
    %6439 = vmatprep.subr.bf16.mxu0 0
    %6440 = vmatpush1.bf16.msra.mxu0 0
    %6441 = vmatprep.subr.bf16.mxu0 0
    %6442 = vmatpush1.bf16.msra.mxu0 0
    %6443 = vmatprep.subr.bf16.mxu0 0
    %6444 = vmatpush1.bf16.msra.mxu0 0
    %6445 = vmatprep.subr.bf16.mxu0 0
    %6446 = vmatpush1.bf16.msra.mxu0 0
    %6447 = vmatprep.subr.bf16.mxu0 0
    %6448 = vmatpush1.bf16.msra.mxu0 0
    %6449 = vmatprep.subr.bf16.mxu0 0
    %6450 = vmatpush1.bf16.msra.mxu0 0
    %6451 = vmatprep.subr.bf16.mxu0 0
    %6452 = vmatpush1.bf16.msra.mxu0 0
    %6453 = vmatprep.mubr.bf16.mxu0 0
    %6454 = vmatmul.mubr.bf16.gmra.mrb[0].mxu0 %v6349
    %v6455 = vpop.f32.mrb[0].mxu0
    %v6456 = vadd.f32 %v6371, %v6455
    %v6457 = vpop.f32.mrb[0].mxu0
    %v6458 = vpop.f32.mrb[0].mxu0
    %v6459 = vpop.f32.mrb[0].mxu0
    %6460 = vdwg.mxu0
    %6461 = vst [vmem:[#allocation11] sm:$0x3] %v6456
    // Predicated region
    $region82: #{tpu_custom_call.1} parent=1 // pred_check
      _
    $region83: #{tpu_custom_call.1} parent=1 // pred_check_branch
      %6463 = sbr.rel (0) target = $region85
    $region84: #{tpu_custom_call.1} parent=1 // pred_region
      %s6465 = ssub.s32 32, 32
      %6466 = vsyncadd [#allocation4], %s6465
      %s6468 = sshll.u32 [#allocation11], 4
      %s6469 = int_to_ptr.vmem [resolvable:$true] %s6468
      %6471 = dma.vmem_to_hbm [thread:$0]  %s6469, 32, %s15, [#allocation4]
    $region85: #{tpu_custom_call.1} parent=1 // pred_fallthru
      _
    // Predicated region
    $region86: #{tpu_custom_call.1} parent=1 // pred_check
      _
    $region87: #{tpu_custom_call.1} parent=1 // pred_check_branch
      %6473 = sbr.rel (0) target = $region89
    $region88: #{tpu_custom_call.1} parent=1 // pred_region
      %6474 = dma.done [#allocation4], 32
    $region89: #{tpu_custom_call.1} parent=1 // pred_fallthru
      _
    %6475 = vsyncpa [#allocation3], 1
    %6476 = vsyncpa [#allocation6], 1
    %6477 = vsyncpa [#allocation9], 1
    %6478 = vsyncpa [#allocation4], 1

</llo_original>
